<compile_context>
chip_gen: v7x
topology: tpu7x:2x2x1
jax: 0.10.0
libtpu: 0.0.40
codegen_flags: <defaults>
</compile_context>

<pallas_src>
import functools

import numpy as np
import jax
import jax.numpy as jnp
from jax.experimental import pallas as pl
from jax.experimental.pallas import tpu as pltpu

_EPS = 1e-5  # PyTorch GroupNorm default eps


# ---------------------------------------------------------------------------
# Fused forward kernel
# ---------------------------------------------------------------------------
def _fused_forward_kernel(
        freq_idx_ref, lr_idx_ref,                    # SMEM (B,) int32
        ear_ref, head_ref,                           # VMEM (B, 12), (B, 13)
        freq_tab_ref, lr_tab_ref,                    # VMEM (41,1,16), (2,1,16)
        w_ear_ref, b_ear_ref,                        # (12,16), (1,16)
        w_head_ref, b_head_ref,                      # (13,16), (1,16)
        w_fc_ref, b_fc_ref,                          # (64,256), (1,256)
        m1_ref, b1_ref, g1_ref, a1_ref,              # conv1 (dense) + GN affine
        m2_ref, b2_ref, g2_ref, a2_ref,              # conv2
        m3_ref, b3_ref, g3_ref, a3_ref,              # conv3
        m4_ref, b4_ref, g4_ref, a4_ref,              # conv4
        m5_ref, b5_ref,                              # conv5 (final, no norm/relu)
        out_ref,                                     # (B, 64)
        *, batch):
    f32 = jnp.float32

    # ---- condition path: Linear encoders + in-kernel embedding gathers ----
    ear_emb = jnp.dot(ear_ref[...], w_ear_ref[...],
                      preferred_element_type=f32) + b_ear_ref[...]
    head_emb = jnp.dot(head_ref[...], w_head_ref[...],
                       preferred_element_type=f32) + b_head_ref[...]
    freq_emb = jnp.concatenate(
        [freq_tab_ref[freq_idx_ref[b]] for b in range(batch)], axis=0)
    lr_emb = jnp.concatenate(
        [lr_tab_ref[lr_idx_ref[b]] for b in range(batch)], axis=0)

    # concat([ear, head, freq, lr], dim=1) -> single matmul against W_fc.
    z = jnp.concatenate([ear_emb, head_emb, freq_emb, lr_emb], axis=-1)  # (B,64)
    x = jnp.dot(z, w_fc_ref[...], preferred_element_type=f32) + b_fc_ref[...]

    # ---- conv stack: each layer is one dense matmul on the flat (L*C) dim ----
    def conv_gn_relu(x, m_ref, b_ref, g_ref, a_ref):
        y = jnp.dot(x, m_ref[...], preferred_element_type=f32) + b_ref[...]
        # GroupNorm(1, C): per-sample stats over all (L, C) elements.
        mean = jnp.mean(y, axis=-1, keepdims=True)
        var = jnp.mean(jnp.square(y - mean), axis=-1, keepdims=True)
        y = (y - mean) * jax.lax.rsqrt(var + _EPS)
        y = y * g_ref[...] + a_ref[...]
        return jnp.maximum(y, 0.0)

    x = conv_gn_relu(x, m1_ref, b1_ref, g1_ref, a1_ref)
    x = conv_gn_relu(x, m2_ref, b2_ref, g2_ref, a2_ref)
    x = conv_gn_relu(x, m3_ref, b3_ref, g3_ref, a3_ref)
    x = conv_gn_relu(x, m4_ref, b4_ref, g4_ref, a4_ref)
    # final layer: conv only (no norm / relu); L_out == 1 so this IS the output.
    out_ref[...] = jnp.dot(x, m5_ref[...],
                           preferred_element_type=f32) + b5_ref[...]


# ---------------------------------------------------------------------------
# Wrapper
# ---------------------------------------------------------------------------
def convnn_hrtf_sht_forward(prep, ear_anthro, head_anthro, frequency,
                            left_or_right):
    B = ear_anthro.shape[0]
    out_dim = prep['conv5'][0].shape[1]  # L_out(=1) * out_channels

    args = (
        frequency.astype(jnp.int32), left_or_right.astype(jnp.int32),
        ear_anthro, head_anthro,
        prep['freq_table'], prep['lr_table'],
        prep['w_ear'], prep['b_ear'],
        prep['w_head'], prep['b_head'],
        prep['w_fc'], prep['b_fc'],
        *prep['conv1'], *prep['conv2'], *prep['conv3'], *prep['conv4'],
        prep['conv5'][0], prep['conv5'][1],
    )
    smem = pl.BlockSpec(memory_space=pltpu.MemorySpace.SMEM)
    vmem = pl.BlockSpec(memory_space=pltpu.MemorySpace.VMEM)

    return pl.pallas_call(
        functools.partial(_fused_forward_kernel, batch=B),
        out_shape=jax.ShapeDtypeStruct((B, out_dim), jnp.float32),
        in_specs=[smem, smem] + [vmem] * (len(args) - 2),
        out_specs=vmem,
    )(*args)


# ---------------------------------------------------------------------------
# Parameter initialization (PyTorch layout) + kernel-friendly preparation.
# args used: ear_anthro_dim=12, ear_emb_dim=16, head_anthro_dim=13,
# head_emb_dim=16, freq_bin=41, freq_emb_dim=16, lr_emb_dim=16,
# condition_dim=256, norm='layer', target!='hrtf' (out_channels=64).
# ---------------------------------------------------------------------------
def init_params(key, *, ear_anthro_dim=12, ear_emb_dim=16,
                head_anthro_dim=13, head_emb_dim=16,
                freq_bin=41, freq_emb_dim=16, lr_emb_dim=16,
                condition_dim=256, out_channels=64):
    keys = iter(jax.random.split(key, 32))

    def dense(shape, scale=0.1):
        return scale * jax.random.normal(next(keys), shape, dtype=jnp.float32)

    params = {
        'W_ear': dense((ear_emb_dim, ear_anthro_dim)),
        'b_ear': dense((ear_emb_dim,), 0.01),
        'W_head': dense((head_emb_dim, head_anthro_dim)),
        'b_head': dense((head_emb_dim,), 0.01),
        'lr_table': dense((2, lr_emb_dim), 1.0),
        'freq_table': dense((freq_bin, freq_emb_dim), 1.0),
        'W_fc': dense((condition_dim,
                       ear_emb_dim + head_emb_dim + freq_emb_dim + lr_emb_dim)),
        'b_fc': dense((condition_dim,), 0.01),
        'condition_dim': condition_dim,
    }
    conv_cfg = [('conv1', 1, 4, 7), ('conv2', 4, 16, 5), ('conv3', 16, 32, 5),
                ('conv4', 32, 32, 5), ('conv5', 32, out_channels, 5)]
    for name, cin, cout, k in conv_cfg:
        w = dense((cout, cin, k))
        b = dense((cout,), 0.01)
        gamma = jnp.ones((cout,), jnp.float32)   # GroupNorm default affine
        beta = jnp.zeros((cout,), jnp.float32)
        params[name] = (w, b, gamma, beta)
    return params


def _conv_as_dense(w, b, gamma, beta, L_in, stride):
    """Lower a Conv1d (PyTorch (C_out, C_in, K) weight) acting on a
    channel-minor flattened activation x_flat[l*C_in + ci] into a dense
    (L_in*C_in, L_out*C_out) matrix, plus full-width bias/gamma/beta rows."""
    w = np.asarray(w, np.float32)
    C_out, C_in, K = w.shape
    L_out = (L_in - K) // stride + 1
    M = np.zeros((L_in, C_in, L_out, C_out), np.float32)
    for lo in range(L_out):
        for k in range(K):
            M[lo * stride + k, :, lo, :] = w[:, :, k].T
    M = M.reshape(L_in * C_in, L_out * C_out)
    b_full = np.tile(np.asarray(b, np.float32), L_out).reshape(1, -1)
    g_full = np.tile(np.asarray(gamma, np.float32), L_out).reshape(1, -1)
    a_full = np.tile(np.asarray(beta, np.float32), L_out).reshape(1, -1)
    return (jnp.asarray(M), jnp.asarray(b_full), jnp.asarray(g_full),
            jnp.asarray(a_full), L_out)


def prepare_params(params):
    """One-time weight preprocessing: pre-transpose linears, pre-lower convs."""
    prep = {
        'w_ear': jnp.transpose(params['W_ear']),            # (in, out)
        'b_ear': params['b_ear'].reshape(1, -1),
        'w_head': jnp.transpose(params['W_head']),
        'b_head': params['b_head'].reshape(1, -1),
        'w_fc': jnp.transpose(params['W_fc']),               # (64, 256)
        'b_fc': params['b_fc'].reshape(1, -1),
        'freq_table': params['freq_table'][:, None, :],      # (N, 1, emb)
        'lr_table': params['lr_table'][:, None, :],          # (2, 1, emb)
    }
    L = int(params['condition_dim'])
    strides = {'conv1': 3, 'conv2': 2, 'conv3': 2, 'conv4': 3, 'conv5': 2}
    for name in ('conv1', 'conv2', 'conv3', 'conv4', 'conv5'):
        w, b, gamma, beta = params[name]
        M, bf, gf, af, L = _conv_as_dense(w, b, gamma, beta, L, strides[name])
        prep[name] = (M, bf, gf, af)
    # PyTorch does out.squeeze(-1): only valid if conv5's L_out == 1.
    assert L == 1, f"conv5 L_out must be 1 for squeeze(-1) semantics, got {L}"
    return prep


if __name__ == "__main__":
    key = jax.random.PRNGKey(0)
    kp, k1, k2 = jax.random.split(key, 3)
    params = init_params(kp)
    prep = prepare_params(params)

    B = 2
    ear_anthro = jax.random.normal(k1, (B, 12), dtype=jnp.float32)
    head_anthro = jax.random.normal(k2, (B, 13), dtype=jnp.float32)
    frequency = jnp.array([3, 17], dtype=jnp.int32)        # < freq_bin=41
    left_or_right = jnp.array([0, 1], dtype=jnp.int32)      # {0, 1}

    fwd = jax.jit(convnn_hrtf_sht_forward)
    out = fwd(prep, ear_anthro, head_anthro, frequency, left_or_right)
    out = jax.block_until_ready(out)

    assert out.shape == (B, 64), out.shape
    assert out.dtype == jnp.float32
    assert bool(jnp.all(jnp.isfinite(out)))
    print("KERNEL_OK")
</pallas_src>

<mosaic_0001>
module attributes {stable_mosaic.version = 11 : i64} {
  func.func @_fused_forward_kernel(%arg0: memref<2xi32, #tpu.memory_space<smem>>, %arg1: memref<2xi32, #tpu.memory_space<smem>>, %arg2: memref<2x12xf32, #tpu.memory_space<vmem>>, %arg3: memref<2x13xf32, #tpu.memory_space<vmem>>, %arg4: memref<41x1x16xf32, #tpu.memory_space<vmem>>, %arg5: memref<2x1x16xf32, #tpu.memory_space<vmem>>, %arg6: memref<12x16xf32, #tpu.memory_space<vmem>>, %arg7: memref<1x16xf32, #tpu.memory_space<vmem>>, %arg8: memref<13x16xf32, #tpu.memory_space<vmem>>, %arg9: memref<1x16xf32, #tpu.memory_space<vmem>>, %arg10: memref<64x256xf32, #tpu.memory_space<vmem>>, %arg11: memref<1x256xf32, #tpu.memory_space<vmem>>, %arg12: memref<256x336xf32, #tpu.memory_space<vmem>>, %arg13: memref<1x336xf32, #tpu.memory_space<vmem>>, %arg14: memref<1x336xf32, #tpu.memory_space<vmem>>, %arg15: memref<1x336xf32, #tpu.memory_space<vmem>>, %arg16: memref<336x640xf32, #tpu.memory_space<vmem>>, %arg17: memref<1x640xf32, #tpu.memory_space<vmem>>, %arg18: memref<1x640xf32, #tpu.memory_space<vmem>>, %arg19: memref<1x640xf32, #tpu.memory_space<vmem>>, %arg20: memref<640x576xf32, #tpu.memory_space<vmem>>, %arg21: memref<1x576xf32, #tpu.memory_space<vmem>>, %arg22: memref<1x576xf32, #tpu.memory_space<vmem>>, %arg23: memref<1x576xf32, #tpu.memory_space<vmem>>, %arg24: memref<576x160xf32, #tpu.memory_space<vmem>>, %arg25: memref<1x160xf32, #tpu.memory_space<vmem>>, %arg26: memref<1x160xf32, #tpu.memory_space<vmem>>, %arg27: memref<1x160xf32, #tpu.memory_space<vmem>>, %arg28: memref<160x64xf32, #tpu.memory_space<vmem>>, %arg29: memref<1x64xf32, #tpu.memory_space<vmem>>, %arg30: memref<2x64xf32, #tpu.memory_space<vmem>>) attributes {dimension_semantics = [], scalar_prefetch = 0 : i64, scratch_operands = 0 : i64, tpu.core_type = #tpu.core_type<tc>} {
    %c0 = arith.constant 0 : index
    %c0_0 = arith.constant 0 : index
    %0 = vector.load %arg2[%c0, %c0_0] : memref<2x12xf32, #tpu.memory_space<vmem>>, vector<2x12xf32>
    %c0_1 = arith.constant 0 : index
    %c0_2 = arith.constant 0 : index
    %1 = vector.load %arg6[%c0_1, %c0_2] : memref<12x16xf32, #tpu.memory_space<vmem>>, vector<12x16xf32>
    %cst = arith.constant dense<0.000000e+00> : vector<2x16xf32>
    %2 = tpu.matmul %0, %1, %cst {dimension_numbers = #tpu.dot_dimension_numbers<[1], [0], [0], [1], [0, 0, 1, 1], [], []>} : vector<2x12xf32>, vector<12x16xf32>, vector<2x16xf32> -> vector<2x16xf32>
    %c0_3 = arith.constant 0 : index
    %c0_4 = arith.constant 0 : index
    %3 = vector.load %arg7[%c0_3, %c0_4] : memref<1x16xf32, #tpu.memory_space<vmem>>, vector<1x16xf32>
    %4 = vector.broadcast %3 : vector<1x16xf32> to vector<2x16xf32>
    %5 = arith.addf %2, %4 : vector<2x16xf32>
    %c0_5 = arith.constant 0 : index
    %c0_6 = arith.constant 0 : index
    %6 = vector.load %arg3[%c0_5, %c0_6] : memref<2x13xf32, #tpu.memory_space<vmem>>, vector<2x13xf32>
    %c0_7 = arith.constant 0 : index
    %c0_8 = arith.constant 0 : index
    %7 = vector.load %arg8[%c0_7, %c0_8] : memref<13x16xf32, #tpu.memory_space<vmem>>, vector<13x16xf32>
    %cst_9 = arith.constant dense<0.000000e+00> : vector<2x16xf32>
    %8 = tpu.matmul %6, %7, %cst_9 {dimension_numbers = #tpu.dot_dimension_numbers<[1], [0], [0], [1], [0, 0, 1, 1], [], []>} : vector<2x13xf32>, vector<13x16xf32>, vector<2x16xf32> -> vector<2x16xf32>
    %c0_10 = arith.constant 0 : index
    %c0_11 = arith.constant 0 : index
    %9 = vector.load %arg9[%c0_10, %c0_11] : memref<1x16xf32, #tpu.memory_space<vmem>>, vector<1x16xf32>
    %10 = vector.broadcast %9 : vector<1x16xf32> to vector<2x16xf32>
    %11 = arith.addf %8, %10 : vector<2x16xf32>
    %c0_12 = arith.constant 0 : index
    %12 = memref.load %arg0[%c0_12] : memref<2xi32, #tpu.memory_space<smem>>
    %13 = arith.index_cast %12 : i32 to index
    %c0_13 = arith.constant 0 : index
    %c0_14 = arith.constant 0 : index
    %14 = vector.load %arg4[%13, %c0_13, %c0_14] : memref<41x1x16xf32, #tpu.memory_space<vmem>>, vector<1x1x16xf32>
    %15 = vector.shape_cast %14 : vector<1x1x16xf32> to vector<1x16xf32>
    %c1 = arith.constant 1 : index
    %16 = memref.load %arg0[%c1] : memref<2xi32, #tpu.memory_space<smem>>
    %17 = arith.index_cast %16 : i32 to index
    %c0_15 = arith.constant 0 : index
    %c0_16 = arith.constant 0 : index
    %18 = vector.load %arg4[%17, %c0_15, %c0_16] : memref<41x1x16xf32, #tpu.memory_space<vmem>>, vector<1x1x16xf32>
    %19 = vector.shape_cast %18 : vector<1x1x16xf32> to vector<1x16xf32>
    %20 = tpu.concatenate %15, %19 in 0 : vector<1x16xf32>, vector<1x16xf32> -> vector<2x16xf32>
    %c0_17 = arith.constant 0 : index
    %21 = memref.load %arg1[%c0_17] : memref<2xi32, #tpu.memory_space<smem>>
    %22 = arith.index_cast %21 : i32 to index
    %c0_18 = arith.constant 0 : index
    %c0_19 = arith.constant 0 : index
    %23 = vector.load %arg5[%22, %c0_18, %c0_19] : memref<2x1x16xf32, #tpu.memory_space<vmem>>, vector<1x1x16xf32>
    %24 = vector.shape_cast %23 : vector<1x1x16xf32> to vector<1x16xf32>
    %c1_20 = arith.constant 1 : index
    %25 = memref.load %arg1[%c1_20] : memref<2xi32, #tpu.memory_space<smem>>
    %26 = arith.index_cast %25 : i32 to index
    %c0_21 = arith.constant 0 : index
    %c0_22 = arith.constant 0 : index
    %27 = vector.load %arg5[%26, %c0_21, %c0_22] : memref<2x1x16xf32, #tpu.memory_space<vmem>>, vector<1x1x16xf32>
    %28 = vector.shape_cast %27 : vector<1x1x16xf32> to vector<1x16xf32>
    %29 = tpu.concatenate %24, %28 in 0 : vector<1x16xf32>, vector<1x16xf32> -> vector<2x16xf32>
    %30 = tpu.concatenate %5, %11, %20, %29 in 1 : vector<2x16xf32>, vector<2x16xf32>, vector<2x16xf32>, vector<2x16xf32> -> vector<2x64xf32>
    %c0_23 = arith.constant 0 : index
    %c0_24 = arith.constant 0 : index
    %31 = vector.load %arg10[%c0_23, %c0_24] : memref<64x256xf32, #tpu.memory_space<vmem>>, vector<64x256xf32>
    %cst_25 = arith.constant dense<0.000000e+00> : vector<2x256xf32>
    %32 = tpu.matmul %30, %31, %cst_25 {dimension_numbers = #tpu.dot_dimension_numbers<[1], [0], [0], [1], [0, 0, 1, 1], [], []>} : vector<2x64xf32>, vector<64x256xf32>, vector<2x256xf32> -> vector<2x256xf32>
    %c0_26 = arith.constant 0 : index
    %c0_27 = arith.constant 0 : index
    %33 = vector.load %arg11[%c0_26, %c0_27] : memref<1x256xf32, #tpu.memory_space<vmem>>, vector<1x256xf32>
    %34 = vector.broadcast %33 : vector<1x256xf32> to vector<2x256xf32>
    %35 = arith.addf %32, %34 : vector<2x256xf32>
    %c0_28 = arith.constant 0 : index
    %c0_29 = arith.constant 0 : index
    %36 = vector.load %arg12[%c0_28, %c0_29] : memref<256x336xf32, #tpu.memory_space<vmem>>, vector<256x336xf32>
    %cst_30 = arith.constant dense<0.000000e+00> : vector<2x336xf32>
    %37 = tpu.matmul %35, %36, %cst_30 {dimension_numbers = #tpu.dot_dimension_numbers<[1], [0], [0], [1], [0, 0, 1, 1], [], []>} : vector<2x256xf32>, vector<256x336xf32>, vector<2x336xf32> -> vector<2x336xf32>
    %c0_31 = arith.constant 0 : index
    %c0_32 = arith.constant 0 : index
    %38 = vector.load %arg13[%c0_31, %c0_32] : memref<1x336xf32, #tpu.memory_space<vmem>>, vector<1x336xf32>
    %39 = vector.broadcast %38 : vector<1x336xf32> to vector<2x336xf32>
    %40 = arith.addf %37, %39 : vector<2x336xf32>
    %cst_33 = arith.constant dense<0.000000e+00> : vector<2xf32>
    %41 = vector.multi_reduction <add>, %40, %cst_33 [1] : vector<2x336xf32> to vector<2xf32>
    %42 = vector.shape_cast %41 : vector<2xf32> to vector<2x1xf32>
    %cst_34 = arith.constant 3.360000e+02 : f32
    %43 = vector.broadcast %cst_34 : f32 to vector<2x1xf32>
    %44 = arith.divf %42, %43 : vector<2x1xf32>
    %45 = vector.broadcast %44 : vector<2x1xf32> to vector<2x336xf32>
    %46 = arith.subf %40, %45 : vector<2x336xf32>
    %47 = arith.mulf %46, %46 : vector<2x336xf32>
    %cst_35 = arith.constant dense<0.000000e+00> : vector<2xf32>
    %48 = vector.multi_reduction <add>, %47, %cst_35 [1] : vector<2x336xf32> to vector<2xf32>
    %49 = vector.shape_cast %48 : vector<2xf32> to vector<2x1xf32>
    %cst_36 = arith.constant 3.360000e+02 : f32
    %50 = vector.broadcast %cst_36 : f32 to vector<2x1xf32>
    %51 = arith.divf %49, %50 : vector<2x1xf32>
    %52 = vector.broadcast %44 : vector<2x1xf32> to vector<2x336xf32>
    %53 = arith.subf %40, %52 : vector<2x336xf32>
    %cst_37 = arith.constant 9.99999974E-6 : f32
    %54 = vector.broadcast %cst_37 : f32 to vector<2x1xf32>
    %55 = arith.addf %51, %54 : vector<2x1xf32>
    %56 = math.rsqrt %55 : vector<2x1xf32>
    %57 = vector.broadcast %56 : vector<2x1xf32> to vector<2x336xf32>
    %58 = arith.mulf %53, %57 : vector<2x336xf32>
    %c0_38 = arith.constant 0 : index
    %c0_39 = arith.constant 0 : index
    %59 = vector.load %arg14[%c0_38, %c0_39] : memref<1x336xf32, #tpu.memory_space<vmem>>, vector<1x336xf32>
    %60 = vector.broadcast %59 : vector<1x336xf32> to vector<2x336xf32>
    %61 = arith.mulf %58, %60 : vector<2x336xf32>
    %c0_40 = arith.constant 0 : index
    %c0_41 = arith.constant 0 : index
    %62 = vector.load %arg15[%c0_40, %c0_41] : memref<1x336xf32, #tpu.memory_space<vmem>>, vector<1x336xf32>
    %63 = vector.broadcast %62 : vector<1x336xf32> to vector<2x336xf32>
    %64 = arith.addf %61, %63 : vector<2x336xf32>
    %cst_42 = arith.constant 0.000000e+00 : f32
    %65 = vector.broadcast %cst_42 : f32 to vector<2x336xf32>
    %66 = arith.maximumf %64, %65 : vector<2x336xf32>
    %c0_43 = arith.constant 0 : index
    %c0_44 = arith.constant 0 : index
    %67 = vector.load %arg16[%c0_43, %c0_44] : memref<336x640xf32, #tpu.memory_space<vmem>>, vector<336x640xf32>
    %cst_45 = arith.constant dense<0.000000e+00> : vector<2x640xf32>
    %68 = tpu.matmul %66, %67, %cst_45 {dimension_numbers = #tpu.dot_dimension_numbers<[1], [0], [0], [1], [0, 0, 1, 1], [], []>} : vector<2x336xf32>, vector<336x640xf32>, vector<2x640xf32> -> vector<2x640xf32>
    %c0_46 = arith.constant 0 : index
    %c0_47 = arith.constant 0 : index
    %69 = vector.load %arg17[%c0_46, %c0_47] : memref<1x640xf32, #tpu.memory_space<vmem>>, vector<1x640xf32>
    %70 = vector.broadcast %69 : vector<1x640xf32> to vector<2x640xf32>
    %71 = arith.addf %68, %70 : vector<2x640xf32>
    %cst_48 = arith.constant dense<0.000000e+00> : vector<2xf32>
    %72 = vector.multi_reduction <add>, %71, %cst_48 [1] : vector<2x640xf32> to vector<2xf32>
    %73 = vector.shape_cast %72 : vector<2xf32> to vector<2x1xf32>
    %cst_49 = arith.constant 6.400000e+02 : f32
    %74 = vector.broadcast %cst_49 : f32 to vector<2x1xf32>
    %75 = arith.divf %73, %74 : vector<2x1xf32>
    %76 = vector.broadcast %75 : vector<2x1xf32> to vector<2x640xf32>
    %77 = arith.subf %71, %76 : vector<2x640xf32>
    %78 = arith.mulf %77, %77 : vector<2x640xf32>
    %cst_50 = arith.constant dense<0.000000e+00> : vector<2xf32>
    %79 = vector.multi_reduction <add>, %78, %cst_50 [1] : vector<2x640xf32> to vector<2xf32>
    %80 = vector.shape_cast %79 : vector<2xf32> to vector<2x1xf32>
    %cst_51 = arith.constant 6.400000e+02 : f32
    %81 = vector.broadcast %cst_51 : f32 to vector<2x1xf32>
    %82 = arith.divf %80, %81 : vector<2x1xf32>
    %83 = vector.broadcast %75 : vector<2x1xf32> to vector<2x640xf32>
    %84 = arith.subf %71, %83 : vector<2x640xf32>
    %cst_52 = arith.constant 9.99999974E-6 : f32
    %85 = vector.broadcast %cst_52 : f32 to vector<2x1xf32>
    %86 = arith.addf %82, %85 : vector<2x1xf32>
    %87 = math.rsqrt %86 : vector<2x1xf32>
    %88 = vector.broadcast %87 : vector<2x1xf32> to vector<2x640xf32>
    %89 = arith.mulf %84, %88 : vector<2x640xf32>
    %c0_53 = arith.constant 0 : index
    %c0_54 = arith.constant 0 : index
    %90 = vector.load %arg18[%c0_53, %c0_54] : memref<1x640xf32, #tpu.memory_space<vmem>>, vector<1x640xf32>
    %91 = vector.broadcast %90 : vector<1x640xf32> to vector<2x640xf32>
    %92 = arith.mulf %89, %91 : vector<2x640xf32>
    %c0_55 = arith.constant 0 : index
    %c0_56 = arith.constant 0 : index
    %93 = vector.load %arg19[%c0_55, %c0_56] : memref<1x640xf32, #tpu.memory_space<vmem>>, vector<1x640xf32>
    %94 = vector.broadcast %93 : vector<1x640xf32> to vector<2x640xf32>
    %95 = arith.addf %92, %94 : vector<2x640xf32>
    %cst_57 = arith.constant 0.000000e+00 : f32
    %96 = vector.broadcast %cst_57 : f32 to vector<2x640xf32>
    %97 = arith.maximumf %95, %96 : vector<2x640xf32>
    %c0_58 = arith.constant 0 : index
    %c0_59 = arith.constant 0 : index
    %98 = vector.load %arg20[%c0_58, %c0_59] : memref<640x576xf32, #tpu.memory_space<vmem>>, vector<640x576xf32>
    %cst_60 = arith.constant dense<0.000000e+00> : vector<2x576xf32>
    %99 = tpu.matmul %97, %98, %cst_60 {dimension_numbers = #tpu.dot_dimension_numbers<[1], [0], [0], [1], [0, 0, 1, 1], [], []>} : vector<2x640xf32>, vector<640x576xf32>, vector<2x576xf32> -> vector<2x576xf32>
    %c0_61 = arith.constant 0 : index
    %c0_62 = arith.constant 0 : index
    %100 = vector.load %arg21[%c0_61, %c0_62] : memref<1x576xf32, #tpu.memory_space<vmem>>, vector<1x576xf32>
    %101 = vector.broadcast %100 : vector<1x576xf32> to vector<2x576xf32>
    %102 = arith.addf %99, %101 : vector<2x576xf32>
    %cst_63 = arith.constant dense<0.000000e+00> : vector<2xf32>
    %103 = vector.multi_reduction <add>, %102, %cst_63 [1] : vector<2x576xf32> to vector<2xf32>
    %104 = vector.shape_cast %103 : vector<2xf32> to vector<2x1xf32>
    %cst_64 = arith.constant 5.760000e+02 : f32
    %105 = vector.broadcast %cst_64 : f32 to vector<2x1xf32>
    %106 = arith.divf %104, %105 : vector<2x1xf32>
    %107 = vector.broadcast %106 : vector<2x1xf32> to vector<2x576xf32>
    %108 = arith.subf %102, %107 : vector<2x576xf32>
    %109 = arith.mulf %108, %108 : vector<2x576xf32>
    %cst_65 = arith.constant dense<0.000000e+00> : vector<2xf32>
    %110 = vector.multi_reduction <add>, %109, %cst_65 [1] : vector<2x576xf32> to vector<2xf32>
    %111 = vector.shape_cast %110 : vector<2xf32> to vector<2x1xf32>
    %cst_66 = arith.constant 5.760000e+02 : f32
    %112 = vector.broadcast %cst_66 : f32 to vector<2x1xf32>
    %113 = arith.divf %111, %112 : vector<2x1xf32>
    %114 = vector.broadcast %106 : vector<2x1xf32> to vector<2x576xf32>
    %115 = arith.subf %102, %114 : vector<2x576xf32>
    %cst_67 = arith.constant 9.99999974E-6 : f32
    %116 = vector.broadcast %cst_67 : f32 to vector<2x1xf32>
    %117 = arith.addf %113, %116 : vector<2x1xf32>
    %118 = math.rsqrt %117 : vector<2x1xf32>
    %119 = vector.broadcast %118 : vector<2x1xf32> to vector<2x576xf32>
    %120 = arith.mulf %115, %119 : vector<2x576xf32>
    %c0_68 = arith.constant 0 : index
    %c0_69 = arith.constant 0 : index
    %121 = vector.load %arg22[%c0_68, %c0_69] : memref<1x576xf32, #tpu.memory_space<vmem>>, vector<1x576xf32>
    %122 = vector.broadcast %121 : vector<1x576xf32> to vector<2x576xf32>
    %123 = arith.mulf %120, %122 : vector<2x576xf32>
    %c0_70 = arith.constant 0 : index
    %c0_71 = arith.constant 0 : index
    %124 = vector.load %arg23[%c0_70, %c0_71] : memref<1x576xf32, #tpu.memory_space<vmem>>, vector<1x576xf32>
    %125 = vector.broadcast %124 : vector<1x576xf32> to vector<2x576xf32>
    %126 = arith.addf %123, %125 : vector<2x576xf32>
    %cst_72 = arith.constant 0.000000e+00 : f32
    %127 = vector.broadcast %cst_72 : f32 to vector<2x576xf32>
    %128 = arith.maximumf %126, %127 : vector<2x576xf32>
    %c0_73 = arith.constant 0 : index
    %c0_74 = arith.constant 0 : index
    %129 = vector.load %arg24[%c0_73, %c0_74] : memref<576x160xf32, #tpu.memory_space<vmem>>, vector<576x160xf32>
    %cst_75 = arith.constant dense<0.000000e+00> : vector<2x160xf32>
    %130 = tpu.matmul %128, %129, %cst_75 {dimension_numbers = #tpu.dot_dimension_numbers<[1], [0], [0], [1], [0, 0, 1, 1], [], []>} : vector<2x576xf32>, vector<576x160xf32>, vector<2x160xf32> -> vector<2x160xf32>
    %c0_76 = arith.constant 0 : index
    %c0_77 = arith.constant 0 : index
    %131 = vector.load %arg25[%c0_76, %c0_77] : memref<1x160xf32, #tpu.memory_space<vmem>>, vector<1x160xf32>
    %132 = vector.broadcast %131 : vector<1x160xf32> to vector<2x160xf32>
    %133 = arith.addf %130, %132 : vector<2x160xf32>
    %cst_78 = arith.constant dense<0.000000e+00> : vector<2xf32>
    %134 = vector.multi_reduction <add>, %133, %cst_78 [1] : vector<2x160xf32> to vector<2xf32>
    %135 = vector.shape_cast %134 : vector<2xf32> to vector<2x1xf32>
    %cst_79 = arith.constant 1.600000e+02 : f32
    %136 = vector.broadcast %cst_79 : f32 to vector<2x1xf32>
    %137 = arith.divf %135, %136 : vector<2x1xf32>
    %138 = vector.broadcast %137 : vector<2x1xf32> to vector<2x160xf32>
    %139 = arith.subf %133, %138 : vector<2x160xf32>
    %140 = arith.mulf %139, %139 : vector<2x160xf32>
    %cst_80 = arith.constant dense<0.000000e+00> : vector<2xf32>
    %141 = vector.multi_reduction <add>, %140, %cst_80 [1] : vector<2x160xf32> to vector<2xf32>
    %142 = vector.shape_cast %141 : vector<2xf32> to vector<2x1xf32>
    %cst_81 = arith.constant 1.600000e+02 : f32
    %143 = vector.broadcast %cst_81 : f32 to vector<2x1xf32>
    %144 = arith.divf %142, %143 : vector<2x1xf32>
    %145 = vector.broadcast %137 : vector<2x1xf32> to vector<2x160xf32>
    %146 = arith.subf %133, %145 : vector<2x160xf32>
    %cst_82 = arith.constant 9.99999974E-6 : f32
    %147 = vector.broadcast %cst_82 : f32 to vector<2x1xf32>
    %148 = arith.addf %144, %147 : vector<2x1xf32>
    %149 = math.rsqrt %148 : vector<2x1xf32>
    %150 = vector.broadcast %149 : vector<2x1xf32> to vector<2x160xf32>
    %151 = arith.mulf %146, %150 : vector<2x160xf32>
    %c0_83 = arith.constant 0 : index
    %c0_84 = arith.constant 0 : index
    %152 = vector.load %arg26[%c0_83, %c0_84] : memref<1x160xf32, #tpu.memory_space<vmem>>, vector<1x160xf32>
    %153 = vector.broadcast %152 : vector<1x160xf32> to vector<2x160xf32>
    %154 = arith.mulf %151, %153 : vector<2x160xf32>
    %c0_85 = arith.constant 0 : index
    %c0_86 = arith.constant 0 : index
    %155 = vector.load %arg27[%c0_85, %c0_86] : memref<1x160xf32, #tpu.memory_space<vmem>>, vector<1x160xf32>
    %156 = vector.broadcast %155 : vector<1x160xf32> to vector<2x160xf32>
    %157 = arith.addf %154, %156 : vector<2x160xf32>
    %cst_87 = arith.constant 0.000000e+00 : f32
    %158 = vector.broadcast %cst_87 : f32 to vector<2x160xf32>
    %159 = arith.maximumf %157, %158 : vector<2x160xf32>
    %c0_88 = arith.constant 0 : index
    %c0_89 = arith.constant 0 : index
    %160 = vector.load %arg28[%c0_88, %c0_89] : memref<160x64xf32, #tpu.memory_space<vmem>>, vector<160x64xf32>
    %cst_90 = arith.constant dense<0.000000e+00> : vector<2x64xf32>
    %161 = tpu.matmul %159, %160, %cst_90 {dimension_numbers = #tpu.dot_dimension_numbers<[1], [0], [0], [1], [0, 0, 1, 1], [], []>} : vector<2x160xf32>, vector<160x64xf32>, vector<2x64xf32> -> vector<2x64xf32>
    %c0_91 = arith.constant 0 : index
    %c0_92 = arith.constant 0 : index
    %162 = vector.load %arg29[%c0_91, %c0_92] : memref<1x64xf32, #tpu.memory_space<vmem>>, vector<1x64xf32>
    %163 = vector.broadcast %162 : vector<1x64xf32> to vector<2x64xf32>
    %164 = arith.addf %161, %163 : vector<2x64xf32>
    %c0_93 = arith.constant 0 : index
    %c0_94 = arith.constant 0 : index
    %165 = vector.load %arg30[%c0_93, %c0_94] : memref<2x64xf32, #tpu.memory_space<vmem>>, vector<2x64xf32>
    tpu.vector_store %arg30[%c0_93, %c0_94], %164 {strides = array<i32>} : memref<2x64xf32, #tpu.memory_space<vmem>>, vector<2x64xf32>,
    return
  }
}

</mosaic_0001>

<llo_original>
// kernel: convnn_hrtf_sht_forward.1
$region0: #{convnn_hrtf_sht_forward.1}
  #allocation0 [shape = 'u32[]', space=smem, size = 0x4, offset = 0x4, fixed_abs, tag = 'smem constant byte address 0x4 - core index']
  #allocation1 [shape = 'u32[144,128]{1,0:T(1,128)}', space=vmem, size = 0x12000, scoped, tag = 'internal scratch']
  %s0 = inlined_call_operand.smem [shape: u32[31], index: -1, kind: input, shape index: {}]
  %s1 = sld [smem:[%s0]]
  %s2 = scalar_lea.smem %s0, 1
  %s3 = sld [smem:[%s2]]
  %s4 = scalar_lea.smem %s0, 2
  %s5 = sld [smem:[%s4]]
  %s6 = scalar_lea.smem %s0, 3
  %s7 = sld [smem:[%s6]]
  %s8 = scalar_lea.smem %s0, 4
  %s9 = sld [smem:[%s8]]
  %s10 = scalar_lea.smem %s0, 5
  %s11 = sld [smem:[%s10]]
  %s12 = scalar_lea.smem %s0, 6
  %s13 = sld [smem:[%s12]]
  %s14 = scalar_lea.smem %s0, 7
  %s15 = sld [smem:[%s14]]
  %s16 = scalar_lea.smem %s0, 8
  %s17 = sld [smem:[%s16]]
  %s18 = scalar_lea.smem %s0, 9
  %s19 = sld [smem:[%s18]]
  %s20 = scalar_lea.smem %s0, 10
  %s21 = sld [smem:[%s20]]
  %s22 = scalar_lea.smem %s0, 11
  %s23 = sld [smem:[%s22]]
  %s24 = scalar_lea.smem %s0, 12
  %s25 = sld [smem:[%s24]]
  %s26 = scalar_lea.smem %s0, 13
  %s27 = sld [smem:[%s26]]
  %s28 = scalar_lea.smem %s0, 14
  %s29 = sld [smem:[%s28]]
  %s30 = scalar_lea.smem %s0, 15
  %s31 = sld [smem:[%s30]]
  %s32 = scalar_lea.smem %s0, 16
  %s33 = sld [smem:[%s32]]
  %s34 = scalar_lea.smem %s0, 17
  %s35 = sld [smem:[%s34]]
  %s36 = scalar_lea.smem %s0, 18
  %s37 = sld [smem:[%s36]]
  %s38 = scalar_lea.smem %s0, 19
  %s39 = sld [smem:[%s38]]
  %s40 = scalar_lea.smem %s0, 20
  %s41 = sld [smem:[%s40]]
  %s42 = scalar_lea.smem %s0, 21
  %s43 = sld [smem:[%s42]]
  %s44 = scalar_lea.smem %s0, 22
  %s45 = sld [smem:[%s44]]
  %s46 = scalar_lea.smem %s0, 23
  %s47 = sld [smem:[%s46]]
  %s48 = scalar_lea.smem %s0, 24
  %s49 = sld [smem:[%s48]]
  %s50 = scalar_lea.smem %s0, 25
  %s51 = sld [smem:[%s50]]
  %s52 = scalar_lea.smem %s0, 26
  %s53 = sld [smem:[%s52]]
  %s54 = scalar_lea.smem %s0, 27
  %s55 = sld [smem:[%s54]]
  %s56 = scalar_lea.smem %s0, 28
  %s57 = sld [smem:[%s56]]
  %s58 = scalar_lea.smem %s0, 29
  %s59 = sld [smem:[%s58]]
  %s60 = scalar_lea.smem %s0, 30
  %s61 = sld [smem:[%s60]]
  %s62 = sld [smem:[#allocation0]]
  $region138: #{convnn_hrtf_sht_forward.1} parent=0
    _
  %s64 = ssub.s32 1, %s62
  %s65 = scalar_select 0, %s64, %s62
  $region1: #{convnn_hrtf_sht_forward.1} parent=0
    #allocation2 [shape = 'u8[512]{0}', space=smem, size = 0x200, scoped, tag = 'input window, operand 0, single buffered']
    #allocation3 [shape = 's32[1]{0}', space=sflag, size = 0x4, scoped, tag = 'scoped memory for convnn_hrtf_sht_forward.1']
    #allocation4 [shape = 's32[1]{0}', space=sflag, size = 0x4, scoped, tag = 'scoped memory for convnn_hrtf_sht_forward.1']
    #allocation5 [shape = 'u8[512]{0}', space=smem, size = 0x200, scoped, tag = 'input window, operand 1, single buffered']
    #allocation6 [shape = 's32[1]{0}', space=sflag, size = 0x4, scoped, tag = 'scoped memory for convnn_hrtf_sht_forward.1']
    #allocation7 [shape = 'u8[1024]{0}', space=vmem, size = 0x400, scoped, tag = 'output window, operand 0, single buffered']
    %66 = vsyncpa [#allocation4], 0
    %67 = vsyncpa [#allocation6], 0
    %68 = vsyncpa [#allocation3], 0
    // Predicated region
    $region2: #{convnn_hrtf_sht_forward.1} parent=1 // pred_check
      _
    $region3: #{convnn_hrtf_sht_forward.1} parent=1 // pred_check_branch
      %70 = sbr.rel (0) target = $region5
    $region4: #{convnn_hrtf_sht_forward.1} parent=1 // pred_region
      %s72 = ssub.s32 16, 16
      %73 = vsyncadd [#allocation4], %s72
      %s75 = sshll.u32 %s1, 4
      %s76 = int_to_ptr.vmem [resolvable:$true] %s75
      %78 = dma.vmem_to_smem %s76, 16, [#allocation2], [#allocation4]
    $region5: #{convnn_hrtf_sht_forward.1} parent=1 // pred_fallthru
      _
    // Predicated region
    $region6: #{convnn_hrtf_sht_forward.1} parent=1 // pred_check
      _
    $region7: #{convnn_hrtf_sht_forward.1} parent=1 // pred_check_branch
      %80 = sbr.rel (0) target = $region9
    $region8: #{convnn_hrtf_sht_forward.1} parent=1 // pred_region
      %s82 = ssub.s32 16, 16
      %83 = vsyncadd [#allocation6], %s82
      %s85 = sshll.u32 %s3, 4
      %s86 = int_to_ptr.vmem [resolvable:$true] %s85
      %88 = dma.vmem_to_smem %s86, 16, [#allocation5], [#allocation6]
    $region9: #{convnn_hrtf_sht_forward.1} parent=1 // pred_fallthru
      _
    // Predicated region
    $region10: #{convnn_hrtf_sht_forward.1} parent=1 // pred_check
      _
    $region11: #{convnn_hrtf_sht_forward.1} parent=1 // pred_check_branch
      %90 = sbr.rel (0) target = $region13
    $region12: #{convnn_hrtf_sht_forward.1} parent=1 // pred_region
      _
    $region13: #{convnn_hrtf_sht_forward.1} parent=1 // pred_fallthru
      _
    // Predicated region
    $region14: #{convnn_hrtf_sht_forward.1} parent=1 // pred_check
      _
    $region15: #{convnn_hrtf_sht_forward.1} parent=1 // pred_check_branch
      %92 = sbr.rel (0) target = $region17
    $region16: #{convnn_hrtf_sht_forward.1} parent=1 // pred_region
      _
    $region17: #{convnn_hrtf_sht_forward.1} parent=1 // pred_fallthru
      _
    // Predicated region
    $region18: #{convnn_hrtf_sht_forward.1} parent=1 // pred_check
      _
    $region19: #{convnn_hrtf_sht_forward.1} parent=1 // pred_check_branch
      %94 = sbr.rel (0) target = $region21
    $region20: #{convnn_hrtf_sht_forward.1} parent=1 // pred_region
      _
    $region21: #{convnn_hrtf_sht_forward.1} parent=1 // pred_fallthru
      _
    // Predicated region
    $region22: #{convnn_hrtf_sht_forward.1} parent=1 // pred_check
      _
    $region23: #{convnn_hrtf_sht_forward.1} parent=1 // pred_check_branch
      %96 = sbr.rel (0) target = $region25
    $region24: #{convnn_hrtf_sht_forward.1} parent=1 // pred_region
      _
    $region25: #{convnn_hrtf_sht_forward.1} parent=1 // pred_fallthru
      _
    // Predicated region
    $region26: #{convnn_hrtf_sht_forward.1} parent=1 // pred_check
      _
    $region27: #{convnn_hrtf_sht_forward.1} parent=1 // pred_check_branch
      %98 = sbr.rel (0) target = $region29
    $region28: #{convnn_hrtf_sht_forward.1} parent=1 // pred_region
      _
    $region29: #{convnn_hrtf_sht_forward.1} parent=1 // pred_fallthru
      _
    // Predicated region
    $region30: #{convnn_hrtf_sht_forward.1} parent=1 // pred_check
      _
    $region31: #{convnn_hrtf_sht_forward.1} parent=1 // pred_check_branch
      %100 = sbr.rel (0) target = $region33
    $region32: #{convnn_hrtf_sht_forward.1} parent=1 // pred_region
      _
    $region33: #{convnn_hrtf_sht_forward.1} parent=1 // pred_fallthru
      _
    // Predicated region
    $region34: #{convnn_hrtf_sht_forward.1} parent=1 // pred_check
      _
    $region35: #{convnn_hrtf_sht_forward.1} parent=1 // pred_check_branch
      %102 = sbr.rel (0) target = $region37
    $region36: #{convnn_hrtf_sht_forward.1} parent=1 // pred_region
      _
    $region37: #{convnn_hrtf_sht_forward.1} parent=1 // pred_fallthru
      _
    // Predicated region
    $region38: #{convnn_hrtf_sht_forward.1} parent=1 // pred_check
      _
    $region39: #{convnn_hrtf_sht_forward.1} parent=1 // pred_check_branch
      %104 = sbr.rel (0) target = $region41
    $region40: #{convnn_hrtf_sht_forward.1} parent=1 // pred_region
      _
    $region41: #{convnn_hrtf_sht_forward.1} parent=1 // pred_fallthru
      _
    // Predicated region
    $region42: #{convnn_hrtf_sht_forward.1} parent=1 // pred_check
      _
    $region43: #{convnn_hrtf_sht_forward.1} parent=1 // pred_check_branch
      %106 = sbr.rel (0) target = $region45
    $region44: #{convnn_hrtf_sht_forward.1} parent=1 // pred_region
      _
    $region45: #{convnn_hrtf_sht_forward.1} parent=1 // pred_fallthru
      _
    // Predicated region
    $region46: #{convnn_hrtf_sht_forward.1} parent=1 // pred_check
      _
    $region47: #{convnn_hrtf_sht_forward.1} parent=1 // pred_check_branch
      %108 = sbr.rel (0) target = $region49
    $region48: #{convnn_hrtf_sht_forward.1} parent=1 // pred_region
      _
    $region49: #{convnn_hrtf_sht_forward.1} parent=1 // pred_fallthru
      _
    // Predicated region
    $region50: #{convnn_hrtf_sht_forward.1} parent=1 // pred_check
      _
    $region51: #{convnn_hrtf_sht_forward.1} parent=1 // pred_check_branch
      %110 = sbr.rel (0) target = $region53
    $region52: #{convnn_hrtf_sht_forward.1} parent=1 // pred_region
      _
    $region53: #{convnn_hrtf_sht_forward.1} parent=1 // pred_fallthru
      _
    // Predicated region
    $region54: #{convnn_hrtf_sht_forward.1} parent=1 // pred_check
      _
    $region55: #{convnn_hrtf_sht_forward.1} parent=1 // pred_check_branch
      %112 = sbr.rel (0) target = $region57
    $region56: #{convnn_hrtf_sht_forward.1} parent=1 // pred_region
      _
    $region57: #{convnn_hrtf_sht_forward.1} parent=1 // pred_fallthru
      _
    // Predicated region
    $region58: #{convnn_hrtf_sht_forward.1} parent=1 // pred_check
      _
    $region59: #{convnn_hrtf_sht_forward.1} parent=1 // pred_check_branch
      %114 = sbr.rel (0) target = $region61
    $region60: #{convnn_hrtf_sht_forward.1} parent=1 // pred_region
      _
    $region61: #{convnn_hrtf_sht_forward.1} parent=1 // pred_fallthru
      _
    // Predicated region
    $region62: #{convnn_hrtf_sht_forward.1} parent=1 // pred_check
      _
    $region63: #{convnn_hrtf_sht_forward.1} parent=1 // pred_check_branch
      %116 = sbr.rel (0) target = $region65
    $region64: #{convnn_hrtf_sht_forward.1} parent=1 // pred_region
      _
    $region65: #{convnn_hrtf_sht_forward.1} parent=1 // pred_fallthru
      _
    // Predicated region
    $region66: #{convnn_hrtf_sht_forward.1} parent=1 // pred_check
      _
    $region67: #{convnn_hrtf_sht_forward.1} parent=1 // pred_check_branch
      %118 = sbr.rel (0) target = $region69
    $region68: #{convnn_hrtf_sht_forward.1} parent=1 // pred_region
      _
    $region69: #{convnn_hrtf_sht_forward.1} parent=1 // pred_fallthru
      _
    // Predicated region
    $region70: #{convnn_hrtf_sht_forward.1} parent=1 // pred_check
      _
    $region71: #{convnn_hrtf_sht_forward.1} parent=1 // pred_check_branch
      %120 = sbr.rel (0) target = $region73
    $region72: #{convnn_hrtf_sht_forward.1} parent=1 // pred_region
      _
    $region73: #{convnn_hrtf_sht_forward.1} parent=1 // pred_fallthru
      _
    // Predicated region
    $region74: #{convnn_hrtf_sht_forward.1} parent=1 // pred_check
      _
    $region75: #{convnn_hrtf_sht_forward.1} parent=1 // pred_check_branch
      %122 = sbr.rel (0) target = $region77
    $region76: #{convnn_hrtf_sht_forward.1} parent=1 // pred_region
      _
    $region77: #{convnn_hrtf_sht_forward.1} parent=1 // pred_fallthru
      _
    // Predicated region
    $region78: #{convnn_hrtf_sht_forward.1} parent=1 // pred_check
      _
    $region79: #{convnn_hrtf_sht_forward.1} parent=1 // pred_check_branch
      %124 = sbr.rel (0) target = $region81
    $region80: #{convnn_hrtf_sht_forward.1} parent=1 // pred_region
      _
    $region81: #{convnn_hrtf_sht_forward.1} parent=1 // pred_fallthru
      _
    // Predicated region
    $region82: #{convnn_hrtf_sht_forward.1} parent=1 // pred_check
      _
    $region83: #{convnn_hrtf_sht_forward.1} parent=1 // pred_check_branch
      %126 = sbr.rel (0) target = $region85
    $region84: #{convnn_hrtf_sht_forward.1} parent=1 // pred_region
      _
    $region85: #{convnn_hrtf_sht_forward.1} parent=1 // pred_fallthru
      _
    // Predicated region
    $region86: #{convnn_hrtf_sht_forward.1} parent=1 // pred_check
      _
    $region87: #{convnn_hrtf_sht_forward.1} parent=1 // pred_check_branch
      %128 = sbr.rel (0) target = $region89
    $region88: #{convnn_hrtf_sht_forward.1} parent=1 // pred_region
      _
    $region89: #{convnn_hrtf_sht_forward.1} parent=1 // pred_fallthru
      _
    // Predicated region
    $region90: #{convnn_hrtf_sht_forward.1} parent=1 // pred_check
      _
    $region91: #{convnn_hrtf_sht_forward.1} parent=1 // pred_check_branch
      %130 = sbr.rel (0) target = $region93
    $region92: #{convnn_hrtf_sht_forward.1} parent=1 // pred_region
      _
    $region93: #{convnn_hrtf_sht_forward.1} parent=1 // pred_fallthru
      _
    // Predicated region
    $region94: #{convnn_hrtf_sht_forward.1} parent=1 // pred_check
      _
    $region95: #{convnn_hrtf_sht_forward.1} parent=1 // pred_check_branch
      %132 = sbr.rel (0) target = $region97
    $region96: #{convnn_hrtf_sht_forward.1} parent=1 // pred_region
      _
    $region97: #{convnn_hrtf_sht_forward.1} parent=1 // pred_fallthru
      _
    // Predicated region
    $region98: #{convnn_hrtf_sht_forward.1} parent=1 // pred_check
      _
    $region99: #{convnn_hrtf_sht_forward.1} parent=1 // pred_check_branch
      %134 = sbr.rel (0) target = $region101
    $region100: #{convnn_hrtf_sht_forward.1} parent=1 // pred_region
      _
    $region101: #{convnn_hrtf_sht_forward.1} parent=1 // pred_fallthru
      _
    // Predicated region
    $region102: #{convnn_hrtf_sht_forward.1} parent=1 // pred_check
      _
    $region103: #{convnn_hrtf_sht_forward.1} parent=1 // pred_check_branch
      %136 = sbr.rel (0) target = $region105
    $region104: #{convnn_hrtf_sht_forward.1} parent=1 // pred_region
      _
    $region105: #{convnn_hrtf_sht_forward.1} parent=1 // pred_fallthru
      _
    // Predicated region
    $region106: #{convnn_hrtf_sht_forward.1} parent=1 // pred_check
      _
    $region107: #{convnn_hrtf_sht_forward.1} parent=1 // pred_check_branch
      %138 = sbr.rel (0) target = $region109
    $region108: #{convnn_hrtf_sht_forward.1} parent=1 // pred_region
      _
    $region109: #{convnn_hrtf_sht_forward.1} parent=1 // pred_fallthru
      _
    // Predicated region
    $region110: #{convnn_hrtf_sht_forward.1} parent=1 // pred_check
      _
    $region111: #{convnn_hrtf_sht_forward.1} parent=1 // pred_check_branch
      %140 = sbr.rel (0) target = $region113
    $region112: #{convnn_hrtf_sht_forward.1} parent=1 // pred_region
      _
    $region113: #{convnn_hrtf_sht_forward.1} parent=1 // pred_fallthru
      _
    // Predicated region
    $region114: #{convnn_hrtf_sht_forward.1} parent=1 // pred_check
      _
    $region115: #{convnn_hrtf_sht_forward.1} parent=1 // pred_check_branch
      %142 = sbr.rel (0) target = $region117
    $region116: #{convnn_hrtf_sht_forward.1} parent=1 // pred_region
      _
    $region117: #{convnn_hrtf_sht_forward.1} parent=1 // pred_fallthru
      _
    // Predicated region
    $region118: #{convnn_hrtf_sht_forward.1} parent=1 // pred_check
      _
    $region119: #{convnn_hrtf_sht_forward.1} parent=1 // pred_check_branch
      %144 = sbr.rel (0) target = $region121
    $region120: #{convnn_hrtf_sht_forward.1} parent=1 // pred_region
      _
    $region121: #{convnn_hrtf_sht_forward.1} parent=1 // pred_fallthru
      _
    // Predicated region
    $region122: #{convnn_hrtf_sht_forward.1} parent=1 // pred_check
      _
    $region123: #{convnn_hrtf_sht_forward.1} parent=1 // pred_check_branch
      %146 = sbr.rel (0) target = $region125
    $region124: #{convnn_hrtf_sht_forward.1} parent=1 // pred_region
      %147 = dma.done [#allocation4], 16
    $region125: #{convnn_hrtf_sht_forward.1} parent=1 // pred_fallthru
      _
    // Predicated region
    $region126: #{convnn_hrtf_sht_forward.1} parent=1 // pred_check
      _
    $region127: #{convnn_hrtf_sht_forward.1} parent=1 // pred_check_branch
      %149 = sbr.rel (0) target = $region129
    $region128: #{convnn_hrtf_sht_forward.1} parent=1 // pred_region
      %150 = dma.done [#allocation6], 16
    $region129: #{convnn_hrtf_sht_forward.1} parent=1 // pred_fallthru
      _
    %151 = sfence
    %v152 = vld [vmem:[%s5] sm:$0x3]
    %v153 = vld [vmem:[%s13] sm:$0xff]
    %v154 = vld [vmem:[%s13 + $0x8] sm:$0xf]
    %v155 = vld [vmem:[%s15] sm:$0x1]
    %v157 = vlaneseq
    %v158 = vshrl.u32 %v157, 7
    %v159 = vsub.s32 0, %v158
    %v160 = vrot.slane %v155, %v159
    %vm162 = vcmask 97280
    %v164 = vsel %vm162, %v152, 0
    %vm166 = vcmask 1043456
    %v168 = vsel %vm166, %v154, 0
    %170 = vmatprep.subr.mxu0 0.0
    %171 = vmatpush1.msra.mxu0 %v153
    %172 = vmatprep.subr.mxu0 0.0
    %173 = vmatpush1.msra.mxu0 %v168
    %174 = vmatprep.subr.mxu0 0.0
    %175 = vmatpush1.msra.mxu0 0.0
    %176 = vmatprep.subr.mxu0 0.0
    %177 = vmatpush1.msra.mxu0 0.0
    %178 = vmatprep.subr.mxu0 0.0
    %179 = vmatpush1.msra.mxu0 0.0
    %180 = vmatprep.subr.mxu0 0.0
    %181 = vmatpush1.msra.mxu0 0.0
    %182 = vmatprep.subr.mxu0 0.0
    %183 = vmatpush1.msra.mxu0 0.0
    %184 = vmatprep.subr.mxu0 0.0
    %185 = vmatpush1.msra.mxu0 0.0
    %186 = vmatprep.subr.mxu0 0.0
    %187 = vmatpush1.msra.mxu0 0.0
    %188 = vmatprep.subr.mxu0 0.0
    %189 = vmatpush1.msra.mxu0 0.0
    %190 = vmatprep.subr.mxu0 0.0
    %191 = vmatpush1.msra.mxu0 0.0
    %192 = vmatprep.subr.mxu0 0.0
    %193 = vmatpush1.msra.mxu0 0.0
    %194 = vmatprep.subr.mxu0 0.0
    %195 = vmatpush1.msra.mxu0 0.0
    %196 = vmatprep.subr.mxu0 0.0
    %197 = vmatpush1.msra.mxu0 0.0
    %198 = vmatprep.subr.mxu0 0.0
    %199 = vmatpush1.msra.mxu0 0.0
    %200 = vmatprep.subr.mxu0 0.0
    %201 = vmatpush1.msra.mxu0 0.0
    %202 = vmatprep.subr.mxu0 0.0
    %203 = vmatpush1.msra.mxu0 0.0
    %204 = vmatprep.subr.mxu0 0.0
    %205 = vmatpush1.msra.mxu0 0.0
    %206 = vmatprep.subr.mxu0 0.0
    %207 = vmatpush1.msra.mxu0 0.0
    %208 = vmatprep.subr.mxu0 0.0
    %209 = vmatpush1.msra.mxu0 0.0
    %210 = vmatprep.subr.mxu0 0.0
    %211 = vmatpush1.msra.mxu0 0.0
    %212 = vmatprep.subr.mxu0 0.0
    %213 = vmatpush1.msra.mxu0 0.0
    %214 = vmatprep.subr.mxu0 0.0
    %215 = vmatpush1.msra.mxu0 0.0
    %216 = vmatprep.subr.mxu0 0.0
    %217 = vmatpush1.msra.mxu0 0.0
    %218 = vmatprep.subr.mxu0 0.0
    %219 = vmatpush1.msra.mxu0 0.0
    %220 = vmatprep.subr.mxu0 0.0
    %221 = vmatpush1.msra.mxu0 0.0
    %222 = vmatprep.subr.mxu0 0.0
    %223 = vmatpush1.msra.mxu0 0.0
    %224 = vmatprep.subr.mxu0 0.0
    %225 = vmatpush1.msra.mxu0 0.0
    %226 = vmatprep.subr.mxu0 0.0
    %227 = vmatpush1.msra.mxu0 0.0
    %228 = vmatprep.subr.mxu0 0.0
    %229 = vmatpush1.msra.mxu0 0.0
    %230 = vmatprep.subr.mxu0 0.0
    %231 = vmatpush1.msra.mxu0 0.0
    %232 = vmatprep.subr.mxu0 0.0
    %233 = vmatpush1.msra.mxu0 0.0
    %234 = vmatprep.mubr.f32.mxu0 0.0
    %235 = vmatmul.mubr.f32.gmra.mrb[0].mxu0 %v164
    %v236 = vpop.f32.mrb[0].mxu0
    %v237 = vadd.f32 %v160, %v236
    %v238 = vpop.f32.mrb[0].mxu0
    %239 = vdwg.mxu0
    %v240 = vld [vmem:[%s7] sm:$0x3]
    %v241 = vld [vmem:[%s17] sm:$0xff]
    %v242 = vld [vmem:[%s17 + $0x8] sm:$0x1f]
    %v243 = vld [vmem:[%s19] sm:$0x1]
    %v245 = vlaneseq
    %v246 = vshrl.u32 %v245, 7
    %v247 = vsub.s32 0, %v246
    %v248 = vrot.slane %v243, %v247
    %vm250 = vcmask 105472
    %v252 = vsel %vm250, %v240, 0
    %vm254 = vcmask 1044480
    %v256 = vsel %vm254, %v242, 0
    %258 = vmatprep.subr.mxu0 0.0
    %259 = vmatpush1.msra.mxu0 %v241
    %260 = vmatprep.subr.mxu0 0.0
    %261 = vmatpush1.msra.mxu0 %v256
    %262 = vmatprep.subr.mxu0 0.0
    %263 = vmatpush1.msra.mxu0 0.0
    %264 = vmatprep.subr.mxu0 0.0
    %265 = vmatpush1.msra.mxu0 0.0
    %266 = vmatprep.subr.mxu0 0.0
    %267 = vmatpush1.msra.mxu0 0.0
    %268 = vmatprep.subr.mxu0 0.0
    %269 = vmatpush1.msra.mxu0 0.0
    %270 = vmatprep.subr.mxu0 0.0
    %271 = vmatpush1.msra.mxu0 0.0
    %272 = vmatprep.subr.mxu0 0.0
    %273 = vmatpush1.msra.mxu0 0.0
    %274 = vmatprep.subr.mxu0 0.0
    %275 = vmatpush1.msra.mxu0 0.0
    %276 = vmatprep.subr.mxu0 0.0
    %277 = vmatpush1.msra.mxu0 0.0
    %278 = vmatprep.subr.mxu0 0.0
    %279 = vmatpush1.msra.mxu0 0.0
    %280 = vmatprep.subr.mxu0 0.0
    %281 = vmatpush1.msra.mxu0 0.0
    %282 = vmatprep.subr.mxu0 0.0
    %283 = vmatpush1.msra.mxu0 0.0
    %284 = vmatprep.subr.mxu0 0.0
    %285 = vmatpush1.msra.mxu0 0.0
    %286 = vmatprep.subr.mxu0 0.0
    %287 = vmatpush1.msra.mxu0 0.0
    %288 = vmatprep.subr.mxu0 0.0
    %289 = vmatpush1.msra.mxu0 0.0
    %290 = vmatprep.subr.mxu0 0.0
    %291 = vmatpush1.msra.mxu0 0.0
    %292 = vmatprep.subr.mxu0 0.0
    %293 = vmatpush1.msra.mxu0 0.0
    %294 = vmatprep.subr.mxu0 0.0
    %295 = vmatpush1.msra.mxu0 0.0
    %296 = vmatprep.subr.mxu0 0.0
    %297 = vmatpush1.msra.mxu0 0.0
    %298 = vmatprep.subr.mxu0 0.0
    %299 = vmatpush1.msra.mxu0 0.0
    %300 = vmatprep.subr.mxu0 0.0
    %301 = vmatpush1.msra.mxu0 0.0
    %302 = vmatprep.subr.mxu0 0.0
    %303 = vmatpush1.msra.mxu0 0.0
    %304 = vmatprep.subr.mxu0 0.0
    %305 = vmatpush1.msra.mxu0 0.0
    %306 = vmatprep.subr.mxu0 0.0
    %307 = vmatpush1.msra.mxu0 0.0
    %308 = vmatprep.subr.mxu0 0.0
    %309 = vmatpush1.msra.mxu0 0.0
    %310 = vmatprep.subr.mxu0 0.0
    %311 = vmatpush1.msra.mxu0 0.0
    %312 = vmatprep.subr.mxu0 0.0
    %313 = vmatpush1.msra.mxu0 0.0
    %314 = vmatprep.subr.mxu0 0.0
    %315 = vmatpush1.msra.mxu0 0.0
    %316 = vmatprep.subr.mxu0 0.0
    %317 = vmatpush1.msra.mxu0 0.0
    %318 = vmatprep.subr.mxu0 0.0
    %319 = vmatpush1.msra.mxu0 0.0
    %320 = vmatprep.subr.mxu0 0.0
    %321 = vmatpush1.msra.mxu0 0.0
    %322 = vmatprep.mubr.f32.mxu0 0.0
    %323 = vmatmul.mubr.f32.gmra.mrb[0].mxu0 %v252
    %v324 = vpop.f32.mrb[0].mxu0
    %v325 = vadd.f32 %v248, %v324
    %v326 = vpop.f32.mrb[0].mxu0
    %327 = vdwg.mxu0
    %s328 = sld [smem:[#allocation2]]
    %s329 = scalar_lea.vmem %s9, %s328
    %v330 = vld [vmem:[%s329] sm:$0x1]
    %s331 = sld [smem:[#allocation2 + $0x1]]
    %s332 = scalar_lea.vmem %s9, %s331
    %v333 = vld [vmem:[%s332] sm:$0x1]
    %v335 = vlaneseq
    %v336 = vshrl.u32 %v335, 7
    %v337 = vsub.s32 0, %v336
    %v338 = vrot.slane %v333, %v337
    %vm340 = vcmask 1040384
    %v341 = vsel %vm340, %v330, %v338
    %s342 = sld [smem:[#allocation5]]
    %s343 = scalar_lea.vmem %s11, %s342
    %v344 = vld [vmem:[%s343] sm:$0x1]
    %s345 = sld [smem:[#allocation5 + $0x1]]
    %s346 = scalar_lea.vmem %s11, %s345
    %v347 = vld [vmem:[%s346] sm:$0x1]
    %v349 = vlaneseq
    %v350 = vshrl.u32 %v349, 7
    %v351 = vsub.s32 0, %v350
    %v352 = vrot.slane %v347, %v351
    %v354 = vsel %vm340, %v344, %v352
    %356 = vrot.lane.b32.xlu0 %v325, 16
    %v357 = vpop.permute.xlu0 %356
    %360 = vrot.lane.b32.xlu0 %v341, 32
    %v361 = vpop.permute.xlu0 %360
    %364 = vrot.lane.b32.xlu0 %v354, 48
    %v365 = vpop.permute.xlu0 %364
    %vm367 = vcmask 130048
    %v368 = vsel %vm367, %v237, %v357
    %vm369 = vcmask 261120
    %v370 = vsel %vm369, %v368, %v361
    %vm371 = vcmask 392192
    %v372 = vsel %vm371, %v370, %v365
    %v373 = vld [vmem:[%s21] sm:$0xff]
    %v374 = vld [vmem:[%s21 + $0x8] sm:$0xff]
    %v375 = vld [vmem:[%s21 + $0x10] sm:$0xff]
    %v376 = vld [vmem:[%s21 + $0x18] sm:$0xff]
    %v377 = vld [vmem:[%s21 + $0x20] sm:$0xff]
    %v378 = vld [vmem:[%s21 + $0x28] sm:$0xff]
    %v379 = vld [vmem:[%s21 + $0x30] sm:$0xff]
    %v380 = vld [vmem:[%s21 + $0x38] sm:$0xff]
    %v381 = vld [vmem:[%s21 + $0x40] sm:$0xff]
    %v382 = vld [vmem:[%s21 + $0x48] sm:$0xff]
    %v383 = vld [vmem:[%s21 + $0x50] sm:$0xff]
    %v384 = vld [vmem:[%s21 + $0x58] sm:$0xff]
    %v385 = vld [vmem:[%s21 + $0x60] sm:$0xff]
    %v386 = vld [vmem:[%s21 + $0x68] sm:$0xff]
    %v387 = vld [vmem:[%s21 + $0x70] sm:$0xff]
    %v388 = vld [vmem:[%s21 + $0x78] sm:$0xff]
    %v389 = vld [vmem:[%s23] sm:$0x3]
    %v391 = vlaneseq
    %v392 = vshrl.u32 %v391, 7
    %v393 = vsub.s32 0, %v392
    %v394 = vrot.slane %v389, %v393
    %v395 = vlaneseq
    %v396 = vshrl.u32 %v395, 7
    %v397 = vsub.s32 1, %v396
    %v398 = vrot.slane %v389, %v397
    %vm401 = vcmask 523264
    %v403 = vsel %vm401, %v372, 0
    %405 = vmatprep.subr.mxu0 %v374
    %406 = vmatpush1.msra.mxu0 %v373
    %407 = vmatprep.subr.mxu0 %v376
    %408 = vmatpush1.msra.mxu0 %v375
    %409 = vmatprep.subr.mxu0 %v378
    %410 = vmatpush1.msra.mxu0 %v377
    %411 = vmatprep.subr.mxu0 %v380
    %412 = vmatpush1.msra.mxu0 %v379
    %413 = vmatprep.subr.mxu0 %v382
    %414 = vmatpush1.msra.mxu0 %v381
    %415 = vmatprep.subr.mxu0 %v384
    %416 = vmatpush1.msra.mxu0 %v383
    %417 = vmatprep.subr.mxu0 %v386
    %418 = vmatpush1.msra.mxu0 %v385
    %419 = vmatprep.subr.mxu0 %v388
    %420 = vmatpush1.msra.mxu0 %v387
    %421 = vmatprep.subr.mxu0 0.0
    %422 = vmatpush1.msra.mxu0 0.0
    %423 = vmatprep.subr.mxu0 0.0
    %424 = vmatpush1.msra.mxu0 0.0
    %425 = vmatprep.subr.mxu0 0.0
    %426 = vmatpush1.msra.mxu0 0.0
    %427 = vmatprep.subr.mxu0 0.0
    %428 = vmatpush1.msra.mxu0 0.0
    %429 = vmatprep.subr.mxu0 0.0
    %430 = vmatpush1.msra.mxu0 0.0
    %431 = vmatprep.subr.mxu0 0.0
    %432 = vmatpush1.msra.mxu0 0.0
    %433 = vmatprep.subr.mxu0 0.0
    %434 = vmatpush1.msra.mxu0 0.0
    %435 = vmatprep.subr.mxu0 0.0
    %436 = vmatpush1.msra.mxu0 0.0
    %437 = vmatprep.subr.mxu0 0.0
    %438 = vmatpush1.msra.mxu0 0.0
    %439 = vmatprep.subr.mxu0 0.0
    %440 = vmatpush1.msra.mxu0 0.0
    %441 = vmatprep.subr.mxu0 0.0
    %442 = vmatpush1.msra.mxu0 0.0
    %443 = vmatprep.subr.mxu0 0.0
    %444 = vmatpush1.msra.mxu0 0.0
    %445 = vmatprep.subr.mxu0 0.0
    %446 = vmatpush1.msra.mxu0 0.0
    %447 = vmatprep.subr.mxu0 0.0
    %448 = vmatpush1.msra.mxu0 0.0
    %449 = vmatprep.subr.mxu0 0.0
    %450 = vmatpush1.msra.mxu0 0.0
    %451 = vmatprep.subr.mxu0 0.0
    %452 = vmatpush1.msra.mxu0 0.0
    %453 = vmatprep.subr.mxu0 0.0
    %454 = vmatpush1.msra.mxu0 0.0
    %455 = vmatprep.subr.mxu0 0.0
    %456 = vmatpush1.msra.mxu0 0.0
    %457 = vmatprep.subr.mxu0 0.0
    %458 = vmatpush1.msra.mxu0 0.0
    %459 = vmatprep.subr.mxu0 0.0
    %460 = vmatpush1.msra.mxu0 0.0
    %461 = vmatprep.subr.mxu0 0.0
    %462 = vmatpush1.msra.mxu0 0.0
    %463 = vmatprep.subr.mxu0 0.0
    %464 = vmatpush1.msra.mxu0 0.0
    %465 = vmatprep.subr.mxu0 0.0
    %466 = vmatpush1.msra.mxu0 0.0
    %467 = vmatprep.subr.mxu0 0.0
    %468 = vmatpush1.msra.mxu0 0.0
    %469 = vmatprep.mubr.f32.mxu0 0.0
    %470 = vmatmul.mubr.f32.gmra.mrb[0].mxu0 %v403
    %v471 = vpop.f32.mrb[0].mxu0
    %v472 = vadd.f32 %v394, %v471
    %v473 = vpop.f32.mrb[0].mxu0
    %v474 = vadd.f32 %v398, %v473
    %475 = vdwg.mxu0
    %v476 = vld [vmem:[%s25] sm:$0xff]
    %v477 = vld [vmem:[%s25 + $0x8] sm:$0xff]
    %v478 = vld [vmem:[%s25 + $0x10] sm:$0xff]
    %v479 = vld [vmem:[%s25 + $0x18] sm:$0xff]
    %v480 = vld [vmem:[%s25 + $0x20] sm:$0xff]
    %v481 = vld [vmem:[%s25 + $0x28] sm:$0xff]
    %v482 = vld [vmem:[%s25 + $0x30] sm:$0xff]
    %v483 = vld [vmem:[%s25 + $0x38] sm:$0xff]
    %v484 = vld [vmem:[%s25 + $0x40] sm:$0xff]
    %v485 = vld [vmem:[%s25 + $0x48] sm:$0xff]
    %v486 = vld [vmem:[%s25 + $0x50] sm:$0xff]
    %v487 = vld [vmem:[%s25 + $0x58] sm:$0xff]
    %v488 = vld [vmem:[%s25 + $0x60] sm:$0xff]
    %v489 = vld [vmem:[%s25 + $0x68] sm:$0xff]
    %v490 = vld [vmem:[%s25 + $0x70] sm:$0xff]
    %v491 = vld [vmem:[%s25 + $0x78] sm:$0xff]
    %v492 = vld [vmem:[%s25 + $0x80] sm:$0xff]
    %v493 = vld [vmem:[%s25 + $0x88] sm:$0xff]
    %v494 = vld [vmem:[%s25 + $0x90] sm:$0xff]
    %v495 = vld [vmem:[%s25 + $0x98] sm:$0xff]
    %v496 = vld [vmem:[%s25 + $0xa0] sm:$0xff]
    %v497 = vld [vmem:[%s25 + $0xa8] sm:$0xff]
    %v498 = vld [vmem:[%s25 + $0xb0] sm:$0xff]
    %v499 = vld [vmem:[%s25 + $0xb8] sm:$0xff]
    %v500 = vld [vmem:[%s25 + $0xc0] sm:$0xff]
    %v501 = vld [vmem:[%s25 + $0xc8] sm:$0xff]
    %v502 = vld [vmem:[%s25 + $0xd0] sm:$0xff]
    %v503 = vld [vmem:[%s25 + $0xd8] sm:$0xff]
    %v504 = vld [vmem:[%s25 + $0xe0] sm:$0xff]
    %v505 = vld [vmem:[%s25 + $0xe8] sm:$0xff]
    %v506 = vld [vmem:[%s25 + $0xf0] sm:$0xff]
    %v507 = vld [vmem:[%s25 + $0xf8] sm:$0xff]
    %v508 = vld [vmem:[%s25 + $0x100] sm:$0xff]
    %v509 = vld [vmem:[%s25 + $0x108] sm:$0xff]
    %v510 = vld [vmem:[%s25 + $0x110] sm:$0xff]
    %v511 = vld [vmem:[%s25 + $0x118] sm:$0xff]
    %v512 = vld [vmem:[%s25 + $0x120] sm:$0xff]
    %v513 = vld [vmem:[%s25 + $0x128] sm:$0xff]
    %v514 = vld [vmem:[%s25 + $0x130] sm:$0xff]
    %v515 = vld [vmem:[%s25 + $0x138] sm:$0xff]
    %v516 = vld [vmem:[%s25 + $0x140] sm:$0xff]
    %v517 = vld [vmem:[%s25 + $0x148] sm:$0xff]
    %v518 = vld [vmem:[%s25 + $0x150] sm:$0xff]
    %v519 = vld [vmem:[%s25 + $0x158] sm:$0xff]
    %v520 = vld [vmem:[%s25 + $0x160] sm:$0xff]
    %v521 = vld [vmem:[%s25 + $0x168] sm:$0xff]
    %v522 = vld [vmem:[%s25 + $0x170] sm:$0xff]
    %v523 = vld [vmem:[%s25 + $0x178] sm:$0xff]
    %v524 = vld [vmem:[%s25 + $0x180] sm:$0xff]
    %v525 = vld [vmem:[%s25 + $0x188] sm:$0xff]
    %v526 = vld [vmem:[%s25 + $0x190] sm:$0xff]
    %v527 = vld [vmem:[%s25 + $0x198] sm:$0xff]
    %v528 = vld [vmem:[%s25 + $0x1a0] sm:$0xff]
    %v529 = vld [vmem:[%s25 + $0x1a8] sm:$0xff]
    %v530 = vld [vmem:[%s25 + $0x1b0] sm:$0xff]
    %v531 = vld [vmem:[%s25 + $0x1b8] sm:$0xff]
    %v532 = vld [vmem:[%s25 + $0x1c0] sm:$0xff]
    %v533 = vld [vmem:[%s25 + $0x1c8] sm:$0xff]
    %v534 = vld [vmem:[%s25 + $0x1d0] sm:$0xff]
    %v535 = vld [vmem:[%s25 + $0x1d8] sm:$0xff]
    %v536 = vld [vmem:[%s25 + $0x1e0] sm:$0xff]
    %v537 = vld [vmem:[%s25 + $0x1e8] sm:$0xff]
    %v538 = vld [vmem:[%s25 + $0x1f0] sm:$0xff]
    %v539 = vld [vmem:[%s25 + $0x1f8] sm:$0xff]
    %v540 = vld [vmem:[%s25 + $0x200] sm:$0xff]
    %v541 = vld [vmem:[%s25 + $0x208] sm:$0xff]
    %v542 = vld [vmem:[%s25 + $0x210] sm:$0xff]
    %v543 = vld [vmem:[%s25 + $0x218] sm:$0xff]
    %v544 = vld [vmem:[%s25 + $0x220] sm:$0xff]
    %v545 = vld [vmem:[%s25 + $0x228] sm:$0xff]
    %v546 = vld [vmem:[%s25 + $0x230] sm:$0xff]
    %v547 = vld [vmem:[%s25 + $0x238] sm:$0xff]
    %v548 = vld [vmem:[%s25 + $0x240] sm:$0xff]
    %v549 = vld [vmem:[%s25 + $0x248] sm:$0xff]
    %v550 = vld [vmem:[%s25 + $0x250] sm:$0xff]
    %v551 = vld [vmem:[%s25 + $0x258] sm:$0xff]
    %v552 = vld [vmem:[%s25 + $0x260] sm:$0xff]
    %v553 = vld [vmem:[%s25 + $0x268] sm:$0xff]
    %v554 = vld [vmem:[%s25 + $0x270] sm:$0xff]
    %v555 = vld [vmem:[%s25 + $0x278] sm:$0xff]
    %v556 = vld [vmem:[%s25 + $0x280] sm:$0xff]
    %v557 = vld [vmem:[%s25 + $0x288] sm:$0xff]
    %v558 = vld [vmem:[%s25 + $0x290] sm:$0xff]
    %v559 = vld [vmem:[%s25 + $0x298] sm:$0xff]
    %v560 = vld [vmem:[%s25 + $0x2a0] sm:$0xff]
    %v561 = vld [vmem:[%s25 + $0x2a8] sm:$0xff]
    %v562 = vld [vmem:[%s25 + $0x2b0] sm:$0xff]
    %v563 = vld [vmem:[%s25 + $0x2b8] sm:$0xff]
    %v564 = vld [vmem:[%s25 + $0x2c0] sm:$0xff]
    %v565 = vld [vmem:[%s25 + $0x2c8] sm:$0xff]
    %v566 = vld [vmem:[%s25 + $0x2d0] sm:$0xff]
    %v567 = vld [vmem:[%s25 + $0x2d8] sm:$0xff]
    %v568 = vld [vmem:[%s25 + $0x2e0] sm:$0xff]
    %v569 = vld [vmem:[%s25 + $0x2e8] sm:$0xff]
    %v570 = vld [vmem:[%s25 + $0x2f0] sm:$0xff]
    %v571 = vld [vmem:[%s25 + $0x2f8] sm:$0xff]
    %v572 = vld [vmem:[%s27] sm:$0x7]
    %v574 = vlaneseq
    %v575 = vshrl.u32 %v574, 7
    %v576 = vsub.s32 0, %v575
    %v577 = vrot.slane %v572, %v576
    %v578 = vlaneseq
    %v579 = vshrl.u32 %v578, 7
    %v580 = vsub.s32 1, %v579
    %v581 = vrot.slane %v572, %v580
    %v582 = vlaneseq
    %v583 = vshrl.u32 %v582, 7
    %v584 = vsub.s32 2, %v583
    %v585 = vrot.slane %v572, %v584
    %589 = vmatprep.subr.mxu0 %v477
    %590 = vmatpush1.msra.mxu0 %v476
    %591 = vmatprep.subr.mxu0 %v480
    %592 = vmatpush1.msra.mxu0 %v479
    %593 = vmatprep.subr.mxu0 %v483
    %594 = vmatpush1.msra.mxu0 %v482
    %595 = vmatprep.subr.mxu0 %v486
    %596 = vmatpush1.msra.mxu0 %v485
    %597 = vmatprep.subr.mxu0 %v489
    %598 = vmatpush1.msra.mxu0 %v488
    %599 = vmatprep.subr.mxu0 %v492
    %600 = vmatpush1.msra.mxu0 %v491
    %601 = vmatprep.subr.mxu0 %v495
    %602 = vmatpush1.msra.mxu0 %v494
    %603 = vmatprep.subr.mxu0 %v498
    %604 = vmatpush1.msra.mxu0 %v497
    %605 = vmatprep.subr.mxu0 %v501
    %606 = vmatpush1.msra.mxu0 %v500
    %607 = vmatprep.subr.mxu0 %v504
    %608 = vmatpush1.msra.mxu0 %v503
    %609 = vmatprep.subr.mxu0 %v507
    %610 = vmatpush1.msra.mxu0 %v506
    %611 = vmatprep.subr.mxu0 %v510
    %612 = vmatpush1.msra.mxu0 %v509
    %613 = vmatprep.subr.mxu0 %v513
    %614 = vmatpush1.msra.mxu0 %v512
    %615 = vmatprep.subr.mxu0 %v516
    %616 = vmatpush1.msra.mxu0 %v515
    %617 = vmatprep.subr.mxu0 %v519
    %618 = vmatpush1.msra.mxu0 %v518
    %619 = vmatprep.subr.mxu0 %v522
    %620 = vmatpush1.msra.mxu0 %v521
    %621 = vmatprep.subr.mxu0 %v525
    %622 = vmatpush1.msra.mxu0 %v524
    %623 = vmatprep.subr.mxu0 %v528
    %624 = vmatpush1.msra.mxu0 %v527
    %625 = vmatprep.subr.mxu0 %v531
    %626 = vmatpush1.msra.mxu0 %v530
    %627 = vmatprep.subr.mxu0 %v534
    %628 = vmatpush1.msra.mxu0 %v533
    %629 = vmatprep.subr.mxu0 %v537
    %630 = vmatpush1.msra.mxu0 %v536
    %631 = vmatprep.subr.mxu0 %v540
    %632 = vmatpush1.msra.mxu0 %v539
    %633 = vmatprep.subr.mxu0 %v543
    %634 = vmatpush1.msra.mxu0 %v542
    %635 = vmatprep.subr.mxu0 %v546
    %636 = vmatpush1.msra.mxu0 %v545
    %637 = vmatprep.subr.mxu0 %v549
    %638 = vmatpush1.msra.mxu0 %v548
    %639 = vmatprep.subr.mxu0 %v552
    %640 = vmatpush1.msra.mxu0 %v551
    %641 = vmatprep.subr.mxu0 %v555
    %642 = vmatpush1.msra.mxu0 %v554
    %643 = vmatprep.subr.mxu0 %v558
    %644 = vmatpush1.msra.mxu0 %v557
    %645 = vmatprep.subr.mxu0 %v561
    %646 = vmatpush1.msra.mxu0 %v560
    %647 = vmatprep.subr.mxu0 %v564
    %648 = vmatpush1.msra.mxu0 %v563
    %649 = vmatprep.subr.mxu0 %v567
    %650 = vmatpush1.msra.mxu0 %v566
    %651 = vmatprep.subr.mxu0 %v570
    %652 = vmatpush1.msra.mxu0 %v569
    %653 = vmatprep.mubr.f32.mxu0 %v474
    %654 = vmatmul.mubr.f32.gmra.mrb[0].mxu0 %v472
    %v655 = vpop.f32.mrb[0].mxu0
    %v656 = vadd.f32 %v577, %v655
    %v657 = vpop.f32.mrb[0].mxu0
    %v658 = vadd.f32 %v581, %v657
    %659 = vdwg.mxu0
    %660 = vmatprep.subr.mxu0 0.0
    %661 = vmatpush1.msra.mxu0 %v478
    %662 = vmatprep.subr.mxu0 0.0
    %663 = vmatpush1.msra.mxu0 %v481
    %664 = vmatprep.subr.mxu0 0.0
    %665 = vmatpush1.msra.mxu0 %v484
    %666 = vmatprep.subr.mxu0 0.0
    %667 = vmatpush1.msra.mxu0 %v487
    %668 = vmatprep.subr.mxu0 0.0
    %669 = vmatpush1.msra.mxu0 %v490
    %670 = vmatprep.subr.mxu0 0.0
    %671 = vmatpush1.msra.mxu0 %v493
    %672 = vmatprep.subr.mxu0 0.0
    %673 = vmatpush1.msra.mxu0 %v496
    %674 = vmatprep.subr.mxu0 0.0
    %675 = vmatpush1.msra.mxu0 %v499
    %676 = vmatprep.subr.mxu0 0.0
    %677 = vmatpush1.msra.mxu0 %v502
    %678 = vmatprep.subr.mxu0 0.0
    %679 = vmatpush1.msra.mxu0 %v505
    %680 = vmatprep.subr.mxu0 0.0
    %681 = vmatpush1.msra.mxu0 %v508
    %682 = vmatprep.subr.mxu0 0.0
    %683 = vmatpush1.msra.mxu0 %v511
    %684 = vmatprep.subr.mxu0 0.0
    %685 = vmatpush1.msra.mxu0 %v514
    %686 = vmatprep.subr.mxu0 0.0
    %687 = vmatpush1.msra.mxu0 %v517
    %688 = vmatprep.subr.mxu0 0.0
    %689 = vmatpush1.msra.mxu0 %v520
    %690 = vmatprep.subr.mxu0 0.0
    %691 = vmatpush1.msra.mxu0 %v523
    %692 = vmatprep.subr.mxu0 0.0
    %693 = vmatpush1.msra.mxu0 %v526
    %694 = vmatprep.subr.mxu0 0.0
    %695 = vmatpush1.msra.mxu0 %v529
    %696 = vmatprep.subr.mxu0 0.0
    %697 = vmatpush1.msra.mxu0 %v532
    %698 = vmatprep.subr.mxu0 0.0
    %699 = vmatpush1.msra.mxu0 %v535
    %700 = vmatprep.subr.mxu0 0.0
    %701 = vmatpush1.msra.mxu0 %v538
    %702 = vmatprep.subr.mxu0 0.0
    %703 = vmatpush1.msra.mxu0 %v541
    %704 = vmatprep.subr.mxu0 0.0
    %705 = vmatpush1.msra.mxu0 %v544
    %706 = vmatprep.subr.mxu0 0.0
    %707 = vmatpush1.msra.mxu0 %v547
    %708 = vmatprep.subr.mxu0 0.0
    %709 = vmatpush1.msra.mxu0 %v550
    %710 = vmatprep.subr.mxu0 0.0
    %711 = vmatpush1.msra.mxu0 %v553
    %712 = vmatprep.subr.mxu0 0.0
    %713 = vmatpush1.msra.mxu0 %v556
    %714 = vmatprep.subr.mxu0 0.0
    %715 = vmatpush1.msra.mxu0 %v559
    %716 = vmatprep.subr.mxu0 0.0
    %717 = vmatpush1.msra.mxu0 %v562
    %718 = vmatprep.subr.mxu0 0.0
    %719 = vmatpush1.msra.mxu0 %v565
    %720 = vmatprep.subr.mxu0 0.0
    %721 = vmatpush1.msra.mxu0 %v568
    %722 = vmatprep.subr.mxu0 0.0
    %723 = vmatpush1.msra.mxu0 %v571
    %724 = vmatprep.mubr.f32.mxu0 %v474
    %725 = vmatmul.mubr.f32.gmra.mrb[0].mxu0 %v472
    %v726 = vpop.f32.mrb[0].mxu0
    %v727 = vadd.f32 %v585, %v726
    %v728 = vpop.f32.mrb[0].mxu0
    %729 = vdwg.mxu0
    %vm730 = vcmask 1041408
    %v731 = vsel %vm730, %v656, 0.0
    %v732 = vsel %vm730, %v658, 0.0
    %v733 = vadd.f32 %v731, %v732
    %vm734 = vcmask 648192
    %v735 = vsel %vm734, %v727, 0.0
    %v736 = vadd.f32 %v733, %v735
    %737 = vadd.xlane.f32.xlu0 %v736
    %v738 = vpop.xlane.xlu0 %737
    %v739 = vrcp.pop 336.0
    %v740 = vmul.f32 %v738, %v739
    %v741 = vsub.f32 %v656, %v740
    %v742 = vsub.f32 %v658, %v740
    %v743 = vsub.f32 %v727, %v740
    %v744 = vmul.f32 %v741, %v741
    %v745 = vmul.f32 %v742, %v742
    %v746 = vmul.f32 %v743, %v743
    %v747 = vsel %vm730, %v744, 0.0
    %v748 = vsel %vm730, %v745, 0.0
    %v749 = vadd.f32 %v747, %v748
    %v750 = vsel %vm734, %v746, 0.0
    %v751 = vadd.f32 %v749, %v750
    %752 = vadd.xlane.f32.xlu0 %v751
    %v753 = vpop.xlane.xlu0 %752
    %v754 = vmul.f32 %v753, %v739
    %v755 = vadd.f32 %v754, 1e-05
    %v756 = vrsqrt.pop %v755
    %v757 = vmul.f32 %v741, %v756
    %v758 = vmul.f32 %v742, %v756
    %v759 = vmul.f32 %v743, %v756
    %v760 = vld [vmem:[%s29] sm:$0x7]
    %v762 = vlaneseq
    %v763 = vshrl.u32 %v762, 7
    %v764 = vsub.s32 0, %v763
    %v765 = vrot.slane %v760, %v764
    %v766 = vlaneseq
    %v767 = vshrl.u32 %v766, 7
    %v768 = vsub.s32 1, %v767
    %v769 = vrot.slane %v760, %v768
    %v770 = vlaneseq
    %v771 = vshrl.u32 %v770, 7
    %v772 = vsub.s32 2, %v771
    %v773 = vrot.slane %v760, %v772
    %v777 = vmul.f32 %v757, %v765
    %v778 = vmul.f32 %v758, %v769
    %v779 = vmul.f32 %v759, %v773
    %v780 = vld [vmem:[%s31] sm:$0x7]
    %v782 = vlaneseq
    %v783 = vshrl.u32 %v782, 7
    %v784 = vsub.s32 0, %v783
    %v785 = vrot.slane %v780, %v784
    %v786 = vlaneseq
    %v787 = vshrl.u32 %v786, 7
    %v788 = vsub.s32 1, %v787
    %v789 = vrot.slane %v780, %v788
    %v790 = vlaneseq
    %v791 = vshrl.u32 %v790, 7
    %v792 = vsub.s32 2, %v791
    %v793 = vrot.slane %v780, %v792
    %v797 = vadd.f32 %v777, %v785
    %v798 = vadd.f32 %v778, %v789
    %v799 = vadd.f32 %v779, %v793
    %v800 = vmax.f32 %v797, 0.0
    %v801 = vmax.f32 %v798, 0.0
    %v802 = vmax.f32 %v799, 0.0
    %v803 = vld [vmem:[%s33] sm:$0xff]
    %v804 = vld [vmem:[%s33 + $0x8] sm:$0xff]
    %v805 = vld [vmem:[%s33 + $0x10] sm:$0xff]
    %v806 = vld [vmem:[%s33 + $0x18] sm:$0xff]
    %v807 = vld [vmem:[%s33 + $0x20] sm:$0xff]
    %v808 = vld [vmem:[%s33 + $0x28] sm:$0xff]
    %v809 = vld [vmem:[%s33 + $0x30] sm:$0xff]
    %v810 = vld [vmem:[%s33 + $0x38] sm:$0xff]
    %v811 = vld [vmem:[%s33 + $0x40] sm:$0xff]
    %v812 = vld [vmem:[%s33 + $0x48] sm:$0xff]
    %v813 = vld [vmem:[%s33 + $0x50] sm:$0xff]
    %v814 = vld [vmem:[%s33 + $0x58] sm:$0xff]
    %v815 = vld [vmem:[%s33 + $0x60] sm:$0xff]
    %v816 = vld [vmem:[%s33 + $0x68] sm:$0xff]
    %v817 = vld [vmem:[%s33 + $0x70] sm:$0xff]
    %v818 = vld [vmem:[%s33 + $0x78] sm:$0xff]
    %v819 = vld [vmem:[%s33 + $0x80] sm:$0xff]
    %v820 = vld [vmem:[%s33 + $0x88] sm:$0xff]
    %v821 = vld [vmem:[%s33 + $0x90] sm:$0xff]
    %v822 = vld [vmem:[%s33 + $0x98] sm:$0xff]
    %v823 = vld [vmem:[%s33 + $0xa0] sm:$0xff]
    %v824 = vld [vmem:[%s33 + $0xa8] sm:$0xff]
    %v825 = vld [vmem:[%s33 + $0xb0] sm:$0xff]
    %v826 = vld [vmem:[%s33 + $0xb8] sm:$0xff]
    %v827 = vld [vmem:[%s33 + $0xc0] sm:$0xff]
    %v828 = vld [vmem:[%s33 + $0xc8] sm:$0xff]
    %v829 = vld [vmem:[%s33 + $0xd0] sm:$0xff]
    %v830 = vld [vmem:[%s33 + $0xd8] sm:$0xff]
    %v831 = vld [vmem:[%s33 + $0xe0] sm:$0xff]
    %v832 = vld [vmem:[%s33 + $0xe8] sm:$0xff]
    %v833 = vld [vmem:[%s33 + $0xf0] sm:$0xff]
    %v834 = vld [vmem:[%s33 + $0xf8] sm:$0xff]
    %v835 = vld [vmem:[%s33 + $0x100] sm:$0xff]
    %v836 = vld [vmem:[%s33 + $0x108] sm:$0xff]
    %v837 = vld [vmem:[%s33 + $0x110] sm:$0xff]
    %v838 = vld [vmem:[%s33 + $0x118] sm:$0xff]
    %v839 = vld [vmem:[%s33 + $0x120] sm:$0xff]
    %v840 = vld [vmem:[%s33 + $0x128] sm:$0xff]
    %v841 = vld [vmem:[%s33 + $0x130] sm:$0xff]
    %v842 = vld [vmem:[%s33 + $0x138] sm:$0xff]
    %v843 = vld [vmem:[%s33 + $0x140] sm:$0xff]
    %v844 = vld [vmem:[%s33 + $0x148] sm:$0xff]
    %v845 = vld [vmem:[%s33 + $0x150] sm:$0xff]
    %v846 = vld [vmem:[%s33 + $0x158] sm:$0xff]
    %v847 = vld [vmem:[%s33 + $0x160] sm:$0xff]
    %v848 = vld [vmem:[%s33 + $0x168] sm:$0xff]
    %v849 = vld [vmem:[%s33 + $0x170] sm:$0xff]
    %v850 = vld [vmem:[%s33 + $0x178] sm:$0xff]
    %v851 = vld [vmem:[%s33 + $0x180] sm:$0xff]
    %v852 = vld [vmem:[%s33 + $0x188] sm:$0xff]
    %v853 = vld [vmem:[%s33 + $0x190] sm:$0xff]
    %v854 = vld [vmem:[%s33 + $0x198] sm:$0xff]
    %v855 = vld [vmem:[%s33 + $0x1a0] sm:$0xff]
    %v856 = vld [vmem:[%s33 + $0x1a8] sm:$0xff]
    %v857 = vld [vmem:[%s33 + $0x1b0] sm:$0xff]
    %v858 = vld [vmem:[%s33 + $0x1b8] sm:$0xff]
    %v859 = vld [vmem:[%s33 + $0x1c0] sm:$0xff]
    %v860 = vld [vmem:[%s33 + $0x1c8] sm:$0xff]
    %v861 = vld [vmem:[%s33 + $0x1d0] sm:$0xff]
    %v862 = vld [vmem:[%s33 + $0x1d8] sm:$0xff]
    %v863 = vld [vmem:[%s33 + $0x1e0] sm:$0xff]
    %v864 = vld [vmem:[%s33 + $0x1e8] sm:$0xff]
    %v865 = vld [vmem:[%s33 + $0x1f0] sm:$0xff]
    %v866 = vld [vmem:[%s33 + $0x1f8] sm:$0xff]
    %v867 = vld [vmem:[%s33 + $0x200] sm:$0xff]
    %v868 = vld [vmem:[%s33 + $0x208] sm:$0xff]
    %v869 = vld [vmem:[%s33 + $0x210] sm:$0xff]
    %v870 = vld [vmem:[%s33 + $0x218] sm:$0xff]
    %v871 = vld [vmem:[%s33 + $0x220] sm:$0xff]
    %v872 = vld [vmem:[%s33 + $0x228] sm:$0xff]
    %v873 = vld [vmem:[%s33 + $0x230] sm:$0xff]
    %v874 = vld [vmem:[%s33 + $0x238] sm:$0xff]
    %v875 = vld [vmem:[%s33 + $0x240] sm:$0xff]
    %v876 = vld [vmem:[%s33 + $0x248] sm:$0xff]
    %v877 = vld [vmem:[%s33 + $0x250] sm:$0xff]
    %v878 = vld [vmem:[%s33 + $0x258] sm:$0xff]
    %v879 = vld [vmem:[%s33 + $0x260] sm:$0xff]
    %v880 = vld [vmem:[%s33 + $0x268] sm:$0xff]
    %v881 = vld [vmem:[%s33 + $0x270] sm:$0xff]
    %v882 = vld [vmem:[%s33 + $0x278] sm:$0xff]
    %v883 = vld [vmem:[%s33 + $0x280] sm:$0xff]
    %v884 = vld [vmem:[%s33 + $0x288] sm:$0xff]
    %v885 = vld [vmem:[%s33 + $0x290] sm:$0xff]
    %v886 = vld [vmem:[%s33 + $0x298] sm:$0xff]
    %v887 = vld [vmem:[%s33 + $0x2a0] sm:$0xff]
    %v888 = vld [vmem:[%s33 + $0x2a8] sm:$0xff]
    %v889 = vld [vmem:[%s33 + $0x2b0] sm:$0xff]
    %v890 = vld [vmem:[%s33 + $0x2b8] sm:$0xff]
    %v891 = vld [vmem:[%s33 + $0x2c0] sm:$0xff]
    %v892 = vld [vmem:[%s33 + $0x2c8] sm:$0xff]
    %v893 = vld [vmem:[%s33 + $0x2d0] sm:$0xff]
    %v894 = vld [vmem:[%s33 + $0x2d8] sm:$0xff]
    %v895 = vld [vmem:[%s33 + $0x2e0] sm:$0xff]
    %v896 = vld [vmem:[%s33 + $0x2e8] sm:$0xff]
    %v897 = vld [vmem:[%s33 + $0x2f0] sm:$0xff]
    %v898 = vld [vmem:[%s33 + $0x2f8] sm:$0xff]
    %v899 = vld [vmem:[%s33 + $0x300] sm:$0xff]
    %v900 = vld [vmem:[%s33 + $0x308] sm:$0xff]
    %v901 = vld [vmem:[%s33 + $0x310] sm:$0xff]
    %v902 = vld [vmem:[%s33 + $0x318] sm:$0xff]
    %v903 = vld [vmem:[%s33 + $0x320] sm:$0xff]
    %v904 = vld [vmem:[%s33 + $0x328] sm:$0xff]
    %v905 = vld [vmem:[%s33 + $0x330] sm:$0xff]
    %v906 = vld [vmem:[%s33 + $0x338] sm:$0xff]
    %v907 = vld [vmem:[%s33 + $0x340] sm:$0xff]
    %v908 = vld [vmem:[%s33 + $0x348] sm:$0xff]
    %v909 = vld [vmem:[%s33 + $0x350] sm:$0xff]
    %v910 = vld [vmem:[%s33 + $0x358] sm:$0xff]
    %v911 = vld [vmem:[%s33 + $0x360] sm:$0xff]
    %v912 = vld [vmem:[%s33 + $0x368] sm:$0xff]
    %v913 = vld [vmem:[%s33 + $0x370] sm:$0xff]
    %v914 = vld [vmem:[%s33 + $0x378] sm:$0xff]
    %v915 = vld [vmem:[%s33 + $0x380] sm:$0xff]
    %v916 = vld [vmem:[%s33 + $0x388] sm:$0xff]
    %v917 = vld [vmem:[%s33 + $0x390] sm:$0xff]
    %v918 = vld [vmem:[%s33 + $0x398] sm:$0xff]
    %v919 = vld [vmem:[%s33 + $0x3a0] sm:$0xff]
    %v920 = vld [vmem:[%s33 + $0x3a8] sm:$0xff]
    %v921 = vld [vmem:[%s33 + $0x3b0] sm:$0xff]
    %v922 = vld [vmem:[%s33 + $0x3b8] sm:$0xff]
    %v923 = vld [vmem:[%s33 + $0x3c0] sm:$0xff]
    %v924 = vld [vmem:[%s33 + $0x3c8] sm:$0xff]
    %v925 = vld [vmem:[%s33 + $0x3d0] sm:$0xff]
    %v926 = vld [vmem:[%s33 + $0x3d8] sm:$0xff]
    %v927 = vld [vmem:[%s33 + $0x3e0] sm:$0xff]
    %v928 = vld [vmem:[%s33 + $0x3e8] sm:$0xff]
    %v929 = vld [vmem:[%s33 + $0x3f0] sm:$0xff]
    %v930 = vld [vmem:[%s33 + $0x3f8] sm:$0xff]
    %v931 = vld [vmem:[%s33 + $0x400] sm:$0xff]
    %v932 = vld [vmem:[%s33 + $0x408] sm:$0xff]
    %v933 = vld [vmem:[%s33 + $0x410] sm:$0xff]
    %v934 = vld [vmem:[%s33 + $0x418] sm:$0xff]
    %v935 = vld [vmem:[%s33 + $0x420] sm:$0xff]
    %v936 = vld [vmem:[%s33 + $0x428] sm:$0xff]
    %v937 = vld [vmem:[%s33 + $0x430] sm:$0xff]
    %v938 = vld [vmem:[%s33 + $0x438] sm:$0xff]
    %v939 = vld [vmem:[%s33 + $0x440] sm:$0xff]
    %v940 = vld [vmem:[%s33 + $0x448] sm:$0xff]
    %v941 = vld [vmem:[%s33 + $0x450] sm:$0xff]
    %v942 = vld [vmem:[%s33 + $0x458] sm:$0xff]
    %v943 = vld [vmem:[%s33 + $0x460] sm:$0xff]
    %v944 = vld [vmem:[%s33 + $0x468] sm:$0xff]
    %v945 = vld [vmem:[%s33 + $0x470] sm:$0xff]
    %v946 = vld [vmem:[%s33 + $0x478] sm:$0xff]
    %v947 = vld [vmem:[%s33 + $0x480] sm:$0xff]
    %v948 = vld [vmem:[%s33 + $0x488] sm:$0xff]
    %v949 = vld [vmem:[%s33 + $0x490] sm:$0xff]
    %v950 = vld [vmem:[%s33 + $0x498] sm:$0xff]
    %v951 = vld [vmem:[%s33 + $0x4a0] sm:$0xff]
    %v952 = vld [vmem:[%s33 + $0x4a8] sm:$0xff]
    %v953 = vld [vmem:[%s33 + $0x4b0] sm:$0xff]
    %v954 = vld [vmem:[%s33 + $0x4b8] sm:$0xff]
    %v955 = vld [vmem:[%s33 + $0x4c0] sm:$0xff]
    %v956 = vld [vmem:[%s33 + $0x4c8] sm:$0xff]
    %v957 = vld [vmem:[%s33 + $0x4d0] sm:$0xff]
    %v958 = vld [vmem:[%s33 + $0x4d8] sm:$0xff]
    %v959 = vld [vmem:[%s33 + $0x4e0] sm:$0xff]
    %v960 = vld [vmem:[%s33 + $0x4e8] sm:$0xff]
    %v961 = vld [vmem:[%s33 + $0x4f0] sm:$0xff]
    %v962 = vld [vmem:[%s33 + $0x4f8] sm:$0xff]
    %v963 = vld [vmem:[%s33 + $0x500] sm:$0xff]
    %v964 = vld [vmem:[%s33 + $0x508] sm:$0xff]
    %v965 = vld [vmem:[%s33 + $0x510] sm:$0xff]
    %v966 = vld [vmem:[%s33 + $0x518] sm:$0xff]
    %v967 = vld [vmem:[%s33 + $0x520] sm:$0xff]
    %v968 = vld [vmem:[%s33 + $0x528] sm:$0xff]
    %v969 = vld [vmem:[%s33 + $0x530] sm:$0xff]
    %v970 = vld [vmem:[%s33 + $0x538] sm:$0xff]
    %v971 = vld [vmem:[%s33 + $0x540] sm:$0xff]
    %v972 = vld [vmem:[%s33 + $0x548] sm:$0xff]
    %v973 = vld [vmem:[%s33 + $0x550] sm:$0xff]
    %v974 = vld [vmem:[%s33 + $0x558] sm:$0xff]
    %v975 = vld [vmem:[%s33 + $0x560] sm:$0xff]
    %v976 = vld [vmem:[%s33 + $0x568] sm:$0xff]
    %v977 = vld [vmem:[%s33 + $0x570] sm:$0xff]
    %v978 = vld [vmem:[%s33 + $0x578] sm:$0xff]
    %v979 = vld [vmem:[%s33 + $0x580] sm:$0xff]
    %v980 = vld [vmem:[%s33 + $0x588] sm:$0xff]
    %v981 = vld [vmem:[%s33 + $0x590] sm:$0xff]
    %v982 = vld [vmem:[%s33 + $0x598] sm:$0xff]
    %v983 = vld [vmem:[%s33 + $0x5a0] sm:$0xff]
    %v984 = vld [vmem:[%s33 + $0x5a8] sm:$0xff]
    %v985 = vld [vmem:[%s33 + $0x5b0] sm:$0xff]
    %v986 = vld [vmem:[%s33 + $0x5b8] sm:$0xff]
    %v987 = vld [vmem:[%s33 + $0x5c0] sm:$0xff]
    %v988 = vld [vmem:[%s33 + $0x5c8] sm:$0xff]
    %v989 = vld [vmem:[%s33 + $0x5d0] sm:$0xff]
    %v990 = vld [vmem:[%s33 + $0x5d8] sm:$0xff]
    %v991 = vld [vmem:[%s33 + $0x5e0] sm:$0xff]
    %v992 = vld [vmem:[%s33 + $0x5e8] sm:$0xff]
    %v993 = vld [vmem:[%s33 + $0x5f0] sm:$0xff]
    %v994 = vld [vmem:[%s33 + $0x5f8] sm:$0xff]
    %v995 = vld [vmem:[%s33 + $0x600] sm:$0xff]
    %v996 = vld [vmem:[%s33 + $0x608] sm:$0xff]
    %v997 = vld [vmem:[%s33 + $0x610] sm:$0xff]
    %v998 = vld [vmem:[%s33 + $0x618] sm:$0xff]
    %v999 = vld [vmem:[%s33 + $0x620] sm:$0xff]
    %v1000 = vld [vmem:[%s33 + $0x628] sm:$0xff]
    %v1001 = vld [vmem:[%s33 + $0x630] sm:$0xff]
    %v1002 = vld [vmem:[%s33 + $0x638] sm:$0xff]
    %v1003 = vld [vmem:[%s33 + $0x640] sm:$0xff]
    %v1004 = vld [vmem:[%s33 + $0x648] sm:$0xff]
    %v1005 = vld [vmem:[%s33 + $0x650] sm:$0xff]
    %v1006 = vld [vmem:[%s33 + $0x658] sm:$0xff]
    %v1007 = vld [vmem:[%s33 + $0x660] sm:$0xff]
    %v1008 = vld [vmem:[%s33 + $0x668] sm:$0xff]
    %v1009 = vld [vmem:[%s33 + $0x670] sm:$0xff]
    %v1010 = vld [vmem:[%s33 + $0x678] sm:$0xff]
    %v1011 = vld [vmem:[%s33 + $0x680] sm:$0xff]
    %v1012 = vld [vmem:[%s33 + $0x688] sm:$0xff]
    %v1013 = vld [vmem:[%s35] sm:$0x1f]
    %v1015 = vlaneseq
    %v1016 = vshrl.u32 %v1015, 7
    %v1017 = vsub.s32 0, %v1016
    %v1018 = vrot.slane %v1013, %v1017
    %v1019 = vlaneseq
    %v1020 = vshrl.u32 %v1019, 7
    %v1021 = vsub.s32 1, %v1020
    %v1022 = vrot.slane %v1013, %v1021
    %v1023 = vlaneseq
    %v1024 = vshrl.u32 %v1023, 7
    %v1025 = vsub.s32 2, %v1024
    %v1026 = vrot.slane %v1013, %v1025
    %v1027 = vlaneseq
    %v1028 = vshrl.u32 %v1027, 7
    %v1029 = vsub.s32 3, %v1028
    %v1030 = vrot.slane %v1013, %v1029
    %v1031 = vlaneseq
    %v1032 = vshrl.u32 %v1031, 7
    %v1033 = vsub.s32 4, %v1032
    %v1034 = vrot.slane %v1013, %v1033
    %vm1040 = vcmask 654336
    %v1042 = vsel %vm1040, %v802, 0
    %1044 = vmatprep.subr.mxu0 %v804
    %1045 = vmatpush1.msra.mxu0 %v803
    %1046 = vmatprep.subr.mxu0 %v809
    %1047 = vmatpush1.msra.mxu0 %v808
    %1048 = vmatprep.subr.mxu0 %v814
    %1049 = vmatpush1.msra.mxu0 %v813
    %1050 = vmatprep.subr.mxu0 %v819
    %1051 = vmatpush1.msra.mxu0 %v818
    %1052 = vmatprep.subr.mxu0 %v824
    %1053 = vmatpush1.msra.mxu0 %v823
    %1054 = vmatprep.subr.mxu0 %v829
    %1055 = vmatpush1.msra.mxu0 %v828
    %1056 = vmatprep.subr.mxu0 %v834
    %1057 = vmatpush1.msra.mxu0 %v833
    %1058 = vmatprep.subr.mxu0 %v839
    %1059 = vmatpush1.msra.mxu0 %v838
    %1060 = vmatprep.subr.mxu0 %v844
    %1061 = vmatpush1.msra.mxu0 %v843
    %1062 = vmatprep.subr.mxu0 %v849
    %1063 = vmatpush1.msra.mxu0 %v848
    %1064 = vmatprep.subr.mxu0 %v854
    %1065 = vmatpush1.msra.mxu0 %v853
    %1066 = vmatprep.subr.mxu0 %v859
    %1067 = vmatpush1.msra.mxu0 %v858
    %1068 = vmatprep.subr.mxu0 %v864
    %1069 = vmatpush1.msra.mxu0 %v863
    %1070 = vmatprep.subr.mxu0 %v869
    %1071 = vmatpush1.msra.mxu0 %v868
    %1072 = vmatprep.subr.mxu0 %v874
    %1073 = vmatpush1.msra.mxu0 %v873
    %1074 = vmatprep.subr.mxu0 %v879
    %1075 = vmatpush1.msra.mxu0 %v878
    %1076 = vmatprep.subr.mxu0 %v884
    %1077 = vmatpush1.msra.mxu0 %v883
    %1078 = vmatprep.subr.mxu0 %v889
    %1079 = vmatpush1.msra.mxu0 %v888
    %1080 = vmatprep.subr.mxu0 %v894
    %1081 = vmatpush1.msra.mxu0 %v893
    %1082 = vmatprep.subr.mxu0 %v899
    %1083 = vmatpush1.msra.mxu0 %v898
    %1084 = vmatprep.subr.mxu0 %v904
    %1085 = vmatpush1.msra.mxu0 %v903
    %1086 = vmatprep.subr.mxu0 %v909
    %1087 = vmatpush1.msra.mxu0 %v908
    %1088 = vmatprep.subr.mxu0 %v914
    %1089 = vmatpush1.msra.mxu0 %v913
    %1090 = vmatprep.subr.mxu0 %v919
    %1091 = vmatpush1.msra.mxu0 %v918
    %1092 = vmatprep.subr.mxu0 %v924
    %1093 = vmatpush1.msra.mxu0 %v923
    %1094 = vmatprep.subr.mxu0 %v929
    %1095 = vmatpush1.msra.mxu0 %v928
    %1096 = vmatprep.subr.mxu0 %v934
    %1097 = vmatpush1.msra.mxu0 %v933
    %1098 = vmatprep.subr.mxu0 %v939
    %1099 = vmatpush1.msra.mxu0 %v938
    %1100 = vmatprep.subr.mxu0 %v944
    %1101 = vmatpush1.msra.mxu0 %v943
    %1102 = vmatprep.subr.mxu0 %v949
    %1103 = vmatpush1.msra.mxu0 %v948
    %1104 = vmatprep.subr.mxu0 %v954
    %1105 = vmatpush1.msra.mxu0 %v953
    %1106 = vmatprep.subr.mxu0 %v959
    %1107 = vmatpush1.msra.mxu0 %v958
    %1108 = vmatprep.mubr.f32.mxu0 %v801
    %1109 = vmatmul.mubr.f32.gmra.mrb[0].mxu0 %v800
    %v1110 = vpop.f32.mrb[0].mxu0
    %v1111 = vadd.f32 %v1018, %v1110
    %v1112 = vpop.f32.mrb[0].mxu0
    %v1113 = vadd.f32 %v1022, %v1112
    %1114 = vdwg.mxu0
    %1115 = vmatprep.subr.mxu0 %v964
    %1116 = vmatpush1.msra.mxu0 %v963
    %1117 = vmatprep.subr.mxu0 %v969
    %1118 = vmatpush1.msra.mxu0 %v968
    %1119 = vmatprep.subr.mxu0 %v974
    %1120 = vmatpush1.msra.mxu0 %v973
    %1121 = vmatprep.subr.mxu0 %v979
    %1122 = vmatpush1.msra.mxu0 %v978
    %1123 = vmatprep.subr.mxu0 %v984
    %1124 = vmatpush1.msra.mxu0 %v983
    %1125 = vmatprep.subr.mxu0 %v989
    %1126 = vmatpush1.msra.mxu0 %v988
    %1127 = vmatprep.subr.mxu0 %v994
    %1128 = vmatpush1.msra.mxu0 %v993
    %1129 = vmatprep.subr.mxu0 %v999
    %1130 = vmatpush1.msra.mxu0 %v998
    %1131 = vmatprep.subr.mxu0 %v1004
    %1132 = vmatpush1.msra.mxu0 %v1003
    %1133 = vmatprep.subr.mxu0 %v1009
    %1134 = vmatpush1.msra.mxu0 %v1008
    %1135 = vmatprep.subr.mxu0 0.0
    %1136 = vmatpush1.msra.mxu0 0.0
    %1137 = vmatprep.subr.mxu0 0.0
    %1138 = vmatpush1.msra.mxu0 0.0
    %1139 = vmatprep.subr.mxu0 0.0
    %1140 = vmatpush1.msra.mxu0 0.0
    %1141 = vmatprep.subr.mxu0 0.0
    %1142 = vmatpush1.msra.mxu0 0.0
    %1143 = vmatprep.subr.mxu0 0.0
    %1144 = vmatpush1.msra.mxu0 0.0
    %1145 = vmatprep.subr.mxu0 0.0
    %1146 = vmatpush1.msra.mxu0 0.0
    %1147 = vmatprep.subr.mxu0 0.0
    %1148 = vmatpush1.msra.mxu0 0.0
    %1149 = vmatprep.subr.mxu0 0.0
    %1150 = vmatpush1.msra.mxu0 0.0
    %1151 = vmatprep.subr.mxu0 0.0
    %1152 = vmatpush1.msra.mxu0 0.0
    %1153 = vmatprep.subr.mxu0 0.0
    %1154 = vmatpush1.msra.mxu0 0.0
    %1155 = vmatprep.subr.mxu0 0.0
    %1156 = vmatpush1.msra.mxu0 0.0
    %1157 = vmatprep.subr.mxu0 0.0
    %1158 = vmatpush1.msra.mxu0 0.0
    %1159 = vmatprep.subr.mxu0 0.0
    %1160 = vmatpush1.msra.mxu0 0.0
    %1161 = vmatprep.subr.mxu0 0.0
    %1162 = vmatpush1.msra.mxu0 0.0
    %1163 = vmatprep.subr.mxu0 0.0
    %1164 = vmatpush1.msra.mxu0 0.0
    %1165 = vmatprep.subr.mxu0 0.0
    %1166 = vmatpush1.msra.mxu0 0.0
    %1167 = vmatprep.subr.mxu0 0.0
    %1168 = vmatpush1.msra.mxu0 0.0
    %1169 = vmatprep.subr.mxu0 0.0
    %1170 = vmatpush1.msra.mxu0 0.0
    %1171 = vmatprep.subr.mxu0 0.0
    %1172 = vmatpush1.msra.mxu0 0.0
    %1173 = vmatprep.subr.mxu0 0.0
    %1174 = vmatpush1.msra.mxu0 0.0
    %1175 = vmatprep.subr.mxu0 0.0
    %1176 = vmatpush1.msra.mxu0 0.0
    %1177 = vmatprep.subr.mxu0 0.0
    %1178 = vmatpush1.msra.mxu0 0.0
    %1179 = vmatprep.mubr.f32.mxu0 0.0
    %1180 = vmatmul.mubr.f32.gmra.mrb[0].mxu0 %v1042
    %v1181 = vpop.f32.mrb[0].mxu0
    %v1182 = vadd.f32 %v1111, %v1181
    %v1183 = vpop.f32.mrb[0].mxu0
    %v1184 = vadd.f32 %v1113, %v1183
    %1185 = vdwg.mxu0
    %1186 = vmatprep.subr.mxu0 %v806
    %1187 = vmatpush1.msra.mxu0 %v805
    %1188 = vmatprep.subr.mxu0 %v811
    %1189 = vmatpush1.msra.mxu0 %v810
    %1190 = vmatprep.subr.mxu0 %v816
    %1191 = vmatpush1.msra.mxu0 %v815
    %1192 = vmatprep.subr.mxu0 %v821
    %1193 = vmatpush1.msra.mxu0 %v820
    %1194 = vmatprep.subr.mxu0 %v826
    %1195 = vmatpush1.msra.mxu0 %v825
    %1196 = vmatprep.subr.mxu0 %v831
    %1197 = vmatpush1.msra.mxu0 %v830
    %1198 = vmatprep.subr.mxu0 %v836
    %1199 = vmatpush1.msra.mxu0 %v835
    %1200 = vmatprep.subr.mxu0 %v841
    %1201 = vmatpush1.msra.mxu0 %v840
    %1202 = vmatprep.subr.mxu0 %v846
    %1203 = vmatpush1.msra.mxu0 %v845
    %1204 = vmatprep.subr.mxu0 %v851
    %1205 = vmatpush1.msra.mxu0 %v850
    %1206 = vmatprep.subr.mxu0 %v856
    %1207 = vmatpush1.msra.mxu0 %v855
    %1208 = vmatprep.subr.mxu0 %v861
    %1209 = vmatpush1.msra.mxu0 %v860
    %1210 = vmatprep.subr.mxu0 %v866
    %1211 = vmatpush1.msra.mxu0 %v865
    %1212 = vmatprep.subr.mxu0 %v871
    %1213 = vmatpush1.msra.mxu0 %v870
    %1214 = vmatprep.subr.mxu0 %v876
    %1215 = vmatpush1.msra.mxu0 %v875
    %1216 = vmatprep.subr.mxu0 %v881
    %1217 = vmatpush1.msra.mxu0 %v880
    %1218 = vmatprep.subr.mxu0 %v886
    %1219 = vmatpush1.msra.mxu0 %v885
    %1220 = vmatprep.subr.mxu0 %v891
    %1221 = vmatpush1.msra.mxu0 %v890
    %1222 = vmatprep.subr.mxu0 %v896
    %1223 = vmatpush1.msra.mxu0 %v895
    %1224 = vmatprep.subr.mxu0 %v901
    %1225 = vmatpush1.msra.mxu0 %v900
    %1226 = vmatprep.subr.mxu0 %v906
    %1227 = vmatpush1.msra.mxu0 %v905
    %1228 = vmatprep.subr.mxu0 %v911
    %1229 = vmatpush1.msra.mxu0 %v910
    %1230 = vmatprep.subr.mxu0 %v916
    %1231 = vmatpush1.msra.mxu0 %v915
    %1232 = vmatprep.subr.mxu0 %v921
    %1233 = vmatpush1.msra.mxu0 %v920
    %1234 = vmatprep.subr.mxu0 %v926
    %1235 = vmatpush1.msra.mxu0 %v925
    %1236 = vmatprep.subr.mxu0 %v931
    %1237 = vmatpush1.msra.mxu0 %v930
    %1238 = vmatprep.subr.mxu0 %v936
    %1239 = vmatpush1.msra.mxu0 %v935
    %1240 = vmatprep.subr.mxu0 %v941
    %1241 = vmatpush1.msra.mxu0 %v940
    %1242 = vmatprep.subr.mxu0 %v946
    %1243 = vmatpush1.msra.mxu0 %v945
    %1244 = vmatprep.subr.mxu0 %v951
    %1245 = vmatpush1.msra.mxu0 %v950
    %1246 = vmatprep.subr.mxu0 %v956
    %1247 = vmatpush1.msra.mxu0 %v955
    %1248 = vmatprep.subr.mxu0 %v961
    %1249 = vmatpush1.msra.mxu0 %v960
    %1250 = vmatprep.mubr.f32.mxu0 %v801
    %1251 = vmatmul.mubr.f32.gmra.mrb[0].mxu0 %v800
    %v1252 = vpop.f32.mrb[0].mxu0
    %v1253 = vadd.f32 %v1026, %v1252
    %v1254 = vpop.f32.mrb[0].mxu0
    %v1255 = vadd.f32 %v1030, %v1254
    %1256 = vdwg.mxu0
    %1257 = vmatprep.subr.mxu0 %v966
    %1258 = vmatpush1.msra.mxu0 %v965
    %1259 = vmatprep.subr.mxu0 %v971
    %1260 = vmatpush1.msra.mxu0 %v970
    %1261 = vmatprep.subr.mxu0 %v976
    %1262 = vmatpush1.msra.mxu0 %v975
    %1263 = vmatprep.subr.mxu0 %v981
    %1264 = vmatpush1.msra.mxu0 %v980
    %1265 = vmatprep.subr.mxu0 %v986
    %1266 = vmatpush1.msra.mxu0 %v985
    %1267 = vmatprep.subr.mxu0 %v991
    %1268 = vmatpush1.msra.mxu0 %v990
    %1269 = vmatprep.subr.mxu0 %v996
    %1270 = vmatpush1.msra.mxu0 %v995
    %1271 = vmatprep.subr.mxu0 %v1001
    %1272 = vmatpush1.msra.mxu0 %v1000
    %1273 = vmatprep.subr.mxu0 %v1006
    %1274 = vmatpush1.msra.mxu0 %v1005
    %1275 = vmatprep.subr.mxu0 %v1011
    %1276 = vmatpush1.msra.mxu0 %v1010
    %1277 = vmatprep.subr.mxu0 0.0
    %1278 = vmatpush1.msra.mxu0 0.0
    %1279 = vmatprep.subr.mxu0 0.0
    %1280 = vmatpush1.msra.mxu0 0.0
    %1281 = vmatprep.subr.mxu0 0.0
    %1282 = vmatpush1.msra.mxu0 0.0
    %1283 = vmatprep.subr.mxu0 0.0
    %1284 = vmatpush1.msra.mxu0 0.0
    %1285 = vmatprep.subr.mxu0 0.0
    %1286 = vmatpush1.msra.mxu0 0.0
    %1287 = vmatprep.subr.mxu0 0.0
    %1288 = vmatpush1.msra.mxu0 0.0
    %1289 = vmatprep.subr.mxu0 0.0
    %1290 = vmatpush1.msra.mxu0 0.0
    %1291 = vmatprep.subr.mxu0 0.0
    %1292 = vmatpush1.msra.mxu0 0.0
    %1293 = vmatprep.subr.mxu0 0.0
    %1294 = vmatpush1.msra.mxu0 0.0
    %1295 = vmatprep.subr.mxu0 0.0
    %1296 = vmatpush1.msra.mxu0 0.0
    %1297 = vmatprep.subr.mxu0 0.0
    %1298 = vmatpush1.msra.mxu0 0.0
    %1299 = vmatprep.subr.mxu0 0.0
    %1300 = vmatpush1.msra.mxu0 0.0
    %1301 = vmatprep.subr.mxu0 0.0
    %1302 = vmatpush1.msra.mxu0 0.0
    %1303 = vmatprep.subr.mxu0 0.0
    %1304 = vmatpush1.msra.mxu0 0.0
    %1305 = vmatprep.subr.mxu0 0.0
    %1306 = vmatpush1.msra.mxu0 0.0
    %1307 = vmatprep.subr.mxu0 0.0
    %1308 = vmatpush1.msra.mxu0 0.0
    %1309 = vmatprep.subr.mxu0 0.0
    %1310 = vmatpush1.msra.mxu0 0.0
    %1311 = vmatprep.subr.mxu0 0.0
    %1312 = vmatpush1.msra.mxu0 0.0
    %1313 = vmatprep.subr.mxu0 0.0
    %1314 = vmatpush1.msra.mxu0 0.0
    %1315 = vmatprep.subr.mxu0 0.0
    %1316 = vmatpush1.msra.mxu0 0.0
    %1317 = vmatprep.subr.mxu0 0.0
    %1318 = vmatpush1.msra.mxu0 0.0
    %1319 = vmatprep.subr.mxu0 0.0
    %1320 = vmatpush1.msra.mxu0 0.0
    %1321 = vmatprep.mubr.f32.mxu0 0.0
    %1322 = vmatmul.mubr.f32.gmra.mrb[0].mxu0 %v1042
    %v1323 = vpop.f32.mrb[0].mxu0
    %v1324 = vadd.f32 %v1253, %v1323
    %v1325 = vpop.f32.mrb[0].mxu0
    %v1326 = vadd.f32 %v1255, %v1325
    %1327 = vdwg.mxu0
    %1328 = vmatprep.subr.mxu0 0.0
    %1329 = vmatpush1.msra.mxu0 %v807
    %1330 = vmatprep.subr.mxu0 0.0
    %1331 = vmatpush1.msra.mxu0 %v812
    %1332 = vmatprep.subr.mxu0 0.0
    %1333 = vmatpush1.msra.mxu0 %v817
    %1334 = vmatprep.subr.mxu0 0.0
    %1335 = vmatpush1.msra.mxu0 %v822
    %1336 = vmatprep.subr.mxu0 0.0
    %1337 = vmatpush1.msra.mxu0 %v827
    %1338 = vmatprep.subr.mxu0 0.0
    %1339 = vmatpush1.msra.mxu0 %v832
    %1340 = vmatprep.subr.mxu0 0.0
    %1341 = vmatpush1.msra.mxu0 %v837
    %1342 = vmatprep.subr.mxu0 0.0
    %1343 = vmatpush1.msra.mxu0 %v842
    %1344 = vmatprep.subr.mxu0 0.0
    %1345 = vmatpush1.msra.mxu0 %v847
    %1346 = vmatprep.subr.mxu0 0.0
    %1347 = vmatpush1.msra.mxu0 %v852
    %1348 = vmatprep.subr.mxu0 0.0
    %1349 = vmatpush1.msra.mxu0 %v857
    %1350 = vmatprep.subr.mxu0 0.0
    %1351 = vmatpush1.msra.mxu0 %v862
    %1352 = vmatprep.subr.mxu0 0.0
    %1353 = vmatpush1.msra.mxu0 %v867
    %1354 = vmatprep.subr.mxu0 0.0
    %1355 = vmatpush1.msra.mxu0 %v872
    %1356 = vmatprep.subr.mxu0 0.0
    %1357 = vmatpush1.msra.mxu0 %v877
    %1358 = vmatprep.subr.mxu0 0.0
    %1359 = vmatpush1.msra.mxu0 %v882
    %1360 = vmatprep.subr.mxu0 0.0
    %1361 = vmatpush1.msra.mxu0 %v887
    %1362 = vmatprep.subr.mxu0 0.0
    %1363 = vmatpush1.msra.mxu0 %v892
    %1364 = vmatprep.subr.mxu0 0.0
    %1365 = vmatpush1.msra.mxu0 %v897
    %1366 = vmatprep.subr.mxu0 0.0
    %1367 = vmatpush1.msra.mxu0 %v902
    %1368 = vmatprep.subr.mxu0 0.0
    %1369 = vmatpush1.msra.mxu0 %v907
    %1370 = vmatprep.subr.mxu0 0.0
    %1371 = vmatpush1.msra.mxu0 %v912
    %1372 = vmatprep.subr.mxu0 0.0
    %1373 = vmatpush1.msra.mxu0 %v917
    %1374 = vmatprep.subr.mxu0 0.0
    %1375 = vmatpush1.msra.mxu0 %v922
    %1376 = vmatprep.subr.mxu0 0.0
    %1377 = vmatpush1.msra.mxu0 %v927
    %1378 = vmatprep.subr.mxu0 0.0
    %1379 = vmatpush1.msra.mxu0 %v932
    %1380 = vmatprep.subr.mxu0 0.0
    %1381 = vmatpush1.msra.mxu0 %v937
    %1382 = vmatprep.subr.mxu0 0.0
    %1383 = vmatpush1.msra.mxu0 %v942
    %1384 = vmatprep.subr.mxu0 0.0
    %1385 = vmatpush1.msra.mxu0 %v947
    %1386 = vmatprep.subr.mxu0 0.0
    %1387 = vmatpush1.msra.mxu0 %v952
    %1388 = vmatprep.subr.mxu0 0.0
    %1389 = vmatpush1.msra.mxu0 %v957
    %1390 = vmatprep.subr.mxu0 0.0
    %1391 = vmatpush1.msra.mxu0 %v962
    %1392 = vmatprep.mubr.f32.mxu0 %v801
    %1393 = vmatmul.mubr.f32.gmra.mrb[0].mxu0 %v800
    %v1394 = vpop.f32.mrb[0].mxu0
    %v1395 = vadd.f32 %v1034, %v1394
    %v1396 = vpop.f32.mrb[0].mxu0
    %1397 = vdwg.mxu0
    %1398 = vmatprep.subr.mxu0 0.0
    %1399 = vmatpush1.msra.mxu0 %v967
    %1400 = vmatprep.subr.mxu0 0.0
    %1401 = vmatpush1.msra.mxu0 %v972
    %1402 = vmatprep.subr.mxu0 0.0
    %1403 = vmatpush1.msra.mxu0 %v977
    %1404 = vmatprep.subr.mxu0 0.0
    %1405 = vmatpush1.msra.mxu0 %v982
    %1406 = vmatprep.subr.mxu0 0.0
    %1407 = vmatpush1.msra.mxu0 %v987
    %1408 = vmatprep.subr.mxu0 0.0
    %1409 = vmatpush1.msra.mxu0 %v992
    %1410 = vmatprep.subr.mxu0 0.0
    %1411 = vmatpush1.msra.mxu0 %v997
    %1412 = vmatprep.subr.mxu0 0.0
    %1413 = vmatpush1.msra.mxu0 %v1002
    %1414 = vmatprep.subr.mxu0 0.0
    %1415 = vmatpush1.msra.mxu0 %v1007
    %1416 = vmatprep.subr.mxu0 0.0
    %1417 = vmatpush1.msra.mxu0 %v1012
    %1418 = vmatprep.subr.mxu0 0.0
    %1419 = vmatpush1.msra.mxu0 0.0
    %1420 = vmatprep.subr.mxu0 0.0
    %1421 = vmatpush1.msra.mxu0 0.0
    %1422 = vmatprep.subr.mxu0 0.0
    %1423 = vmatpush1.msra.mxu0 0.0
    %1424 = vmatprep.subr.mxu0 0.0
    %1425 = vmatpush1.msra.mxu0 0.0
    %1426 = vmatprep.subr.mxu0 0.0
    %1427 = vmatpush1.msra.mxu0 0.0
    %1428 = vmatprep.subr.mxu0 0.0
    %1429 = vmatpush1.msra.mxu0 0.0
    %1430 = vmatprep.subr.mxu0 0.0
    %1431 = vmatpush1.msra.mxu0 0.0
    %1432 = vmatprep.subr.mxu0 0.0
    %1433 = vmatpush1.msra.mxu0 0.0
    %1434 = vmatprep.subr.mxu0 0.0
    %1435 = vmatpush1.msra.mxu0 0.0
    %1436 = vmatprep.subr.mxu0 0.0
    %1437 = vmatpush1.msra.mxu0 0.0
    %1438 = vmatprep.subr.mxu0 0.0
    %1439 = vmatpush1.msra.mxu0 0.0
    %1440 = vmatprep.subr.mxu0 0.0
    %1441 = vmatpush1.msra.mxu0 0.0
    %1442 = vmatprep.subr.mxu0 0.0
    %1443 = vmatpush1.msra.mxu0 0.0
    %1444 = vmatprep.subr.mxu0 0.0
    %1445 = vmatpush1.msra.mxu0 0.0
    %1446 = vmatprep.subr.mxu0 0.0
    %1447 = vmatpush1.msra.mxu0 0.0
    %1448 = vmatprep.subr.mxu0 0.0
    %1449 = vmatpush1.msra.mxu0 0.0
    %1450 = vmatprep.subr.mxu0 0.0
    %1451 = vmatpush1.msra.mxu0 0.0
    %1452 = vmatprep.subr.mxu0 0.0
    %1453 = vmatpush1.msra.mxu0 0.0
    %1454 = vmatprep.subr.mxu0 0.0
    %1455 = vmatpush1.msra.mxu0 0.0
    %1456 = vmatprep.subr.mxu0 0.0
    %1457 = vmatpush1.msra.mxu0 0.0
    %1458 = vmatprep.subr.mxu0 0.0
    %1459 = vmatpush1.msra.mxu0 0.0
    %1460 = vmatprep.subr.mxu0 0.0
    %1461 = vmatpush1.msra.mxu0 0.0
    %1462 = vmatprep.mubr.f32.mxu0 0.0
    %1463 = vmatmul.mubr.f32.gmra.mrb[0].mxu0 %v1042
    %v1464 = vpop.f32.mrb[0].mxu0
    %v1465 = vadd.f32 %v1395, %v1464
    %v1466 = vpop.f32.mrb[0].mxu0
    %1467 = vdwg.mxu0
    %v1468 = vsel %vm730, %v1182, 0.0
    %v1469 = vsel %vm730, %v1184, 0.0
    %v1470 = vadd.f32 %v1468, %v1469
    %v1471 = vsel %vm730, %v1324, 0.0
    %v1472 = vadd.f32 %v1470, %v1471
    %v1473 = vsel %vm730, %v1326, 0.0
    %v1474 = vadd.f32 %v1472, %v1473
    %v1475 = vsel %vm730, %v1465, 0.0
    %v1476 = vadd.f32 %v1474, %v1475
    %1477 = vadd.xlane.f32.xlu0 %v1476
    %v1478 = vpop.xlane.xlu0 %1477
    %v1479 = vrcp.pop 640.0
    %v1480 = vmul.f32 %v1478, %v1479
    %v1481 = vsub.f32 %v1182, %v1480
    %v1482 = vsub.f32 %v1184, %v1480
    %v1483 = vsub.f32 %v1324, %v1480
    %v1484 = vsub.f32 %v1326, %v1480
    %v1485 = vsub.f32 %v1465, %v1480
    %v1486 = vmul.f32 %v1481, %v1481
    %v1487 = vmul.f32 %v1482, %v1482
    %v1488 = vmul.f32 %v1483, %v1483
    %v1489 = vmul.f32 %v1484, %v1484
    %v1490 = vmul.f32 %v1485, %v1485
    %v1491 = vsel %vm730, %v1486, 0.0
    %v1492 = vsel %vm730, %v1487, 0.0
    %v1493 = vadd.f32 %v1491, %v1492
    %v1494 = vsel %vm730, %v1488, 0.0
    %v1495 = vadd.f32 %v1493, %v1494
    %v1496 = vsel %vm730, %v1489, 0.0
    %v1497 = vadd.f32 %v1495, %v1496
    %v1498 = vsel %vm730, %v1490, 0.0
    %v1499 = vadd.f32 %v1497, %v1498
    %1500 = vadd.xlane.f32.xlu0 %v1499
    %v1501 = vpop.xlane.xlu0 %1500
    %v1502 = vmul.f32 %v1501, %v1479
    %v1503 = vadd.f32 %v1502, 1e-05
    %v1504 = vrsqrt.pop %v1503
    %v1505 = vmul.f32 %v1481, %v1504
    %v1506 = vmul.f32 %v1482, %v1504
    %v1507 = vmul.f32 %v1483, %v1504
    %v1508 = vmul.f32 %v1484, %v1504
    %v1509 = vmul.f32 %v1485, %v1504
    %v1510 = vld [vmem:[%s37] sm:$0x1f]
    %v1512 = vlaneseq
    %v1513 = vshrl.u32 %v1512, 7
    %v1514 = vsub.s32 0, %v1513
    %v1515 = vrot.slane %v1510, %v1514
    %v1516 = vlaneseq
    %v1517 = vshrl.u32 %v1516, 7
    %v1518 = vsub.s32 1, %v1517
    %v1519 = vrot.slane %v1510, %v1518
    %v1520 = vlaneseq
    %v1521 = vshrl.u32 %v1520, 7
    %v1522 = vsub.s32 2, %v1521
    %v1523 = vrot.slane %v1510, %v1522
    %v1524 = vlaneseq
    %v1525 = vshrl.u32 %v1524, 7
    %v1526 = vsub.s32 3, %v1525
    %v1527 = vrot.slane %v1510, %v1526
    %v1528 = vlaneseq
    %v1529 = vshrl.u32 %v1528, 7
    %v1530 = vsub.s32 4, %v1529
    %v1531 = vrot.slane %v1510, %v1530
    %v1537 = vmul.f32 %v1505, %v1515
    %v1538 = vmul.f32 %v1506, %v1519
    %v1539 = vmul.f32 %v1507, %v1523
    %v1540 = vmul.f32 %v1508, %v1527
    %v1541 = vmul.f32 %v1509, %v1531
    %v1542 = vld [vmem:[%s39] sm:$0x1f]
    %v1544 = vlaneseq
    %v1545 = vshrl.u32 %v1544, 7
    %v1546 = vsub.s32 0, %v1545
    %v1547 = vrot.slane %v1542, %v1546
    %v1548 = vlaneseq
    %v1549 = vshrl.u32 %v1548, 7
    %v1550 = vsub.s32 1, %v1549
    %v1551 = vrot.slane %v1542, %v1550
    %v1552 = vlaneseq
    %v1553 = vshrl.u32 %v1552, 7
    %v1554 = vsub.s32 2, %v1553
    %v1555 = vrot.slane %v1542, %v1554
    %v1556 = vlaneseq
    %v1557 = vshrl.u32 %v1556, 7
    %v1558 = vsub.s32 3, %v1557
    %v1559 = vrot.slane %v1542, %v1558
    %v1560 = vlaneseq
    %v1561 = vshrl.u32 %v1560, 7
    %v1562 = vsub.s32 4, %v1561
    %v1563 = vrot.slane %v1542, %v1562
    %v1569 = vadd.f32 %v1537, %v1547
    %v1570 = vadd.f32 %v1538, %v1551
    %v1571 = vadd.f32 %v1539, %v1555
    %v1572 = vadd.f32 %v1540, %v1559
    %v1573 = vadd.f32 %v1541, %v1563
    %v1574 = vmax.f32 %v1569, 0.0
    %v1575 = vmax.f32 %v1570, 0.0
    %v1576 = vmax.f32 %v1571, 0.0
    %v1577 = vmax.f32 %v1572, 0.0
    %v1578 = vmax.f32 %v1573, 0.0
    %v1579 = vld [vmem:[%s41] sm:$0xff]
    %v1580 = vld [vmem:[%s41 + $0x8] sm:$0xff]
    %v1581 = vld [vmem:[%s41 + $0x10] sm:$0xff]
    %v1582 = vld [vmem:[%s41 + $0x18] sm:$0xff]
    %v1583 = vld [vmem:[%s41 + $0x20] sm:$0xff]
    %v1584 = vld [vmem:[%s41 + $0x28] sm:$0xff]
    %v1585 = vld [vmem:[%s41 + $0x30] sm:$0xff]
    %v1586 = vld [vmem:[%s41 + $0x38] sm:$0xff]
    %v1587 = vld [vmem:[%s41 + $0x40] sm:$0xff]
    %v1588 = vld [vmem:[%s41 + $0x48] sm:$0xff]
    %v1589 = vld [vmem:[%s41 + $0x50] sm:$0xff]
    %v1590 = vld [vmem:[%s41 + $0x58] sm:$0xff]
    %v1591 = vld [vmem:[%s41 + $0x60] sm:$0xff]
    %v1592 = vld [vmem:[%s41 + $0x68] sm:$0xff]
    %v1593 = vld [vmem:[%s41 + $0x70] sm:$0xff]
    %v1594 = vld [vmem:[%s41 + $0x78] sm:$0xff]
    %v1595 = vld [vmem:[%s41 + $0x80] sm:$0xff]
    %v1596 = vld [vmem:[%s41 + $0x88] sm:$0xff]
    %v1597 = vld [vmem:[%s41 + $0x90] sm:$0xff]
    %v1598 = vld [vmem:[%s41 + $0x98] sm:$0xff]
    %v1599 = vld [vmem:[%s41 + $0xa0] sm:$0xff]
    %v1600 = vld [vmem:[%s41 + $0xa8] sm:$0xff]
    %v1601 = vld [vmem:[%s41 + $0xb0] sm:$0xff]
    %v1602 = vld [vmem:[%s41 + $0xb8] sm:$0xff]
    %v1603 = vld [vmem:[%s41 + $0xc0] sm:$0xff]
    %v1604 = vld [vmem:[%s41 + $0xc8] sm:$0xff]
    %v1605 = vld [vmem:[%s41 + $0xd0] sm:$0xff]
    %v1606 = vld [vmem:[%s41 + $0xd8] sm:$0xff]
    %v1607 = vld [vmem:[%s41 + $0xe0] sm:$0xff]
    %v1608 = vld [vmem:[%s41 + $0xe8] sm:$0xff]
    %v1609 = vld [vmem:[%s41 + $0xf0] sm:$0xff]
    %v1610 = vld [vmem:[%s41 + $0xf8] sm:$0xff]
    %v1611 = vld [vmem:[%s41 + $0x100] sm:$0xff]
    %v1612 = vld [vmem:[%s41 + $0x108] sm:$0xff]
    %v1613 = vld [vmem:[%s41 + $0x110] sm:$0xff]
    %v1614 = vld [vmem:[%s41 + $0x118] sm:$0xff]
    %v1615 = vld [vmem:[%s41 + $0x120] sm:$0xff]
    %v1616 = vld [vmem:[%s41 + $0x128] sm:$0xff]
    %v1617 = vld [vmem:[%s41 + $0x130] sm:$0xff]
    %v1618 = vld [vmem:[%s41 + $0x138] sm:$0xff]
    %v1619 = vld [vmem:[%s41 + $0x140] sm:$0xff]
    %v1620 = vld [vmem:[%s41 + $0x148] sm:$0xff]
    %v1621 = vld [vmem:[%s41 + $0x150] sm:$0xff]
    %v1622 = vld [vmem:[%s41 + $0x158] sm:$0xff]
    %v1623 = vld [vmem:[%s41 + $0x160] sm:$0xff]
    %v1624 = vld [vmem:[%s41 + $0x168] sm:$0xff]
    %v1625 = vld [vmem:[%s41 + $0x170] sm:$0xff]
    %v1626 = vld [vmem:[%s41 + $0x178] sm:$0xff]
    %v1627 = vld [vmem:[%s41 + $0x180] sm:$0xff]
    %v1628 = vld [vmem:[%s41 + $0x188] sm:$0xff]
    %v1629 = vld [vmem:[%s41 + $0x190] sm:$0xff]
    %v1630 = vld [vmem:[%s41 + $0x198] sm:$0xff]
    %v1631 = vld [vmem:[%s41 + $0x1a0] sm:$0xff]
    %v1632 = vld [vmem:[%s41 + $0x1a8] sm:$0xff]
    %v1633 = vld [vmem:[%s41 + $0x1b0] sm:$0xff]
    %v1634 = vld [vmem:[%s41 + $0x1b8] sm:$0xff]
    %v1635 = vld [vmem:[%s41 + $0x1c0] sm:$0xff]
    %v1636 = vld [vmem:[%s41 + $0x1c8] sm:$0xff]
    %v1637 = vld [vmem:[%s41 + $0x1d0] sm:$0xff]
    %v1638 = vld [vmem:[%s41 + $0x1d8] sm:$0xff]
    %v1639 = vld [vmem:[%s41 + $0x1e0] sm:$0xff]
    %v1640 = vld [vmem:[%s41 + $0x1e8] sm:$0xff]
    %v1641 = vld [vmem:[%s41 + $0x1f0] sm:$0xff]
    %v1642 = vld [vmem:[%s41 + $0x1f8] sm:$0xff]
    %v1643 = vld [vmem:[%s41 + $0x200] sm:$0xff]
    %v1644 = vld [vmem:[%s41 + $0x208] sm:$0xff]
    %v1645 = vld [vmem:[%s41 + $0x210] sm:$0xff]
    %v1646 = vld [vmem:[%s41 + $0x218] sm:$0xff]
    %v1647 = vld [vmem:[%s41 + $0x220] sm:$0xff]
    %v1648 = vld [vmem:[%s41 + $0x228] sm:$0xff]
    %v1649 = vld [vmem:[%s41 + $0x230] sm:$0xff]
    %v1650 = vld [vmem:[%s41 + $0x238] sm:$0xff]
    %v1651 = vld [vmem:[%s41 + $0x240] sm:$0xff]
    %v1652 = vld [vmem:[%s41 + $0x248] sm:$0xff]
    %v1653 = vld [vmem:[%s41 + $0x250] sm:$0xff]
    %v1654 = vld [vmem:[%s41 + $0x258] sm:$0xff]
    %v1655 = vld [vmem:[%s41 + $0x260] sm:$0xff]
    %v1656 = vld [vmem:[%s41 + $0x268] sm:$0xff]
    %v1657 = vld [vmem:[%s41 + $0x270] sm:$0xff]
    %v1658 = vld [vmem:[%s41 + $0x278] sm:$0xff]
    %v1659 = vld [vmem:[%s41 + $0x280] sm:$0xff]
    %v1660 = vld [vmem:[%s41 + $0x288] sm:$0xff]
    %v1661 = vld [vmem:[%s41 + $0x290] sm:$0xff]
    %v1662 = vld [vmem:[%s41 + $0x298] sm:$0xff]
    %v1663 = vld [vmem:[%s41 + $0x2a0] sm:$0xff]
    %v1664 = vld [vmem:[%s41 + $0x2a8] sm:$0xff]
    %v1665 = vld [vmem:[%s41 + $0x2b0] sm:$0xff]
    %v1666 = vld [vmem:[%s41 + $0x2b8] sm:$0xff]
    %v1667 = vld [vmem:[%s41 + $0x2c0] sm:$0xff]
    %v1668 = vld [vmem:[%s41 + $0x2c8] sm:$0xff]
    %v1669 = vld [vmem:[%s41 + $0x2d0] sm:$0xff]
    %v1670 = vld [vmem:[%s41 + $0x2d8] sm:$0xff]
    %v1671 = vld [vmem:[%s41 + $0x2e0] sm:$0xff]
    %v1672 = vld [vmem:[%s41 + $0x2e8] sm:$0xff]
    %v1673 = vld [vmem:[%s41 + $0x2f0] sm:$0xff]
    %v1674 = vld [vmem:[%s41 + $0x2f8] sm:$0xff]
    %v1675 = vld [vmem:[%s41 + $0x300] sm:$0xff]
    %v1676 = vld [vmem:[%s41 + $0x308] sm:$0xff]
    %v1677 = vld [vmem:[%s41 + $0x310] sm:$0xff]
    %v1678 = vld [vmem:[%s41 + $0x318] sm:$0xff]
    %v1679 = vld [vmem:[%s41 + $0x320] sm:$0xff]
    %v1680 = vld [vmem:[%s41 + $0x328] sm:$0xff]
    %v1681 = vld [vmem:[%s41 + $0x330] sm:$0xff]
    %v1682 = vld [vmem:[%s41 + $0x338] sm:$0xff]
    %v1683 = vld [vmem:[%s41 + $0x340] sm:$0xff]
    %v1684 = vld [vmem:[%s41 + $0x348] sm:$0xff]
    %v1685 = vld [vmem:[%s41 + $0x350] sm:$0xff]
    %v1686 = vld [vmem:[%s41 + $0x358] sm:$0xff]
    %v1687 = vld [vmem:[%s41 + $0x360] sm:$0xff]
    %v1688 = vld [vmem:[%s41 + $0x368] sm:$0xff]
    %v1689 = vld [vmem:[%s41 + $0x370] sm:$0xff]
    %v1690 = vld [vmem:[%s41 + $0x378] sm:$0xff]
    %v1691 = vld [vmem:[%s41 + $0x380] sm:$0xff]
    %v1692 = vld [vmem:[%s41 + $0x388] sm:$0xff]
    %v1693 = vld [vmem:[%s41 + $0x390] sm:$0xff]
    %v1694 = vld [vmem:[%s41 + $0x398] sm:$0xff]
    %v1695 = vld [vmem:[%s41 + $0x3a0] sm:$0xff]
    %v1696 = vld [vmem:[%s41 + $0x3a8] sm:$0xff]
    %v1697 = vld [vmem:[%s41 + $0x3b0] sm:$0xff]
    %v1698 = vld [vmem:[%s41 + $0x3b8] sm:$0xff]
    %v1699 = vld [vmem:[%s41 + $0x3c0] sm:$0xff]
    %v1700 = vld [vmem:[%s41 + $0x3c8] sm:$0xff]
    %v1701 = vld [vmem:[%s41 + $0x3d0] sm:$0xff]
    %v1702 = vld [vmem:[%s41 + $0x3d8] sm:$0xff]
    %v1703 = vld [vmem:[%s41 + $0x3e0] sm:$0xff]
    %v1704 = vld [vmem:[%s41 + $0x3e8] sm:$0xff]
    %v1705 = vld [vmem:[%s41 + $0x3f0] sm:$0xff]
    %v1706 = vld [vmem:[%s41 + $0x3f8] sm:$0xff]
    %v1707 = vld [vmem:[%s41 + $0x400] sm:$0xff]
    %v1708 = vld [vmem:[%s41 + $0x408] sm:$0xff]
    %v1709 = vld [vmem:[%s41 + $0x410] sm:$0xff]
    %v1710 = vld [vmem:[%s41 + $0x418] sm:$0xff]
    %v1711 = vld [vmem:[%s41 + $0x420] sm:$0xff]
    %v1712 = vld [vmem:[%s41 + $0x428] sm:$0xff]
    %v1713 = vld [vmem:[%s41 + $0x430] sm:$0xff]
    %v1714 = vld [vmem:[%s41 + $0x438] sm:$0xff]
    %v1715 = vld [vmem:[%s41 + $0x440] sm:$0xff]
    %v1716 = vld [vmem:[%s41 + $0x448] sm:$0xff]
    %v1717 = vld [vmem:[%s41 + $0x450] sm:$0xff]
    %v1718 = vld [vmem:[%s41 + $0x458] sm:$0xff]
    %v1719 = vld [vmem:[%s41 + $0x460] sm:$0xff]
    %v1720 = vld [vmem:[%s41 + $0x468] sm:$0xff]
    %v1721 = vld [vmem:[%s41 + $0x470] sm:$0xff]
    %v1722 = vld [vmem:[%s41 + $0x478] sm:$0xff]
    %v1723 = vld [vmem:[%s41 + $0x480] sm:$0xff]
    %v1724 = vld [vmem:[%s41 + $0x488] sm:$0xff]
    %v1725 = vld [vmem:[%s41 + $0x490] sm:$0xff]
    %v1726 = vld [vmem:[%s41 + $0x498] sm:$0xff]
    %v1727 = vld [vmem:[%s41 + $0x4a0] sm:$0xff]
    %v1728 = vld [vmem:[%s41 + $0x4a8] sm:$0xff]
    %v1729 = vld [vmem:[%s41 + $0x4b0] sm:$0xff]
    %v1730 = vld [vmem:[%s41 + $0x4b8] sm:$0xff]
    %v1731 = vld [vmem:[%s41 + $0x4c0] sm:$0xff]
    %v1732 = vld [vmem:[%s41 + $0x4c8] sm:$0xff]
    %v1733 = vld [vmem:[%s41 + $0x4d0] sm:$0xff]
    %v1734 = vld [vmem:[%s41 + $0x4d8] sm:$0xff]
    %v1735 = vld [vmem:[%s41 + $0x4e0] sm:$0xff]
    %v1736 = vld [vmem:[%s41 + $0x4e8] sm:$0xff]
    %v1737 = vld [vmem:[%s41 + $0x4f0] sm:$0xff]
    %v1738 = vld [vmem:[%s41 + $0x4f8] sm:$0xff]
    %v1739 = vld [vmem:[%s41 + $0x500] sm:$0xff]
    %v1740 = vld [vmem:[%s41 + $0x508] sm:$0xff]
    %v1741 = vld [vmem:[%s41 + $0x510] sm:$0xff]
    %v1742 = vld [vmem:[%s41 + $0x518] sm:$0xff]
    %v1743 = vld [vmem:[%s41 + $0x520] sm:$0xff]
    %v1744 = vld [vmem:[%s41 + $0x528] sm:$0xff]
    %v1745 = vld [vmem:[%s41 + $0x530] sm:$0xff]
    %v1746 = vld [vmem:[%s41 + $0x538] sm:$0xff]
    %v1747 = vld [vmem:[%s41 + $0x540] sm:$0xff]
    %v1748 = vld [vmem:[%s41 + $0x548] sm:$0xff]
    %v1749 = vld [vmem:[%s41 + $0x550] sm:$0xff]
    %v1750 = vld [vmem:[%s41 + $0x558] sm:$0xff]
    %v1751 = vld [vmem:[%s41 + $0x560] sm:$0xff]
    %v1752 = vld [vmem:[%s41 + $0x568] sm:$0xff]
    %v1753 = vld [vmem:[%s41 + $0x570] sm:$0xff]
    %v1754 = vld [vmem:[%s41 + $0x578] sm:$0xff]
    %v1755 = vld [vmem:[%s41 + $0x580] sm:$0xff]
    %v1756 = vld [vmem:[%s41 + $0x588] sm:$0xff]
    %v1757 = vld [vmem:[%s41 + $0x590] sm:$0xff]
    %v1758 = vld [vmem:[%s41 + $0x598] sm:$0xff]
    %v1759 = vld [vmem:[%s41 + $0x5a0] sm:$0xff]
    %v1760 = vld [vmem:[%s41 + $0x5a8] sm:$0xff]
    %v1761 = vld [vmem:[%s41 + $0x5b0] sm:$0xff]
    %v1762 = vld [vmem:[%s41 + $0x5b8] sm:$0xff]
    %v1763 = vld [vmem:[%s41 + $0x5c0] sm:$0xff]
    %v1764 = vld [vmem:[%s41 + $0x5c8] sm:$0xff]
    %v1765 = vld [vmem:[%s41 + $0x5d0] sm:$0xff]
    %v1766 = vld [vmem:[%s41 + $0x5d8] sm:$0xff]
    %v1767 = vld [vmem:[%s41 + $0x5e0] sm:$0xff]
    %v1768 = vld [vmem:[%s41 + $0x5e8] sm:$0xff]
    %v1769 = vld [vmem:[%s41 + $0x5f0] sm:$0xff]
    %v1770 = vld [vmem:[%s41 + $0x5f8] sm:$0xff]
    %v1771 = vld [vmem:[%s41 + $0x600] sm:$0xff]
    %v1772 = vld [vmem:[%s41 + $0x608] sm:$0xff]
    %v1773 = vld [vmem:[%s41 + $0x610] sm:$0xff]
    %v1774 = vld [vmem:[%s41 + $0x618] sm:$0xff]
    %v1775 = vld [vmem:[%s41 + $0x620] sm:$0xff]
    %v1776 = vld [vmem:[%s41 + $0x628] sm:$0xff]
    %v1777 = vld [vmem:[%s41 + $0x630] sm:$0xff]
    %v1778 = vld [vmem:[%s41 + $0x638] sm:$0xff]
    %v1779 = vld [vmem:[%s41 + $0x640] sm:$0xff]
    %v1780 = vld [vmem:[%s41 + $0x648] sm:$0xff]
    %v1781 = vld [vmem:[%s41 + $0x650] sm:$0xff]
    %v1782 = vld [vmem:[%s41 + $0x658] sm:$0xff]
    %v1783 = vld [vmem:[%s41 + $0x660] sm:$0xff]
    %v1784 = vld [vmem:[%s41 + $0x668] sm:$0xff]
    %v1785 = vld [vmem:[%s41 + $0x670] sm:$0xff]
    %v1786 = vld [vmem:[%s41 + $0x678] sm:$0xff]
    %v1787 = vld [vmem:[%s41 + $0x680] sm:$0xff]
    %v1788 = vld [vmem:[%s41 + $0x688] sm:$0xff]
    %v1789 = vld [vmem:[%s41 + $0x690] sm:$0xff]
    %v1790 = vld [vmem:[%s41 + $0x698] sm:$0xff]
    %v1791 = vld [vmem:[%s41 + $0x6a0] sm:$0xff]
    %v1792 = vld [vmem:[%s41 + $0x6a8] sm:$0xff]
    %v1793 = vld [vmem:[%s41 + $0x6b0] sm:$0xff]
    %v1794 = vld [vmem:[%s41 + $0x6b8] sm:$0xff]
    %v1795 = vld [vmem:[%s41 + $0x6c0] sm:$0xff]
    %v1796 = vld [vmem:[%s41 + $0x6c8] sm:$0xff]
    %v1797 = vld [vmem:[%s41 + $0x6d0] sm:$0xff]
    %v1798 = vld [vmem:[%s41 + $0x6d8] sm:$0xff]
    %v1799 = vld [vmem:[%s41 + $0x6e0] sm:$0xff]
    %v1800 = vld [vmem:[%s41 + $0x6e8] sm:$0xff]
    %v1801 = vld [vmem:[%s41 + $0x6f0] sm:$0xff]
    %v1802 = vld [vmem:[%s41 + $0x6f8] sm:$0xff]
    %v1803 = vld [vmem:[%s41 + $0x700] sm:$0xff]
    %v1804 = vld [vmem:[%s41 + $0x708] sm:$0xff]
    %v1805 = vld [vmem:[%s41 + $0x710] sm:$0xff]
    %v1806 = vld [vmem:[%s41 + $0x718] sm:$0xff]
    %v1807 = vld [vmem:[%s41 + $0x720] sm:$0xff]
    %v1808 = vld [vmem:[%s41 + $0x728] sm:$0xff]
    %v1809 = vld [vmem:[%s41 + $0x730] sm:$0xff]
    %v1810 = vld [vmem:[%s41 + $0x738] sm:$0xff]
    %v1811 = vld [vmem:[%s41 + $0x740] sm:$0xff]
    %v1812 = vld [vmem:[%s41 + $0x748] sm:$0xff]
    %v1813 = vld [vmem:[%s41 + $0x750] sm:$0xff]
    %v1814 = vld [vmem:[%s41 + $0x758] sm:$0xff]
    %v1815 = vld [vmem:[%s41 + $0x760] sm:$0xff]
    %v1816 = vld [vmem:[%s41 + $0x768] sm:$0xff]
    %v1817 = vld [vmem:[%s41 + $0x770] sm:$0xff]
    %v1818 = vld [vmem:[%s41 + $0x778] sm:$0xff]
    %v1819 = vld [vmem:[%s41 + $0x780] sm:$0xff]
    %v1820 = vld [vmem:[%s41 + $0x788] sm:$0xff]
    %v1821 = vld [vmem:[%s41 + $0x790] sm:$0xff]
    %v1822 = vld [vmem:[%s41 + $0x798] sm:$0xff]
    %v1823 = vld [vmem:[%s41 + $0x7a0] sm:$0xff]
    %v1824 = vld [vmem:[%s41 + $0x7a8] sm:$0xff]
    %v1825 = vld [vmem:[%s41 + $0x7b0] sm:$0xff]
    %v1826 = vld [vmem:[%s41 + $0x7b8] sm:$0xff]
    %v1827 = vld [vmem:[%s41 + $0x7c0] sm:$0xff]
    %v1828 = vld [vmem:[%s41 + $0x7c8] sm:$0xff]
    %v1829 = vld [vmem:[%s41 + $0x7d0] sm:$0xff]
    %v1830 = vld [vmem:[%s41 + $0x7d8] sm:$0xff]
    %v1831 = vld [vmem:[%s41 + $0x7e0] sm:$0xff]
    %v1832 = vld [vmem:[%s41 + $0x7e8] sm:$0xff]
    %v1833 = vld [vmem:[%s41 + $0x7f0] sm:$0xff]
    %v1834 = vld [vmem:[%s41 + $0x7f8] sm:$0xff]
    %v1835 = vld [vmem:[%s41 + $0x800] sm:$0xff]
    %v1836 = vld [vmem:[%s41 + $0x808] sm:$0xff]
    %v1837 = vld [vmem:[%s41 + $0x810] sm:$0xff]
    %v1838 = vld [vmem:[%s41 + $0x818] sm:$0xff]
    %v1839 = vld [vmem:[%s41 + $0x820] sm:$0xff]
    %v1840 = vld [vmem:[%s41 + $0x828] sm:$0xff]
    %v1841 = vld [vmem:[%s41 + $0x830] sm:$0xff]
    %v1842 = vld [vmem:[%s41 + $0x838] sm:$0xff]
    %v1843 = vld [vmem:[%s41 + $0x840] sm:$0xff]
    %v1844 = vld [vmem:[%s41 + $0x848] sm:$0xff]
    %v1845 = vld [vmem:[%s41 + $0x850] sm:$0xff]
    %v1846 = vld [vmem:[%s41 + $0x858] sm:$0xff]
    %v1847 = vld [vmem:[%s41 + $0x860] sm:$0xff]
    %v1848 = vld [vmem:[%s41 + $0x868] sm:$0xff]
    %v1849 = vld [vmem:[%s41 + $0x870] sm:$0xff]
    %v1850 = vld [vmem:[%s41 + $0x878] sm:$0xff]
    %v1851 = vld [vmem:[%s41 + $0x880] sm:$0xff]
    %v1852 = vld [vmem:[%s41 + $0x888] sm:$0xff]
    %v1853 = vld [vmem:[%s41 + $0x890] sm:$0xff]
    %v1854 = vld [vmem:[%s41 + $0x898] sm:$0xff]
    %v1855 = vld [vmem:[%s41 + $0x8a0] sm:$0xff]
    %v1856 = vld [vmem:[%s41 + $0x8a8] sm:$0xff]
    %v1857 = vld [vmem:[%s41 + $0x8b0] sm:$0xff]
    %v1858 = vld [vmem:[%s41 + $0x8b8] sm:$0xff]
    %v1859 = vld [vmem:[%s41 + $0x8c0] sm:$0xff]
    %v1860 = vld [vmem:[%s41 + $0x8c8] sm:$0xff]
    %v1861 = vld [vmem:[%s41 + $0x8d0] sm:$0xff]
    %v1862 = vld [vmem:[%s41 + $0x8d8] sm:$0xff]
    %v1863 = vld [vmem:[%s41 + $0x8e0] sm:$0xff]
    %v1864 = vld [vmem:[%s41 + $0x8e8] sm:$0xff]
    %v1865 = vld [vmem:[%s41 + $0x8f0] sm:$0xff]
    %v1866 = vld [vmem:[%s41 + $0x8f8] sm:$0xff]
    %v1867 = vld [vmem:[%s41 + $0x900] sm:$0xff]
    %v1868 = vld [vmem:[%s41 + $0x908] sm:$0xff]
    %v1869 = vld [vmem:[%s41 + $0x910] sm:$0xff]
    %v1870 = vld [vmem:[%s41 + $0x918] sm:$0xff]
    %v1871 = vld [vmem:[%s41 + $0x920] sm:$0xff]
    %v1872 = vld [vmem:[%s41 + $0x928] sm:$0xff]
    %v1873 = vld [vmem:[%s41 + $0x930] sm:$0xff]
    %v1874 = vld [vmem:[%s41 + $0x938] sm:$0xff]
    %v1875 = vld [vmem:[%s41 + $0x940] sm:$0xff]
    %v1876 = vld [vmem:[%s41 + $0x948] sm:$0xff]
    %v1877 = vld [vmem:[%s41 + $0x950] sm:$0xff]
    %v1878 = vld [vmem:[%s41 + $0x958] sm:$0xff]
    %v1879 = vld [vmem:[%s41 + $0x960] sm:$0xff]
    %v1880 = vld [vmem:[%s41 + $0x968] sm:$0xff]
    %v1881 = vld [vmem:[%s41 + $0x970] sm:$0xff]
    %v1882 = vld [vmem:[%s41 + $0x978] sm:$0xff]
    %v1883 = vld [vmem:[%s41 + $0x980] sm:$0xff]
    %v1884 = vld [vmem:[%s41 + $0x988] sm:$0xff]
    %v1885 = vld [vmem:[%s41 + $0x990] sm:$0xff]
    %v1886 = vld [vmem:[%s41 + $0x998] sm:$0xff]
    %v1887 = vld [vmem:[%s41 + $0x9a0] sm:$0xff]
    %v1888 = vld [vmem:[%s41 + $0x9a8] sm:$0xff]
    %v1889 = vld [vmem:[%s41 + $0x9b0] sm:$0xff]
    %v1890 = vld [vmem:[%s41 + $0x9b8] sm:$0xff]
    %v1891 = vld [vmem:[%s41 + $0x9c0] sm:$0xff]
    %v1892 = vld [vmem:[%s41 + $0x9c8] sm:$0xff]
    %v1893 = vld [vmem:[%s41 + $0x9d0] sm:$0xff]
    %v1894 = vld [vmem:[%s41 + $0x9d8] sm:$0xff]
    %v1895 = vld [vmem:[%s41 + $0x9e0] sm:$0xff]
    %v1896 = vld [vmem:[%s41 + $0x9e8] sm:$0xff]
    %v1897 = vld [vmem:[%s41 + $0x9f0] sm:$0xff]
    %v1898 = vld [vmem:[%s41 + $0x9f8] sm:$0xff]
    %v1899 = vld [vmem:[%s41 + $0xa00] sm:$0xff]
    %v1900 = vld [vmem:[%s41 + $0xa08] sm:$0xff]
    %v1901 = vld [vmem:[%s41 + $0xa10] sm:$0xff]
    %v1902 = vld [vmem:[%s41 + $0xa18] sm:$0xff]
    %v1903 = vld [vmem:[%s41 + $0xa20] sm:$0xff]
    %v1904 = vld [vmem:[%s41 + $0xa28] sm:$0xff]
    %v1905 = vld [vmem:[%s41 + $0xa30] sm:$0xff]
    %v1906 = vld [vmem:[%s41 + $0xa38] sm:$0xff]
    %v1907 = vld [vmem:[%s41 + $0xa40] sm:$0xff]
    %v1908 = vld [vmem:[%s41 + $0xa48] sm:$0xff]
    %v1909 = vld [vmem:[%s41 + $0xa50] sm:$0xff]
    %v1910 = vld [vmem:[%s41 + $0xa58] sm:$0xff]
    %v1911 = vld [vmem:[%s41 + $0xa60] sm:$0xff]
    %v1912 = vld [vmem:[%s41 + $0xa68] sm:$0xff]
    %v1913 = vld [vmem:[%s41 + $0xa70] sm:$0xff]
    %v1914 = vld [vmem:[%s41 + $0xa78] sm:$0xff]
    %v1915 = vld [vmem:[%s41 + $0xa80] sm:$0xff]
    %v1916 = vld [vmem:[%s41 + $0xa88] sm:$0xff]
    %v1917 = vld [vmem:[%s41 + $0xa90] sm:$0xff]
    %v1918 = vld [vmem:[%s41 + $0xa98] sm:$0xff]
    %v1919 = vld [vmem:[%s41 + $0xaa0] sm:$0xff]
    %v1920 = vld [vmem:[%s41 + $0xaa8] sm:$0xff]
    %v1921 = vld [vmem:[%s41 + $0xab0] sm:$0xff]
    %v1922 = vld [vmem:[%s41 + $0xab8] sm:$0xff]
    %v1923 = vld [vmem:[%s41 + $0xac0] sm:$0xff]
    %v1924 = vld [vmem:[%s41 + $0xac8] sm:$0xff]
    %v1925 = vld [vmem:[%s41 + $0xad0] sm:$0xff]
    %v1926 = vld [vmem:[%s41 + $0xad8] sm:$0xff]
    %v1927 = vld [vmem:[%s41 + $0xae0] sm:$0xff]
    %v1928 = vld [vmem:[%s41 + $0xae8] sm:$0xff]
    %v1929 = vld [vmem:[%s41 + $0xaf0] sm:$0xff]
    %v1930 = vld [vmem:[%s41 + $0xaf8] sm:$0xff]
    %v1931 = vld [vmem:[%s41 + $0xb00] sm:$0xff]
    %v1932 = vld [vmem:[%s41 + $0xb08] sm:$0xff]
    %v1933 = vld [vmem:[%s41 + $0xb10] sm:$0xff]
    %v1934 = vld [vmem:[%s41 + $0xb18] sm:$0xff]
    %v1935 = vld [vmem:[%s41 + $0xb20] sm:$0xff]
    %v1936 = vld [vmem:[%s41 + $0xb28] sm:$0xff]
    %v1937 = vld [vmem:[%s41 + $0xb30] sm:$0xff]
    %v1938 = vld [vmem:[%s41 + $0xb38] sm:$0xff]
    %v1939 = vld [vmem:[%s41 + $0xb40] sm:$0xff]
    %v1940 = vld [vmem:[%s41 + $0xb48] sm:$0xff]
    %v1941 = vld [vmem:[%s41 + $0xb50] sm:$0xff]
    %v1942 = vld [vmem:[%s41 + $0xb58] sm:$0xff]
    %v1943 = vld [vmem:[%s41 + $0xb60] sm:$0xff]
    %v1944 = vld [vmem:[%s41 + $0xb68] sm:$0xff]
    %v1945 = vld [vmem:[%s41 + $0xb70] sm:$0xff]
    %v1946 = vld [vmem:[%s41 + $0xb78] sm:$0xff]
    %v1947 = vld [vmem:[%s41 + $0xb80] sm:$0xff]
    %v1948 = vld [vmem:[%s41 + $0xb88] sm:$0xff]
    %v1949 = vld [vmem:[%s41 + $0xb90] sm:$0xff]
    %v1950 = vld [vmem:[%s41 + $0xb98] sm:$0xff]
    %v1951 = vld [vmem:[%s41 + $0xba0] sm:$0xff]
    %v1952 = vld [vmem:[%s41 + $0xba8] sm:$0xff]
    %v1953 = vld [vmem:[%s41 + $0xbb0] sm:$0xff]
    %v1954 = vld [vmem:[%s41 + $0xbb8] sm:$0xff]
    %v1955 = vld [vmem:[%s41 + $0xbc0] sm:$0xff]
    %v1956 = vld [vmem:[%s41 + $0xbc8] sm:$0xff]
    %v1957 = vld [vmem:[%s41 + $0xbd0] sm:$0xff]
    %v1958 = vld [vmem:[%s41 + $0xbd8] sm:$0xff]
    %v1959 = vld [vmem:[%s41 + $0xbe0] sm:$0xff]
    %v1960 = vld [vmem:[%s41 + $0xbe8] sm:$0xff]
    %v1961 = vld [vmem:[%s41 + $0xbf0] sm:$0xff]
    %v1962 = vld [vmem:[%s41 + $0xbf8] sm:$0xff]
    %v1963 = vld [vmem:[%s41 + $0xc00] sm:$0xff]
    %v1964 = vld [vmem:[%s41 + $0xc08] sm:$0xff]
    %v1965 = vld [vmem:[%s41 + $0xc10] sm:$0xff]
    %v1966 = vld [vmem:[%s41 + $0xc18] sm:$0xff]
    %v1967 = vld [vmem:[%s41 + $0xc20] sm:$0xff]
    %v1968 = vld [vmem:[%s41 + $0xc28] sm:$0xff]
    %v1969 = vld [vmem:[%s41 + $0xc30] sm:$0xff]
    %v1970 = vld [vmem:[%s41 + $0xc38] sm:$0xff]
    %v1971 = vld [vmem:[%s41 + $0xc40] sm:$0xff]
    %v1972 = vld [vmem:[%s41 + $0xc48] sm:$0xff]
    %v1973 = vld [vmem:[%s41 + $0xc50] sm:$0xff]
    %v1974 = vld [vmem:[%s41 + $0xc58] sm:$0xff]
    %v1975 = vld [vmem:[%s41 + $0xc60] sm:$0xff]
    %v1976 = vld [vmem:[%s41 + $0xc68] sm:$0xff]
    %v1977 = vld [vmem:[%s41 + $0xc70] sm:$0xff]
    %v1978 = vld [vmem:[%s41 + $0xc78] sm:$0xff]
    %v1979 = vld [vmem:[%s43] sm:$0x1f]
    %v1981 = vlaneseq
    %v1982 = vshrl.u32 %v1981, 7
    %v1983 = vsub.s32 0, %v1982
    %v1984 = vrot.slane %v1979, %v1983
    %v1985 = vlaneseq
    %v1986 = vshrl.u32 %v1985, 7
    %v1987 = vsub.s32 1, %v1986
    %v1988 = vrot.slane %v1979, %v1987
    %v1989 = vlaneseq
    %v1990 = vshrl.u32 %v1989, 7
    %v1991 = vsub.s32 2, %v1990
    %v1992 = vrot.slane %v1979, %v1991
    %v1993 = vlaneseq
    %v1994 = vshrl.u32 %v1993, 7
    %v1995 = vsub.s32 3, %v1994
    %v1996 = vrot.slane %v1979, %v1995
    %v1997 = vlaneseq
    %v1998 = vshrl.u32 %v1997, 7
    %v1999 = vsub.s32 4, %v1998
    %v2000 = vrot.slane %v1979, %v1999
    %2006 = vmatprep.subr.mxu0 %v1580
    %2007 = vmatpush1.msra.mxu0 %v1579
    %2008 = vmatprep.subr.mxu0 %v1585
    %2009 = vmatpush1.msra.mxu0 %v1584
    %2010 = vmatprep.subr.mxu0 %v1590
    %2011 = vmatpush1.msra.mxu0 %v1589
    %2012 = vmatprep.subr.mxu0 %v1595
    %2013 = vmatpush1.msra.mxu0 %v1594
    %2014 = vmatprep.subr.mxu0 %v1600
    %2015 = vmatpush1.msra.mxu0 %v1599
    %2016 = vmatprep.subr.mxu0 %v1605
    %2017 = vmatpush1.msra.mxu0 %v1604
    %2018 = vmatprep.subr.mxu0 %v1610
    %2019 = vmatpush1.msra.mxu0 %v1609
    %2020 = vmatprep.subr.mxu0 %v1615
    %2021 = vmatpush1.msra.mxu0 %v1614
    %2022 = vmatprep.subr.mxu0 %v1620
    %2023 = vmatpush1.msra.mxu0 %v1619
    %2024 = vmatprep.subr.mxu0 %v1625
    %2025 = vmatpush1.msra.mxu0 %v1624
    %2026 = vmatprep.subr.mxu0 %v1630
    %2027 = vmatpush1.msra.mxu0 %v1629
    %2028 = vmatprep.subr.mxu0 %v1635
    %2029 = vmatpush1.msra.mxu0 %v1634
    %2030 = vmatprep.subr.mxu0 %v1640
    %2031 = vmatpush1.msra.mxu0 %v1639
    %2032 = vmatprep.subr.mxu0 %v1645
    %2033 = vmatpush1.msra.mxu0 %v1644
    %2034 = vmatprep.subr.mxu0 %v1650
    %2035 = vmatpush1.msra.mxu0 %v1649
    %2036 = vmatprep.subr.mxu0 %v1655
    %2037 = vmatpush1.msra.mxu0 %v1654
    %2038 = vmatprep.subr.mxu0 %v1660
    %2039 = vmatpush1.msra.mxu0 %v1659
    %2040 = vmatprep.subr.mxu0 %v1665
    %2041 = vmatpush1.msra.mxu0 %v1664
    %2042 = vmatprep.subr.mxu0 %v1670
    %2043 = vmatpush1.msra.mxu0 %v1669
    %2044 = vmatprep.subr.mxu0 %v1675
    %2045 = vmatpush1.msra.mxu0 %v1674
    %2046 = vmatprep.subr.mxu0 %v1680
    %2047 = vmatpush1.msra.mxu0 %v1679
    %2048 = vmatprep.subr.mxu0 %v1685
    %2049 = vmatpush1.msra.mxu0 %v1684
    %2050 = vmatprep.subr.mxu0 %v1690
    %2051 = vmatpush1.msra.mxu0 %v1689
    %2052 = vmatprep.subr.mxu0 %v1695
    %2053 = vmatpush1.msra.mxu0 %v1694
    %2054 = vmatprep.subr.mxu0 %v1700
    %2055 = vmatpush1.msra.mxu0 %v1699
    %2056 = vmatprep.subr.mxu0 %v1705
    %2057 = vmatpush1.msra.mxu0 %v1704
    %2058 = vmatprep.subr.mxu0 %v1710
    %2059 = vmatpush1.msra.mxu0 %v1709
    %2060 = vmatprep.subr.mxu0 %v1715
    %2061 = vmatpush1.msra.mxu0 %v1714
    %2062 = vmatprep.subr.mxu0 %v1720
    %2063 = vmatpush1.msra.mxu0 %v1719
    %2064 = vmatprep.subr.mxu0 %v1725
    %2065 = vmatpush1.msra.mxu0 %v1724
    %2066 = vmatprep.subr.mxu0 %v1730
    %2067 = vmatpush1.msra.mxu0 %v1729
    %2068 = vmatprep.subr.mxu0 %v1735
    %2069 = vmatpush1.msra.mxu0 %v1734
    %2070 = vmatprep.mubr.f32.mxu0 %v1575
    %2071 = vmatmul.mubr.f32.gmra.mrb[0].mxu0 %v1574
    %v2072 = vpop.f32.mrb[0].mxu0
    %v2073 = vadd.f32 %v1984, %v2072
    %v2074 = vpop.f32.mrb[0].mxu0
    %v2075 = vadd.f32 %v1988, %v2074
    %2076 = vdwg.mxu0
    %2077 = vmatprep.subr.mxu0 %v1740
    %2078 = vmatpush1.msra.mxu0 %v1739
    %2079 = vmatprep.subr.mxu0 %v1745
    %2080 = vmatpush1.msra.mxu0 %v1744
    %2081 = vmatprep.subr.mxu0 %v1750
    %2082 = vmatpush1.msra.mxu0 %v1749
    %2083 = vmatprep.subr.mxu0 %v1755
    %2084 = vmatpush1.msra.mxu0 %v1754
    %2085 = vmatprep.subr.mxu0 %v1760
    %2086 = vmatpush1.msra.mxu0 %v1759
    %2087 = vmatprep.subr.mxu0 %v1765
    %2088 = vmatpush1.msra.mxu0 %v1764
    %2089 = vmatprep.subr.mxu0 %v1770
    %2090 = vmatpush1.msra.mxu0 %v1769
    %2091 = vmatprep.subr.mxu0 %v1775
    %2092 = vmatpush1.msra.mxu0 %v1774
    %2093 = vmatprep.subr.mxu0 %v1780
    %2094 = vmatpush1.msra.mxu0 %v1779
    %2095 = vmatprep.subr.mxu0 %v1785
    %2096 = vmatpush1.msra.mxu0 %v1784
    %2097 = vmatprep.subr.mxu0 %v1790
    %2098 = vmatpush1.msra.mxu0 %v1789
    %2099 = vmatprep.subr.mxu0 %v1795
    %2100 = vmatpush1.msra.mxu0 %v1794
    %2101 = vmatprep.subr.mxu0 %v1800
    %2102 = vmatpush1.msra.mxu0 %v1799
    %2103 = vmatprep.subr.mxu0 %v1805
    %2104 = vmatpush1.msra.mxu0 %v1804
    %2105 = vmatprep.subr.mxu0 %v1810
    %2106 = vmatpush1.msra.mxu0 %v1809
    %2107 = vmatprep.subr.mxu0 %v1815
    %2108 = vmatpush1.msra.mxu0 %v1814
    %2109 = vmatprep.subr.mxu0 %v1820
    %2110 = vmatpush1.msra.mxu0 %v1819
    %2111 = vmatprep.subr.mxu0 %v1825
    %2112 = vmatpush1.msra.mxu0 %v1824
    %2113 = vmatprep.subr.mxu0 %v1830
    %2114 = vmatpush1.msra.mxu0 %v1829
    %2115 = vmatprep.subr.mxu0 %v1835
    %2116 = vmatpush1.msra.mxu0 %v1834
    %2117 = vmatprep.subr.mxu0 %v1840
    %2118 = vmatpush1.msra.mxu0 %v1839
    %2119 = vmatprep.subr.mxu0 %v1845
    %2120 = vmatpush1.msra.mxu0 %v1844
    %2121 = vmatprep.subr.mxu0 %v1850
    %2122 = vmatpush1.msra.mxu0 %v1849
    %2123 = vmatprep.subr.mxu0 %v1855
    %2124 = vmatpush1.msra.mxu0 %v1854
    %2125 = vmatprep.subr.mxu0 %v1860
    %2126 = vmatpush1.msra.mxu0 %v1859
    %2127 = vmatprep.subr.mxu0 %v1865
    %2128 = vmatpush1.msra.mxu0 %v1864
    %2129 = vmatprep.subr.mxu0 %v1870
    %2130 = vmatpush1.msra.mxu0 %v1869
    %2131 = vmatprep.subr.mxu0 %v1875
    %2132 = vmatpush1.msra.mxu0 %v1874
    %2133 = vmatprep.subr.mxu0 %v1880
    %2134 = vmatpush1.msra.mxu0 %v1879
    %2135 = vmatprep.subr.mxu0 %v1885
    %2136 = vmatpush1.msra.mxu0 %v1884
    %2137 = vmatprep.subr.mxu0 %v1890
    %2138 = vmatpush1.msra.mxu0 %v1889
    %2139 = vmatprep.subr.mxu0 %v1895
    %2140 = vmatpush1.msra.mxu0 %v1894
    %2141 = vmatprep.mubr.f32.mxu0 %v1577
    %2142 = vmatmul.mubr.f32.gmra.mrb[0].mxu0 %v1576
    %v2143 = vpop.f32.mrb[0].mxu0
    %v2144 = vadd.f32 %v2073, %v2143
    %v2145 = vpop.f32.mrb[0].mxu0
    %v2146 = vadd.f32 %v2075, %v2145
    %2147 = vdwg.mxu0
    %2148 = vmatprep.subr.mxu0 %v1900
    %2149 = vmatpush1.msra.mxu0 %v1899
    %2150 = vmatprep.subr.mxu0 %v1905
    %2151 = vmatpush1.msra.mxu0 %v1904
    %2152 = vmatprep.subr.mxu0 %v1910
    %2153 = vmatpush1.msra.mxu0 %v1909
    %2154 = vmatprep.subr.mxu0 %v1915
    %2155 = vmatpush1.msra.mxu0 %v1914
    %2156 = vmatprep.subr.mxu0 %v1920
    %2157 = vmatpush1.msra.mxu0 %v1919
    %2158 = vmatprep.subr.mxu0 %v1925
    %2159 = vmatpush1.msra.mxu0 %v1924
    %2160 = vmatprep.subr.mxu0 %v1930
    %2161 = vmatpush1.msra.mxu0 %v1929
    %2162 = vmatprep.subr.mxu0 %v1935
    %2163 = vmatpush1.msra.mxu0 %v1934
    %2164 = vmatprep.subr.mxu0 %v1940
    %2165 = vmatpush1.msra.mxu0 %v1939
    %2166 = vmatprep.subr.mxu0 %v1945
    %2167 = vmatpush1.msra.mxu0 %v1944
    %2168 = vmatprep.subr.mxu0 %v1950
    %2169 = vmatpush1.msra.mxu0 %v1949
    %2170 = vmatprep.subr.mxu0 %v1955
    %2171 = vmatpush1.msra.mxu0 %v1954
    %2172 = vmatprep.subr.mxu0 %v1960
    %2173 = vmatpush1.msra.mxu0 %v1959
    %2174 = vmatprep.subr.mxu0 %v1965
    %2175 = vmatpush1.msra.mxu0 %v1964
    %2176 = vmatprep.subr.mxu0 %v1970
    %2177 = vmatpush1.msra.mxu0 %v1969
    %2178 = vmatprep.subr.mxu0 %v1975
    %2179 = vmatpush1.msra.mxu0 %v1974
    %2180 = vmatprep.subr.mxu0 0.0
    %2181 = vmatpush1.msra.mxu0 0.0
    %2182 = vmatprep.subr.mxu0 0.0
    %2183 = vmatpush1.msra.mxu0 0.0
    %2184 = vmatprep.subr.mxu0 0.0
    %2185 = vmatpush1.msra.mxu0 0.0
    %2186 = vmatprep.subr.mxu0 0.0
    %2187 = vmatpush1.msra.mxu0 0.0
    %2188 = vmatprep.subr.mxu0 0.0
    %2189 = vmatpush1.msra.mxu0 0.0
    %2190 = vmatprep.subr.mxu0 0.0
    %2191 = vmatpush1.msra.mxu0 0.0
    %2192 = vmatprep.subr.mxu0 0.0
    %2193 = vmatpush1.msra.mxu0 0.0
    %2194 = vmatprep.subr.mxu0 0.0
    %2195 = vmatpush1.msra.mxu0 0.0
    %2196 = vmatprep.subr.mxu0 0.0
    %2197 = vmatpush1.msra.mxu0 0.0
    %2198 = vmatprep.subr.mxu0 0.0
    %2199 = vmatpush1.msra.mxu0 0.0
    %2200 = vmatprep.subr.mxu0 0.0
    %2201 = vmatpush1.msra.mxu0 0.0
    %2202 = vmatprep.subr.mxu0 0.0
    %2203 = vmatpush1.msra.mxu0 0.0
    %2204 = vmatprep.subr.mxu0 0.0
    %2205 = vmatpush1.msra.mxu0 0.0
    %2206 = vmatprep.subr.mxu0 0.0
    %2207 = vmatpush1.msra.mxu0 0.0
    %2208 = vmatprep.subr.mxu0 0.0
    %2209 = vmatpush1.msra.mxu0 0.0
    %2210 = vmatprep.subr.mxu0 0.0
    %2211 = vmatpush1.msra.mxu0 0.0
    %2212 = vmatprep.mubr.f32.mxu0 0.0
    %2213 = vmatmul.mubr.f32.gmra.mrb[0].mxu0 %v1578
    %v2214 = vpop.f32.mrb[0].mxu0
    %v2215 = vadd.f32 %v2144, %v2214
    %v2216 = vpop.f32.mrb[0].mxu0
    %v2217 = vadd.f32 %v2146, %v2216
    %2218 = vdwg.mxu0
    %2219 = vmatprep.subr.mxu0 %v1582
    %2220 = vmatpush1.msra.mxu0 %v1581
    %2221 = vmatprep.subr.mxu0 %v1587
    %2222 = vmatpush1.msra.mxu0 %v1586
    %2223 = vmatprep.subr.mxu0 %v1592
    %2224 = vmatpush1.msra.mxu0 %v1591
    %2225 = vmatprep.subr.mxu0 %v1597
    %2226 = vmatpush1.msra.mxu0 %v1596
    %2227 = vmatprep.subr.mxu0 %v1602
    %2228 = vmatpush1.msra.mxu0 %v1601
    %2229 = vmatprep.subr.mxu0 %v1607
    %2230 = vmatpush1.msra.mxu0 %v1606
    %2231 = vmatprep.subr.mxu0 %v1612
    %2232 = vmatpush1.msra.mxu0 %v1611
    %2233 = vmatprep.subr.mxu0 %v1617
    %2234 = vmatpush1.msra.mxu0 %v1616
    %2235 = vmatprep.subr.mxu0 %v1622
    %2236 = vmatpush1.msra.mxu0 %v1621
    %2237 = vmatprep.subr.mxu0 %v1627
    %2238 = vmatpush1.msra.mxu0 %v1626
    %2239 = vmatprep.subr.mxu0 %v1632
    %2240 = vmatpush1.msra.mxu0 %v1631
    %2241 = vmatprep.subr.mxu0 %v1637
    %2242 = vmatpush1.msra.mxu0 %v1636
    %2243 = vmatprep.subr.mxu0 %v1642
    %2244 = vmatpush1.msra.mxu0 %v1641
    %2245 = vmatprep.subr.mxu0 %v1647
    %2246 = vmatpush1.msra.mxu0 %v1646
    %2247 = vmatprep.subr.mxu0 %v1652
    %2248 = vmatpush1.msra.mxu0 %v1651
    %2249 = vmatprep.subr.mxu0 %v1657
    %2250 = vmatpush1.msra.mxu0 %v1656
    %2251 = vmatprep.subr.mxu0 %v1662
    %2252 = vmatpush1.msra.mxu0 %v1661
    %2253 = vmatprep.subr.mxu0 %v1667
    %2254 = vmatpush1.msra.mxu0 %v1666
    %2255 = vmatprep.subr.mxu0 %v1672
    %2256 = vmatpush1.msra.mxu0 %v1671
    %2257 = vmatprep.subr.mxu0 %v1677
    %2258 = vmatpush1.msra.mxu0 %v1676
    %2259 = vmatprep.subr.mxu0 %v1682
    %2260 = vmatpush1.msra.mxu0 %v1681
    %2261 = vmatprep.subr.mxu0 %v1687
    %2262 = vmatpush1.msra.mxu0 %v1686
    %2263 = vmatprep.subr.mxu0 %v1692
    %2264 = vmatpush1.msra.mxu0 %v1691
    %2265 = vmatprep.subr.mxu0 %v1697
    %2266 = vmatpush1.msra.mxu0 %v1696
    %2267 = vmatprep.subr.mxu0 %v1702
    %2268 = vmatpush1.msra.mxu0 %v1701
    %2269 = vmatprep.subr.mxu0 %v1707
    %2270 = vmatpush1.msra.mxu0 %v1706
    %2271 = vmatprep.subr.mxu0 %v1712
    %2272 = vmatpush1.msra.mxu0 %v1711
    %2273 = vmatprep.subr.mxu0 %v1717
    %2274 = vmatpush1.msra.mxu0 %v1716
    %2275 = vmatprep.subr.mxu0 %v1722
    %2276 = vmatpush1.msra.mxu0 %v1721
    %2277 = vmatprep.subr.mxu0 %v1727
    %2278 = vmatpush1.msra.mxu0 %v1726
    %2279 = vmatprep.subr.mxu0 %v1732
    %2280 = vmatpush1.msra.mxu0 %v1731
    %2281 = vmatprep.subr.mxu0 %v1737
    %2282 = vmatpush1.msra.mxu0 %v1736
    %2283 = vmatprep.mubr.f32.mxu0 %v1575
    %2284 = vmatmul.mubr.f32.gmra.mrb[0].mxu0 %v1574
    %v2285 = vpop.f32.mrb[0].mxu0
    %v2286 = vadd.f32 %v1992, %v2285
    %v2287 = vpop.f32.mrb[0].mxu0
    %v2288 = vadd.f32 %v1996, %v2287
    %2289 = vdwg.mxu0
    %2290 = vmatprep.subr.mxu0 %v1742
    %2291 = vmatpush1.msra.mxu0 %v1741
    %2292 = vmatprep.subr.mxu0 %v1747
    %2293 = vmatpush1.msra.mxu0 %v1746
    %2294 = vmatprep.subr.mxu0 %v1752
    %2295 = vmatpush1.msra.mxu0 %v1751
    %2296 = vmatprep.subr.mxu0 %v1757
    %2297 = vmatpush1.msra.mxu0 %v1756
    %2298 = vmatprep.subr.mxu0 %v1762
    %2299 = vmatpush1.msra.mxu0 %v1761
    %2300 = vmatprep.subr.mxu0 %v1767
    %2301 = vmatpush1.msra.mxu0 %v1766
    %2302 = vmatprep.subr.mxu0 %v1772
    %2303 = vmatpush1.msra.mxu0 %v1771
    %2304 = vmatprep.subr.mxu0 %v1777
    %2305 = vmatpush1.msra.mxu0 %v1776
    %2306 = vmatprep.subr.mxu0 %v1782
    %2307 = vmatpush1.msra.mxu0 %v1781
    %2308 = vmatprep.subr.mxu0 %v1787
    %2309 = vmatpush1.msra.mxu0 %v1786
    %2310 = vmatprep.subr.mxu0 %v1792
    %2311 = vmatpush1.msra.mxu0 %v1791
    %2312 = vmatprep.subr.mxu0 %v1797
    %2313 = vmatpush1.msra.mxu0 %v1796
    %2314 = vmatprep.subr.mxu0 %v1802
    %2315 = vmatpush1.msra.mxu0 %v1801
    %2316 = vmatprep.subr.mxu0 %v1807
    %2317 = vmatpush1.msra.mxu0 %v1806
    %2318 = vmatprep.subr.mxu0 %v1812
    %2319 = vmatpush1.msra.mxu0 %v1811
    %2320 = vmatprep.subr.mxu0 %v1817
    %2321 = vmatpush1.msra.mxu0 %v1816
    %2322 = vmatprep.subr.mxu0 %v1822
    %2323 = vmatpush1.msra.mxu0 %v1821
    %2324 = vmatprep.subr.mxu0 %v1827
    %2325 = vmatpush1.msra.mxu0 %v1826
    %2326 = vmatprep.subr.mxu0 %v1832
    %2327 = vmatpush1.msra.mxu0 %v1831
    %2328 = vmatprep.subr.mxu0 %v1837
    %2329 = vmatpush1.msra.mxu0 %v1836
    %2330 = vmatprep.subr.mxu0 %v1842
    %2331 = vmatpush1.msra.mxu0 %v1841
    %2332 = vmatprep.subr.mxu0 %v1847
    %2333 = vmatpush1.msra.mxu0 %v1846
    %2334 = vmatprep.subr.mxu0 %v1852
    %2335 = vmatpush1.msra.mxu0 %v1851
    %2336 = vmatprep.subr.mxu0 %v1857
    %2337 = vmatpush1.msra.mxu0 %v1856
    %2338 = vmatprep.subr.mxu0 %v1862
    %2339 = vmatpush1.msra.mxu0 %v1861
    %2340 = vmatprep.subr.mxu0 %v1867
    %2341 = vmatpush1.msra.mxu0 %v1866
    %2342 = vmatprep.subr.mxu0 %v1872
    %2343 = vmatpush1.msra.mxu0 %v1871
    %2344 = vmatprep.subr.mxu0 %v1877
    %2345 = vmatpush1.msra.mxu0 %v1876
    %2346 = vmatprep.subr.mxu0 %v1882
    %2347 = vmatpush1.msra.mxu0 %v1881
    %2348 = vmatprep.subr.mxu0 %v1887
    %2349 = vmatpush1.msra.mxu0 %v1886
    %2350 = vmatprep.subr.mxu0 %v1892
    %2351 = vmatpush1.msra.mxu0 %v1891
    %2352 = vmatprep.subr.mxu0 %v1897
    %2353 = vmatpush1.msra.mxu0 %v1896
    %2354 = vmatprep.mubr.f32.mxu0 %v1577
    %2355 = vmatmul.mubr.f32.gmra.mrb[0].mxu0 %v1576
    %v2356 = vpop.f32.mrb[0].mxu0
    %v2357 = vadd.f32 %v2286, %v2356
    %v2358 = vpop.f32.mrb[0].mxu0
    %v2359 = vadd.f32 %v2288, %v2358
    %2360 = vdwg.mxu0
    %2361 = vmatprep.subr.mxu0 %v1902
    %2362 = vmatpush1.msra.mxu0 %v1901
    %2363 = vmatprep.subr.mxu0 %v1907
    %2364 = vmatpush1.msra.mxu0 %v1906
    %2365 = vmatprep.subr.mxu0 %v1912
    %2366 = vmatpush1.msra.mxu0 %v1911
    %2367 = vmatprep.subr.mxu0 %v1917
    %2368 = vmatpush1.msra.mxu0 %v1916
    %2369 = vmatprep.subr.mxu0 %v1922
    %2370 = vmatpush1.msra.mxu0 %v1921
    %2371 = vmatprep.subr.mxu0 %v1927
    %2372 = vmatpush1.msra.mxu0 %v1926
    %2373 = vmatprep.subr.mxu0 %v1932
    %2374 = vmatpush1.msra.mxu0 %v1931
    %2375 = vmatprep.subr.mxu0 %v1937
    %2376 = vmatpush1.msra.mxu0 %v1936
    %2377 = vmatprep.subr.mxu0 %v1942
    %2378 = vmatpush1.msra.mxu0 %v1941
    %2379 = vmatprep.subr.mxu0 %v1947
    %2380 = vmatpush1.msra.mxu0 %v1946
    %2381 = vmatprep.subr.mxu0 %v1952
    %2382 = vmatpush1.msra.mxu0 %v1951
    %2383 = vmatprep.subr.mxu0 %v1957
    %2384 = vmatpush1.msra.mxu0 %v1956
    %2385 = vmatprep.subr.mxu0 %v1962
    %2386 = vmatpush1.msra.mxu0 %v1961
    %2387 = vmatprep.subr.mxu0 %v1967
    %2388 = vmatpush1.msra.mxu0 %v1966
    %2389 = vmatprep.subr.mxu0 %v1972
    %2390 = vmatpush1.msra.mxu0 %v1971
    %2391 = vmatprep.subr.mxu0 %v1977
    %2392 = vmatpush1.msra.mxu0 %v1976
    %2393 = vmatprep.subr.mxu0 0.0
    %2394 = vmatpush1.msra.mxu0 0.0
    %2395 = vmatprep.subr.mxu0 0.0
    %2396 = vmatpush1.msra.mxu0 0.0
    %2397 = vmatprep.subr.mxu0 0.0
    %2398 = vmatpush1.msra.mxu0 0.0
    %2399 = vmatprep.subr.mxu0 0.0
    %2400 = vmatpush1.msra.mxu0 0.0
    %2401 = vmatprep.subr.mxu0 0.0
    %2402 = vmatpush1.msra.mxu0 0.0
    %2403 = vmatprep.subr.mxu0 0.0
    %2404 = vmatpush1.msra.mxu0 0.0
    %2405 = vmatprep.subr.mxu0 0.0
    %2406 = vmatpush1.msra.mxu0 0.0
    %2407 = vmatprep.subr.mxu0 0.0
    %2408 = vmatpush1.msra.mxu0 0.0
    %2409 = vmatprep.subr.mxu0 0.0
    %2410 = vmatpush1.msra.mxu0 0.0
    %2411 = vmatprep.subr.mxu0 0.0
    %2412 = vmatpush1.msra.mxu0 0.0
    %2413 = vmatprep.subr.mxu0 0.0
    %2414 = vmatpush1.msra.mxu0 0.0
    %2415 = vmatprep.subr.mxu0 0.0
    %2416 = vmatpush1.msra.mxu0 0.0
    %2417 = vmatprep.subr.mxu0 0.0
    %2418 = vmatpush1.msra.mxu0 0.0
    %2419 = vmatprep.subr.mxu0 0.0
    %2420 = vmatpush1.msra.mxu0 0.0
    %2421 = vmatprep.subr.mxu0 0.0
    %2422 = vmatpush1.msra.mxu0 0.0
    %2423 = vmatprep.subr.mxu0 0.0
    %2424 = vmatpush1.msra.mxu0 0.0
    %2425 = vmatprep.mubr.f32.mxu0 0.0
    %2426 = vmatmul.mubr.f32.gmra.mrb[0].mxu0 %v1578
    %v2427 = vpop.f32.mrb[0].mxu0
    %v2428 = vadd.f32 %v2357, %v2427
    %v2429 = vpop.f32.mrb[0].mxu0
    %v2430 = vadd.f32 %v2359, %v2429
    %2431 = vdwg.mxu0
    %2432 = vmatprep.subr.mxu0 0.0
    %2433 = vmatpush1.msra.mxu0 %v1583
    %2434 = vmatprep.subr.mxu0 0.0
    %2435 = vmatpush1.msra.mxu0 %v1588
    %2436 = vmatprep.subr.mxu0 0.0
    %2437 = vmatpush1.msra.mxu0 %v1593
    %2438 = vmatprep.subr.mxu0 0.0
    %2439 = vmatpush1.msra.mxu0 %v1598
    %2440 = vmatprep.subr.mxu0 0.0
    %2441 = vmatpush1.msra.mxu0 %v1603
    %2442 = vmatprep.subr.mxu0 0.0
    %2443 = vmatpush1.msra.mxu0 %v1608
    %2444 = vmatprep.subr.mxu0 0.0
    %2445 = vmatpush1.msra.mxu0 %v1613
    %2446 = vmatprep.subr.mxu0 0.0
    %2447 = vmatpush1.msra.mxu0 %v1618
    %2448 = vmatprep.subr.mxu0 0.0
    %2449 = vmatpush1.msra.mxu0 %v1623
    %2450 = vmatprep.subr.mxu0 0.0
    %2451 = vmatpush1.msra.mxu0 %v1628
    %2452 = vmatprep.subr.mxu0 0.0
    %2453 = vmatpush1.msra.mxu0 %v1633
    %2454 = vmatprep.subr.mxu0 0.0
    %2455 = vmatpush1.msra.mxu0 %v1638
    %2456 = vmatprep.subr.mxu0 0.0
    %2457 = vmatpush1.msra.mxu0 %v1643
    %2458 = vmatprep.subr.mxu0 0.0
    %2459 = vmatpush1.msra.mxu0 %v1648
    %2460 = vmatprep.subr.mxu0 0.0
    %2461 = vmatpush1.msra.mxu0 %v1653
    %2462 = vmatprep.subr.mxu0 0.0
    %2463 = vmatpush1.msra.mxu0 %v1658
    %2464 = vmatprep.subr.mxu0 0.0
    %2465 = vmatpush1.msra.mxu0 %v1663
    %2466 = vmatprep.subr.mxu0 0.0
    %2467 = vmatpush1.msra.mxu0 %v1668
    %2468 = vmatprep.subr.mxu0 0.0
    %2469 = vmatpush1.msra.mxu0 %v1673
    %2470 = vmatprep.subr.mxu0 0.0
    %2471 = vmatpush1.msra.mxu0 %v1678
    %2472 = vmatprep.subr.mxu0 0.0
    %2473 = vmatpush1.msra.mxu0 %v1683
    %2474 = vmatprep.subr.mxu0 0.0
    %2475 = vmatpush1.msra.mxu0 %v1688
    %2476 = vmatprep.subr.mxu0 0.0
    %2477 = vmatpush1.msra.mxu0 %v1693
    %2478 = vmatprep.subr.mxu0 0.0
    %2479 = vmatpush1.msra.mxu0 %v1698
    %2480 = vmatprep.subr.mxu0 0.0
    %2481 = vmatpush1.msra.mxu0 %v1703
    %2482 = vmatprep.subr.mxu0 0.0
    %2483 = vmatpush1.msra.mxu0 %v1708
    %2484 = vmatprep.subr.mxu0 0.0
    %2485 = vmatpush1.msra.mxu0 %v1713
    %2486 = vmatprep.subr.mxu0 0.0
    %2487 = vmatpush1.msra.mxu0 %v1718
    %2488 = vmatprep.subr.mxu0 0.0
    %2489 = vmatpush1.msra.mxu0 %v1723
    %2490 = vmatprep.subr.mxu0 0.0
    %2491 = vmatpush1.msra.mxu0 %v1728
    %2492 = vmatprep.subr.mxu0 0.0
    %2493 = vmatpush1.msra.mxu0 %v1733
    %2494 = vmatprep.subr.mxu0 0.0
    %2495 = vmatpush1.msra.mxu0 %v1738
    %2496 = vmatprep.mubr.f32.mxu0 %v1575
    %2497 = vmatmul.mubr.f32.gmra.mrb[0].mxu0 %v1574
    %v2498 = vpop.f32.mrb[0].mxu0
    %v2499 = vadd.f32 %v2000, %v2498
    %v2500 = vpop.f32.mrb[0].mxu0
    %2501 = vdwg.mxu0
    %2502 = vmatprep.subr.mxu0 0.0
    %2503 = vmatpush1.msra.mxu0 %v1743
    %2504 = vmatprep.subr.mxu0 0.0
    %2505 = vmatpush1.msra.mxu0 %v1748
    %2506 = vmatprep.subr.mxu0 0.0
    %2507 = vmatpush1.msra.mxu0 %v1753
    %2508 = vmatprep.subr.mxu0 0.0
    %2509 = vmatpush1.msra.mxu0 %v1758
    %2510 = vmatprep.subr.mxu0 0.0
    %2511 = vmatpush1.msra.mxu0 %v1763
    %2512 = vmatprep.subr.mxu0 0.0
    %2513 = vmatpush1.msra.mxu0 %v1768
    %2514 = vmatprep.subr.mxu0 0.0
    %2515 = vmatpush1.msra.mxu0 %v1773
    %2516 = vmatprep.subr.mxu0 0.0
    %2517 = vmatpush1.msra.mxu0 %v1778
    %2518 = vmatprep.subr.mxu0 0.0
    %2519 = vmatpush1.msra.mxu0 %v1783
    %2520 = vmatprep.subr.mxu0 0.0
    %2521 = vmatpush1.msra.mxu0 %v1788
    %2522 = vmatprep.subr.mxu0 0.0
    %2523 = vmatpush1.msra.mxu0 %v1793
    %2524 = vmatprep.subr.mxu0 0.0
    %2525 = vmatpush1.msra.mxu0 %v1798
    %2526 = vmatprep.subr.mxu0 0.0
    %2527 = vmatpush1.msra.mxu0 %v1803
    %2528 = vmatprep.subr.mxu0 0.0
    %2529 = vmatpush1.msra.mxu0 %v1808
    %2530 = vmatprep.subr.mxu0 0.0
    %2531 = vmatpush1.msra.mxu0 %v1813
    %2532 = vmatprep.subr.mxu0 0.0
    %2533 = vmatpush1.msra.mxu0 %v1818
    %2534 = vmatprep.subr.mxu0 0.0
    %2535 = vmatpush1.msra.mxu0 %v1823
    %2536 = vmatprep.subr.mxu0 0.0
    %2537 = vmatpush1.msra.mxu0 %v1828
    %2538 = vmatprep.subr.mxu0 0.0
    %2539 = vmatpush1.msra.mxu0 %v1833
    %2540 = vmatprep.subr.mxu0 0.0
    %2541 = vmatpush1.msra.mxu0 %v1838
    %2542 = vmatprep.subr.mxu0 0.0
    %2543 = vmatpush1.msra.mxu0 %v1843
    %2544 = vmatprep.subr.mxu0 0.0
    %2545 = vmatpush1.msra.mxu0 %v1848
    %2546 = vmatprep.subr.mxu0 0.0
    %2547 = vmatpush1.msra.mxu0 %v1853
    %2548 = vmatprep.subr.mxu0 0.0
    %2549 = vmatpush1.msra.mxu0 %v1858
    %2550 = vmatprep.subr.mxu0 0.0
    %2551 = vmatpush1.msra.mxu0 %v1863
    %2552 = vmatprep.subr.mxu0 0.0
    %2553 = vmatpush1.msra.mxu0 %v1868
    %2554 = vmatprep.subr.mxu0 0.0
    %2555 = vmatpush1.msra.mxu0 %v1873
    %2556 = vmatprep.subr.mxu0 0.0
    %2557 = vmatpush1.msra.mxu0 %v1878
    %2558 = vmatprep.subr.mxu0 0.0
    %2559 = vmatpush1.msra.mxu0 %v1883
    %2560 = vmatprep.subr.mxu0 0.0
    %2561 = vmatpush1.msra.mxu0 %v1888
    %2562 = vmatprep.subr.mxu0 0.0
    %2563 = vmatpush1.msra.mxu0 %v1893
    %2564 = vmatprep.subr.mxu0 0.0
    %2565 = vmatpush1.msra.mxu0 %v1898
    %2566 = vmatprep.mubr.f32.mxu0 %v1577
    %2567 = vmatmul.mubr.f32.gmra.mrb[0].mxu0 %v1576
    %v2568 = vpop.f32.mrb[0].mxu0
    %v2569 = vadd.f32 %v2499, %v2568
    %v2570 = vpop.f32.mrb[0].mxu0
    %2571 = vdwg.mxu0
    %2572 = vmatprep.subr.mxu0 0.0
    %2573 = vmatpush1.msra.mxu0 %v1903
    %2574 = vmatprep.subr.mxu0 0.0
    %2575 = vmatpush1.msra.mxu0 %v1908
    %2576 = vmatprep.subr.mxu0 0.0
    %2577 = vmatpush1.msra.mxu0 %v1913
    %2578 = vmatprep.subr.mxu0 0.0
    %2579 = vmatpush1.msra.mxu0 %v1918
    %2580 = vmatprep.subr.mxu0 0.0
    %2581 = vmatpush1.msra.mxu0 %v1923
    %2582 = vmatprep.subr.mxu0 0.0
    %2583 = vmatpush1.msra.mxu0 %v1928
    %2584 = vmatprep.subr.mxu0 0.0
    %2585 = vmatpush1.msra.mxu0 %v1933
    %2586 = vmatprep.subr.mxu0 0.0
    %2587 = vmatpush1.msra.mxu0 %v1938
    %2588 = vmatprep.subr.mxu0 0.0
    %2589 = vmatpush1.msra.mxu0 %v1943
    %2590 = vmatprep.subr.mxu0 0.0
    %2591 = vmatpush1.msra.mxu0 %v1948
    %2592 = vmatprep.subr.mxu0 0.0
    %2593 = vmatpush1.msra.mxu0 %v1953
    %2594 = vmatprep.subr.mxu0 0.0
    %2595 = vmatpush1.msra.mxu0 %v1958
    %2596 = vmatprep.subr.mxu0 0.0
    %2597 = vmatpush1.msra.mxu0 %v1963
    %2598 = vmatprep.subr.mxu0 0.0
    %2599 = vmatpush1.msra.mxu0 %v1968
    %2600 = vmatprep.subr.mxu0 0.0
    %2601 = vmatpush1.msra.mxu0 %v1973
    %2602 = vmatprep.subr.mxu0 0.0
    %2603 = vmatpush1.msra.mxu0 %v1978
    %2604 = vmatprep.subr.mxu0 0.0
    %2605 = vmatpush1.msra.mxu0 0.0
    %2606 = vmatprep.subr.mxu0 0.0
    %2607 = vmatpush1.msra.mxu0 0.0
    %2608 = vmatprep.subr.mxu0 0.0
    %2609 = vmatpush1.msra.mxu0 0.0
    %2610 = vmatprep.subr.mxu0 0.0
    %2611 = vmatpush1.msra.mxu0 0.0
    %2612 = vmatprep.subr.mxu0 0.0
    %2613 = vmatpush1.msra.mxu0 0.0
    %2614 = vmatprep.subr.mxu0 0.0
    %2615 = vmatpush1.msra.mxu0 0.0
    %2616 = vmatprep.subr.mxu0 0.0
    %2617 = vmatpush1.msra.mxu0 0.0
    %2618 = vmatprep.subr.mxu0 0.0
    %2619 = vmatpush1.msra.mxu0 0.0
    %2620 = vmatprep.subr.mxu0 0.0
    %2621 = vmatpush1.msra.mxu0 0.0
    %2622 = vmatprep.subr.mxu0 0.0
    %2623 = vmatpush1.msra.mxu0 0.0
    %2624 = vmatprep.subr.mxu0 0.0
    %2625 = vmatpush1.msra.mxu0 0.0
    %2626 = vmatprep.subr.mxu0 0.0
    %2627 = vmatpush1.msra.mxu0 0.0
    %2628 = vmatprep.subr.mxu0 0.0
    %2629 = vmatpush1.msra.mxu0 0.0
    %2630 = vmatprep.subr.mxu0 0.0
    %2631 = vmatpush1.msra.mxu0 0.0
    %2632 = vmatprep.subr.mxu0 0.0
    %2633 = vmatpush1.msra.mxu0 0.0
    %2634 = vmatprep.subr.mxu0 0.0
    %2635 = vmatpush1.msra.mxu0 0.0
    %2636 = vmatprep.mubr.f32.mxu0 0.0
    %2637 = vmatmul.mubr.f32.gmra.mrb[0].mxu0 %v1578
    %v2638 = vpop.f32.mrb[0].mxu0
    %v2639 = vadd.f32 %v2569, %v2638
    %v2640 = vpop.f32.mrb[0].mxu0
    %2641 = vdwg.mxu0
    %v2642 = vsel %vm730, %v2215, 0.0
    %v2643 = vsel %vm730, %v2217, 0.0
    %v2644 = vadd.f32 %v2642, %v2643
    %v2645 = vsel %vm730, %v2428, 0.0
    %v2646 = vadd.f32 %v2644, %v2645
    %v2647 = vsel %vm730, %v2430, 0.0
    %v2648 = vadd.f32 %v2646, %v2647
    %vm2649 = vcmask 517120
    %v2650 = vsel %vm2649, %v2639, 0.0
    %v2651 = vadd.f32 %v2648, %v2650
    %2652 = vadd.xlane.f32.xlu0 %v2651
    %v2653 = vpop.xlane.xlu0 %2652
    %v2654 = vrcp.pop 576.0
    %v2655 = vmul.f32 %v2653, %v2654
    %v2656 = vsub.f32 %v2215, %v2655
    %v2657 = vsub.f32 %v2217, %v2655
    %v2658 = vsub.f32 %v2428, %v2655
    %v2659 = vsub.f32 %v2430, %v2655
    %v2660 = vsub.f32 %v2639, %v2655
    %v2661 = vmul.f32 %v2656, %v2656
    %v2662 = vmul.f32 %v2657, %v2657
    %v2663 = vmul.f32 %v2658, %v2658
    %v2664 = vmul.f32 %v2659, %v2659
    %v2665 = vmul.f32 %v2660, %v2660
    %v2666 = vsel %vm730, %v2661, 0.0
    %v2667 = vsel %vm730, %v2662, 0.0
    %v2668 = vadd.f32 %v2666, %v2667
    %v2669 = vsel %vm730, %v2663, 0.0
    %v2670 = vadd.f32 %v2668, %v2669
    %v2671 = vsel %vm730, %v2664, 0.0
    %v2672 = vadd.f32 %v2670, %v2671
    %v2673 = vsel %vm2649, %v2665, 0.0
    %v2674 = vadd.f32 %v2672, %v2673
    %2675 = vadd.xlane.f32.xlu0 %v2674
    %v2676 = vpop.xlane.xlu0 %2675
    %v2677 = vmul.f32 %v2676, %v2654
    %v2678 = vadd.f32 %v2677, 1e-05
    %v2679 = vrsqrt.pop %v2678
    %v2680 = vmul.f32 %v2656, %v2679
    %v2681 = vmul.f32 %v2657, %v2679
    %v2682 = vmul.f32 %v2658, %v2679
    %v2683 = vmul.f32 %v2659, %v2679
    %v2684 = vmul.f32 %v2660, %v2679
    %v2685 = vld [vmem:[%s45] sm:$0x1f]
    %v2687 = vlaneseq
    %v2688 = vshrl.u32 %v2687, 7
    %v2689 = vsub.s32 0, %v2688
    %v2690 = vrot.slane %v2685, %v2689
    %v2691 = vlaneseq
    %v2692 = vshrl.u32 %v2691, 7
    %v2693 = vsub.s32 1, %v2692
    %v2694 = vrot.slane %v2685, %v2693
    %v2695 = vlaneseq
    %v2696 = vshrl.u32 %v2695, 7
    %v2697 = vsub.s32 2, %v2696
    %v2698 = vrot.slane %v2685, %v2697
    %v2699 = vlaneseq
    %v2700 = vshrl.u32 %v2699, 7
    %v2701 = vsub.s32 3, %v2700
    %v2702 = vrot.slane %v2685, %v2701
    %v2703 = vlaneseq
    %v2704 = vshrl.u32 %v2703, 7
    %v2705 = vsub.s32 4, %v2704
    %v2706 = vrot.slane %v2685, %v2705
    %v2712 = vmul.f32 %v2680, %v2690
    %v2713 = vmul.f32 %v2681, %v2694
    %v2714 = vmul.f32 %v2682, %v2698
    %v2715 = vmul.f32 %v2683, %v2702
    %v2716 = vmul.f32 %v2684, %v2706
    %v2717 = vld [vmem:[%s47] sm:$0x1f]
    %v2719 = vlaneseq
    %v2720 = vshrl.u32 %v2719, 7
    %v2721 = vsub.s32 0, %v2720
    %v2722 = vrot.slane %v2717, %v2721
    %v2723 = vlaneseq
    %v2724 = vshrl.u32 %v2723, 7
    %v2725 = vsub.s32 1, %v2724
    %v2726 = vrot.slane %v2717, %v2725
    %v2727 = vlaneseq
    %v2728 = vshrl.u32 %v2727, 7
    %v2729 = vsub.s32 2, %v2728
    %v2730 = vrot.slane %v2717, %v2729
    %v2731 = vlaneseq
    %v2732 = vshrl.u32 %v2731, 7
    %v2733 = vsub.s32 3, %v2732
    %v2734 = vrot.slane %v2717, %v2733
    %v2735 = vlaneseq
    %v2736 = vshrl.u32 %v2735, 7
    %v2737 = vsub.s32 4, %v2736
    %v2738 = vrot.slane %v2717, %v2737
    %v2744 = vadd.f32 %v2712, %v2722
    %v2745 = vadd.f32 %v2713, %v2726
    %v2746 = vadd.f32 %v2714, %v2730
    %v2747 = vadd.f32 %v2715, %v2734
    %v2748 = vadd.f32 %v2716, %v2738
    %v2749 = vmax.f32 %v2744, 0.0
    %v2750 = vmax.f32 %v2745, 0.0
    %v2751 = vmax.f32 %v2746, 0.0
    %v2752 = vmax.f32 %v2747, 0.0
    %v2753 = vmax.f32 %v2748, 0.0
    %v2754 = vld [vmem:[%s49] sm:$0xff]
    %v2755 = vld [vmem:[%s49 + $0x8] sm:$0xff]
    %v2756 = vld [vmem:[%s49 + $0x10] sm:$0xff]
    %v2757 = vld [vmem:[%s49 + $0x18] sm:$0xff]
    %v2758 = vld [vmem:[%s49 + $0x20] sm:$0xff]
    %v2759 = vld [vmem:[%s49 + $0x28] sm:$0xff]
    %v2760 = vld [vmem:[%s49 + $0x30] sm:$0xff]
    %v2761 = vld [vmem:[%s49 + $0x38] sm:$0xff]
    %v2762 = vld [vmem:[%s49 + $0x40] sm:$0xff]
    %v2763 = vld [vmem:[%s49 + $0x48] sm:$0xff]
    %v2764 = vld [vmem:[%s49 + $0x50] sm:$0xff]
    %v2765 = vld [vmem:[%s49 + $0x58] sm:$0xff]
    %v2766 = vld [vmem:[%s49 + $0x60] sm:$0xff]
    %v2767 = vld [vmem:[%s49 + $0x68] sm:$0xff]
    %v2768 = vld [vmem:[%s49 + $0x70] sm:$0xff]
    %v2769 = vld [vmem:[%s49 + $0x78] sm:$0xff]
    %v2770 = vld [vmem:[%s49 + $0x80] sm:$0xff]
    %v2771 = vld [vmem:[%s49 + $0x88] sm:$0xff]
    %v2772 = vld [vmem:[%s49 + $0x90] sm:$0xff]
    %v2773 = vld [vmem:[%s49 + $0x98] sm:$0xff]
    %v2774 = vld [vmem:[%s49 + $0xa0] sm:$0xff]
    %v2775 = vld [vmem:[%s49 + $0xa8] sm:$0xff]
    %v2776 = vld [vmem:[%s49 + $0xb0] sm:$0xff]
    %v2777 = vld [vmem:[%s49 + $0xb8] sm:$0xff]
    %v2778 = vld [vmem:[%s49 + $0xc0] sm:$0xff]
    %v2779 = vld [vmem:[%s49 + $0xc8] sm:$0xff]
    %v2780 = vld [vmem:[%s49 + $0xd0] sm:$0xff]
    %v2781 = vld [vmem:[%s49 + $0xd8] sm:$0xff]
    %v2782 = vld [vmem:[%s49 + $0xe0] sm:$0xff]
    %v2783 = vld [vmem:[%s49 + $0xe8] sm:$0xff]
    %v2784 = vld [vmem:[%s49 + $0xf0] sm:$0xff]
    %v2785 = vld [vmem:[%s49 + $0xf8] sm:$0xff]
    %v2786 = vld [vmem:[%s49 + $0x100] sm:$0xff]
    %v2787 = vld [vmem:[%s49 + $0x108] sm:$0xff]
    %v2788 = vld [vmem:[%s49 + $0x110] sm:$0xff]
    %v2789 = vld [vmem:[%s49 + $0x118] sm:$0xff]
    %v2790 = vld [vmem:[%s49 + $0x120] sm:$0xff]
    %v2791 = vld [vmem:[%s49 + $0x128] sm:$0xff]
    %v2792 = vld [vmem:[%s49 + $0x130] sm:$0xff]
    %v2793 = vld [vmem:[%s49 + $0x138] sm:$0xff]
    %v2794 = vld [vmem:[%s49 + $0x140] sm:$0xff]
    %v2795 = vld [vmem:[%s49 + $0x148] sm:$0xff]
    %v2796 = vld [vmem:[%s49 + $0x150] sm:$0xff]
    %v2797 = vld [vmem:[%s49 + $0x158] sm:$0xff]
    %v2798 = vld [vmem:[%s49 + $0x160] sm:$0xff]
    %v2799 = vld [vmem:[%s49 + $0x168] sm:$0xff]
    %v2800 = vld [vmem:[%s49 + $0x170] sm:$0xff]
    %v2801 = vld [vmem:[%s49 + $0x178] sm:$0xff]
    %v2802 = vld [vmem:[%s49 + $0x180] sm:$0xff]
    %v2803 = vld [vmem:[%s49 + $0x188] sm:$0xff]
    %v2804 = vld [vmem:[%s49 + $0x190] sm:$0xff]
    %v2805 = vld [vmem:[%s49 + $0x198] sm:$0xff]
    %v2806 = vld [vmem:[%s49 + $0x1a0] sm:$0xff]
    %v2807 = vld [vmem:[%s49 + $0x1a8] sm:$0xff]
    %v2808 = vld [vmem:[%s49 + $0x1b0] sm:$0xff]
    %v2809 = vld [vmem:[%s49 + $0x1b8] sm:$0xff]
    %v2810 = vld [vmem:[%s49 + $0x1c0] sm:$0xff]
    %v2811 = vld [vmem:[%s49 + $0x1c8] sm:$0xff]
    %v2812 = vld [vmem:[%s49 + $0x1d0] sm:$0xff]
    %v2813 = vld [vmem:[%s49 + $0x1d8] sm:$0xff]
    %v2814 = vld [vmem:[%s49 + $0x1e0] sm:$0xff]
    %v2815 = vld [vmem:[%s49 + $0x1e8] sm:$0xff]
    %v2816 = vld [vmem:[%s49 + $0x1f0] sm:$0xff]
    %v2817 = vld [vmem:[%s49 + $0x1f8] sm:$0xff]
    %v2818 = vld [vmem:[%s49 + $0x200] sm:$0xff]
    %v2819 = vld [vmem:[%s49 + $0x208] sm:$0xff]
    %v2820 = vld [vmem:[%s49 + $0x210] sm:$0xff]
    %v2821 = vld [vmem:[%s49 + $0x218] sm:$0xff]
    %v2822 = vld [vmem:[%s49 + $0x220] sm:$0xff]
    %v2823 = vld [vmem:[%s49 + $0x228] sm:$0xff]
    %v2824 = vld [vmem:[%s49 + $0x230] sm:$0xff]
    %v2825 = vld [vmem:[%s49 + $0x238] sm:$0xff]
    %v2826 = vld [vmem:[%s49 + $0x240] sm:$0xff]
    %v2827 = vld [vmem:[%s49 + $0x248] sm:$0xff]
    %v2828 = vld [vmem:[%s49 + $0x250] sm:$0xff]
    %v2829 = vld [vmem:[%s49 + $0x258] sm:$0xff]
    %v2830 = vld [vmem:[%s49 + $0x260] sm:$0xff]
    %v2831 = vld [vmem:[%s49 + $0x268] sm:$0xff]
    %v2832 = vld [vmem:[%s49 + $0x270] sm:$0xff]
    %v2833 = vld [vmem:[%s49 + $0x278] sm:$0xff]
    %v2834 = vld [vmem:[%s49 + $0x280] sm:$0xff]
    %v2835 = vld [vmem:[%s49 + $0x288] sm:$0xff]
    %v2836 = vld [vmem:[%s49 + $0x290] sm:$0xff]
    %v2837 = vld [vmem:[%s49 + $0x298] sm:$0xff]
    %v2838 = vld [vmem:[%s49 + $0x2a0] sm:$0xff]
    %v2839 = vld [vmem:[%s49 + $0x2a8] sm:$0xff]
    %v2840 = vld [vmem:[%s49 + $0x2b0] sm:$0xff]
    %v2841 = vld [vmem:[%s49 + $0x2b8] sm:$0xff]
    %v2842 = vld [vmem:[%s49 + $0x2c0] sm:$0xff]
    %v2843 = vld [vmem:[%s49 + $0x2c8] sm:$0xff]
    %v2844 = vld [vmem:[%s49 + $0x2d0] sm:$0xff]
    %v2845 = vld [vmem:[%s49 + $0x2d8] sm:$0xff]
    %v2846 = vld [vmem:[%s49 + $0x2e0] sm:$0xff]
    %v2847 = vld [vmem:[%s49 + $0x2e8] sm:$0xff]
    %v2848 = vld [vmem:[%s49 + $0x2f0] sm:$0xff]
    %v2849 = vld [vmem:[%s49 + $0x2f8] sm:$0xff]
    %v2850 = vld [vmem:[%s49 + $0x300] sm:$0xff]
    %v2851 = vld [vmem:[%s49 + $0x308] sm:$0xff]
    %v2852 = vld [vmem:[%s49 + $0x310] sm:$0xff]
    %v2853 = vld [vmem:[%s49 + $0x318] sm:$0xff]
    %v2854 = vld [vmem:[%s49 + $0x320] sm:$0xff]
    %v2855 = vld [vmem:[%s49 + $0x328] sm:$0xff]
    %v2856 = vld [vmem:[%s49 + $0x330] sm:$0xff]
    %v2857 = vld [vmem:[%s49 + $0x338] sm:$0xff]
    %v2858 = vld [vmem:[%s49 + $0x340] sm:$0xff]
    %v2859 = vld [vmem:[%s49 + $0x348] sm:$0xff]
    %v2860 = vld [vmem:[%s49 + $0x350] sm:$0xff]
    %v2861 = vld [vmem:[%s49 + $0x358] sm:$0xff]
    %v2862 = vld [vmem:[%s49 + $0x360] sm:$0xff]
    %v2863 = vld [vmem:[%s49 + $0x368] sm:$0xff]
    %v2864 = vld [vmem:[%s49 + $0x370] sm:$0xff]
    %v2865 = vld [vmem:[%s49 + $0x378] sm:$0xff]
    %v2866 = vld [vmem:[%s49 + $0x380] sm:$0xff]
    %v2867 = vld [vmem:[%s49 + $0x388] sm:$0xff]
    %v2868 = vld [vmem:[%s49 + $0x390] sm:$0xff]
    %v2869 = vld [vmem:[%s49 + $0x398] sm:$0xff]
    %v2870 = vld [vmem:[%s49 + $0x3a0] sm:$0xff]
    %v2871 = vld [vmem:[%s49 + $0x3a8] sm:$0xff]
    %v2872 = vld [vmem:[%s49 + $0x3b0] sm:$0xff]
    %v2873 = vld [vmem:[%s49 + $0x3b8] sm:$0xff]
    %v2874 = vld [vmem:[%s49 + $0x3c0] sm:$0xff]
    %v2875 = vld [vmem:[%s49 + $0x3c8] sm:$0xff]
    %v2876 = vld [vmem:[%s49 + $0x3d0] sm:$0xff]
    %v2877 = vld [vmem:[%s49 + $0x3d8] sm:$0xff]
    %v2878 = vld [vmem:[%s49 + $0x3e0] sm:$0xff]
    %v2879 = vld [vmem:[%s49 + $0x3e8] sm:$0xff]
    %v2880 = vld [vmem:[%s49 + $0x3f0] sm:$0xff]
    %v2881 = vld [vmem:[%s49 + $0x3f8] sm:$0xff]
    %v2882 = vld [vmem:[%s49 + $0x400] sm:$0xff]
    %v2883 = vld [vmem:[%s49 + $0x408] sm:$0xff]
    %v2884 = vld [vmem:[%s49 + $0x410] sm:$0xff]
    %v2885 = vld [vmem:[%s49 + $0x418] sm:$0xff]
    %v2886 = vld [vmem:[%s49 + $0x420] sm:$0xff]
    %v2887 = vld [vmem:[%s49 + $0x428] sm:$0xff]
    %v2888 = vld [vmem:[%s49 + $0x430] sm:$0xff]
    %v2889 = vld [vmem:[%s49 + $0x438] sm:$0xff]
    %v2890 = vld [vmem:[%s49 + $0x440] sm:$0xff]
    %v2891 = vld [vmem:[%s49 + $0x448] sm:$0xff]
    %v2892 = vld [vmem:[%s49 + $0x450] sm:$0xff]
    %v2893 = vld [vmem:[%s49 + $0x458] sm:$0xff]
    %v2894 = vld [vmem:[%s49 + $0x460] sm:$0xff]
    %v2895 = vld [vmem:[%s49 + $0x468] sm:$0xff]
    %v2896 = vld [vmem:[%s49 + $0x470] sm:$0xff]
    %v2897 = vld [vmem:[%s49 + $0x478] sm:$0xff]
    %v2898 = vld [vmem:[%s51] sm:$0x3]
    %v2900 = vlaneseq
    %v2901 = vshrl.u32 %v2900, 7
    %v2902 = vsub.s32 0, %v2901
    %v2903 = vrot.slane %v2898, %v2902
    %v2904 = vlaneseq
    %v2905 = vshrl.u32 %v2904, 7
    %v2906 = vsub.s32 1, %v2905
    %v2907 = vrot.slane %v2898, %v2906
    %v2911 = vsel %vm401, %v2753, 0
    %2913 = vmatprep.subr.mxu0 %v2755
    %2914 = vmatpush1.msra.mxu0 %v2754
    %2915 = vmatprep.subr.mxu0 %v2757
    %2916 = vmatpush1.msra.mxu0 %v2756
    %2917 = vmatprep.subr.mxu0 %v2759
    %2918 = vmatpush1.msra.mxu0 %v2758
    %2919 = vmatprep.subr.mxu0 %v2761
    %2920 = vmatpush1.msra.mxu0 %v2760
    %2921 = vmatprep.subr.mxu0 %v2763
    %2922 = vmatpush1.msra.mxu0 %v2762
    %2923 = vmatprep.subr.mxu0 %v2765
    %2924 = vmatpush1.msra.mxu0 %v2764
    %2925 = vmatprep.subr.mxu0 %v2767
    %2926 = vmatpush1.msra.mxu0 %v2766
    %2927 = vmatprep.subr.mxu0 %v2769
    %2928 = vmatpush1.msra.mxu0 %v2768
    %2929 = vmatprep.subr.mxu0 %v2771
    %2930 = vmatpush1.msra.mxu0 %v2770
    %2931 = vmatprep.subr.mxu0 %v2773
    %2932 = vmatpush1.msra.mxu0 %v2772
    %2933 = vmatprep.subr.mxu0 %v2775
    %2934 = vmatpush1.msra.mxu0 %v2774
    %2935 = vmatprep.subr.mxu0 %v2777
    %2936 = vmatpush1.msra.mxu0 %v2776
    %2937 = vmatprep.subr.mxu0 %v2779
    %2938 = vmatpush1.msra.mxu0 %v2778
    %2939 = vmatprep.subr.mxu0 %v2781
    %2940 = vmatpush1.msra.mxu0 %v2780
    %2941 = vmatprep.subr.mxu0 %v2783
    %2942 = vmatpush1.msra.mxu0 %v2782
    %2943 = vmatprep.subr.mxu0 %v2785
    %2944 = vmatpush1.msra.mxu0 %v2784
    %2945 = vmatprep.subr.mxu0 %v2787
    %2946 = vmatpush1.msra.mxu0 %v2786
    %2947 = vmatprep.subr.mxu0 %v2789
    %2948 = vmatpush1.msra.mxu0 %v2788
    %2949 = vmatprep.subr.mxu0 %v2791
    %2950 = vmatpush1.msra.mxu0 %v2790
    %2951 = vmatprep.subr.mxu0 %v2793
    %2952 = vmatpush1.msra.mxu0 %v2792
    %2953 = vmatprep.subr.mxu0 %v2795
    %2954 = vmatpush1.msra.mxu0 %v2794
    %2955 = vmatprep.subr.mxu0 %v2797
    %2956 = vmatpush1.msra.mxu0 %v2796
    %2957 = vmatprep.subr.mxu0 %v2799
    %2958 = vmatpush1.msra.mxu0 %v2798
    %2959 = vmatprep.subr.mxu0 %v2801
    %2960 = vmatpush1.msra.mxu0 %v2800
    %2961 = vmatprep.subr.mxu0 %v2803
    %2962 = vmatpush1.msra.mxu0 %v2802
    %2963 = vmatprep.subr.mxu0 %v2805
    %2964 = vmatpush1.msra.mxu0 %v2804
    %2965 = vmatprep.subr.mxu0 %v2807
    %2966 = vmatpush1.msra.mxu0 %v2806
    %2967 = vmatprep.subr.mxu0 %v2809
    %2968 = vmatpush1.msra.mxu0 %v2808
    %2969 = vmatprep.subr.mxu0 %v2811
    %2970 = vmatpush1.msra.mxu0 %v2810
    %2971 = vmatprep.subr.mxu0 %v2813
    %2972 = vmatpush1.msra.mxu0 %v2812
    %2973 = vmatprep.subr.mxu0 %v2815
    %2974 = vmatpush1.msra.mxu0 %v2814
    %2975 = vmatprep.subr.mxu0 %v2817
    %2976 = vmatpush1.msra.mxu0 %v2816
    %2977 = vmatprep.mubr.f32.mxu0 %v2750
    %2978 = vmatmul.mubr.f32.gmra.mrb[0].mxu0 %v2749
    %v2979 = vpop.f32.mrb[0].mxu0
    %v2980 = vadd.f32 %v2903, %v2979
    %v2981 = vpop.f32.mrb[0].mxu0
    %v2982 = vadd.f32 %v2907, %v2981
    %2983 = vdwg.mxu0
    %2984 = vmatprep.subr.mxu0 %v2819
    %2985 = vmatpush1.msra.mxu0 %v2818
    %2986 = vmatprep.subr.mxu0 %v2821
    %2987 = vmatpush1.msra.mxu0 %v2820
    %2988 = vmatprep.subr.mxu0 %v2823
    %2989 = vmatpush1.msra.mxu0 %v2822
    %2990 = vmatprep.subr.mxu0 %v2825
    %2991 = vmatpush1.msra.mxu0 %v2824
    %2992 = vmatprep.subr.mxu0 %v2827
    %2993 = vmatpush1.msra.mxu0 %v2826
    %2994 = vmatprep.subr.mxu0 %v2829
    %2995 = vmatpush1.msra.mxu0 %v2828
    %2996 = vmatprep.subr.mxu0 %v2831
    %2997 = vmatpush1.msra.mxu0 %v2830
    %2998 = vmatprep.subr.mxu0 %v2833
    %2999 = vmatpush1.msra.mxu0 %v2832
    %3000 = vmatprep.subr.mxu0 %v2835
    %3001 = vmatpush1.msra.mxu0 %v2834
    %3002 = vmatprep.subr.mxu0 %v2837
    %3003 = vmatpush1.msra.mxu0 %v2836
    %3004 = vmatprep.subr.mxu0 %v2839
    %3005 = vmatpush1.msra.mxu0 %v2838
    %3006 = vmatprep.subr.mxu0 %v2841
    %3007 = vmatpush1.msra.mxu0 %v2840
    %3008 = vmatprep.subr.mxu0 %v2843
    %3009 = vmatpush1.msra.mxu0 %v2842
    %3010 = vmatprep.subr.mxu0 %v2845
    %3011 = vmatpush1.msra.mxu0 %v2844
    %3012 = vmatprep.subr.mxu0 %v2847
    %3013 = vmatpush1.msra.mxu0 %v2846
    %3014 = vmatprep.subr.mxu0 %v2849
    %3015 = vmatpush1.msra.mxu0 %v2848
    %3016 = vmatprep.subr.mxu0 %v2851
    %3017 = vmatpush1.msra.mxu0 %v2850
    %3018 = vmatprep.subr.mxu0 %v2853
    %3019 = vmatpush1.msra.mxu0 %v2852
    %3020 = vmatprep.subr.mxu0 %v2855
    %3021 = vmatpush1.msra.mxu0 %v2854
    %3022 = vmatprep.subr.mxu0 %v2857
    %3023 = vmatpush1.msra.mxu0 %v2856
    %3024 = vmatprep.subr.mxu0 %v2859
    %3025 = vmatpush1.msra.mxu0 %v2858
    %3026 = vmatprep.subr.mxu0 %v2861
    %3027 = vmatpush1.msra.mxu0 %v2860
    %3028 = vmatprep.subr.mxu0 %v2863
    %3029 = vmatpush1.msra.mxu0 %v2862
    %3030 = vmatprep.subr.mxu0 %v2865
    %3031 = vmatpush1.msra.mxu0 %v2864
    %3032 = vmatprep.subr.mxu0 %v2867
    %3033 = vmatpush1.msra.mxu0 %v2866
    %3034 = vmatprep.subr.mxu0 %v2869
    %3035 = vmatpush1.msra.mxu0 %v2868
    %3036 = vmatprep.subr.mxu0 %v2871
    %3037 = vmatpush1.msra.mxu0 %v2870
    %3038 = vmatprep.subr.mxu0 %v2873
    %3039 = vmatpush1.msra.mxu0 %v2872
    %3040 = vmatprep.subr.mxu0 %v2875
    %3041 = vmatpush1.msra.mxu0 %v2874
    %3042 = vmatprep.subr.mxu0 %v2877
    %3043 = vmatpush1.msra.mxu0 %v2876
    %3044 = vmatprep.subr.mxu0 %v2879
    %3045 = vmatpush1.msra.mxu0 %v2878
    %3046 = vmatprep.subr.mxu0 %v2881
    %3047 = vmatpush1.msra.mxu0 %v2880
    %3048 = vmatprep.mubr.f32.mxu0 %v2752
    %3049 = vmatmul.mubr.f32.gmra.mrb[0].mxu0 %v2751
    %v3050 = vpop.f32.mrb[0].mxu0
    %v3051 = vadd.f32 %v2980, %v3050
    %v3052 = vpop.f32.mrb[0].mxu0
    %v3053 = vadd.f32 %v2982, %v3052
    %3054 = vdwg.mxu0
    %3055 = vmatprep.subr.mxu0 %v2883
    %3056 = vmatpush1.msra.mxu0 %v2882
    %3057 = vmatprep.subr.mxu0 %v2885
    %3058 = vmatpush1.msra.mxu0 %v2884
    %3059 = vmatprep.subr.mxu0 %v2887
    %3060 = vmatpush1.msra.mxu0 %v2886
    %3061 = vmatprep.subr.mxu0 %v2889
    %3062 = vmatpush1.msra.mxu0 %v2888
    %3063 = vmatprep.subr.mxu0 %v2891
    %3064 = vmatpush1.msra.mxu0 %v2890
    %3065 = vmatprep.subr.mxu0 %v2893
    %3066 = vmatpush1.msra.mxu0 %v2892
    %3067 = vmatprep.subr.mxu0 %v2895
    %3068 = vmatpush1.msra.mxu0 %v2894
    %3069 = vmatprep.subr.mxu0 %v2897
    %3070 = vmatpush1.msra.mxu0 %v2896
    %3071 = vmatprep.subr.mxu0 0.0
    %3072 = vmatpush1.msra.mxu0 0.0
    %3073 = vmatprep.subr.mxu0 0.0
    %3074 = vmatpush1.msra.mxu0 0.0
    %3075 = vmatprep.subr.mxu0 0.0
    %3076 = vmatpush1.msra.mxu0 0.0
    %3077 = vmatprep.subr.mxu0 0.0
    %3078 = vmatpush1.msra.mxu0 0.0
    %3079 = vmatprep.subr.mxu0 0.0
    %3080 = vmatpush1.msra.mxu0 0.0
    %3081 = vmatprep.subr.mxu0 0.0
    %3082 = vmatpush1.msra.mxu0 0.0
    %3083 = vmatprep.subr.mxu0 0.0
    %3084 = vmatpush1.msra.mxu0 0.0
    %3085 = vmatprep.subr.mxu0 0.0
    %3086 = vmatpush1.msra.mxu0 0.0
    %3087 = vmatprep.subr.mxu0 0.0
    %3088 = vmatpush1.msra.mxu0 0.0
    %3089 = vmatprep.subr.mxu0 0.0
    %3090 = vmatpush1.msra.mxu0 0.0
    %3091 = vmatprep.subr.mxu0 0.0
    %3092 = vmatpush1.msra.mxu0 0.0
    %3093 = vmatprep.subr.mxu0 0.0
    %3094 = vmatpush1.msra.mxu0 0.0
    %3095 = vmatprep.subr.mxu0 0.0
    %3096 = vmatpush1.msra.mxu0 0.0
    %3097 = vmatprep.subr.mxu0 0.0
    %3098 = vmatpush1.msra.mxu0 0.0
    %3099 = vmatprep.subr.mxu0 0.0
    %3100 = vmatpush1.msra.mxu0 0.0
    %3101 = vmatprep.subr.mxu0 0.0
    %3102 = vmatpush1.msra.mxu0 0.0
    %3103 = vmatprep.subr.mxu0 0.0
    %3104 = vmatpush1.msra.mxu0 0.0
    %3105 = vmatprep.subr.mxu0 0.0
    %3106 = vmatpush1.msra.mxu0 0.0
    %3107 = vmatprep.subr.mxu0 0.0
    %3108 = vmatpush1.msra.mxu0 0.0
    %3109 = vmatprep.subr.mxu0 0.0
    %3110 = vmatpush1.msra.mxu0 0.0
    %3111 = vmatprep.subr.mxu0 0.0
    %3112 = vmatpush1.msra.mxu0 0.0
    %3113 = vmatprep.subr.mxu0 0.0
    %3114 = vmatpush1.msra.mxu0 0.0
    %3115 = vmatprep.subr.mxu0 0.0
    %3116 = vmatpush1.msra.mxu0 0.0
    %3117 = vmatprep.subr.mxu0 0.0
    %3118 = vmatpush1.msra.mxu0 0.0
    %3119 = vmatprep.mubr.f32.mxu0 0.0
    %3120 = vmatmul.mubr.f32.gmra.mrb[0].mxu0 %v2911
    %v3121 = vpop.f32.mrb[0].mxu0
    %v3122 = vadd.f32 %v3051, %v3121
    %v3123 = vpop.f32.mrb[0].mxu0
    %v3124 = vadd.f32 %v3053, %v3123
    %3125 = vdwg.mxu0
    %v3126 = vsel %vm730, %v3122, 0.0
    %vm3127 = vcmask 254976
    %v3128 = vsel %vm3127, %v3124, 0.0
    %v3129 = vadd.f32 %v3126, %v3128
    %3130 = vadd.xlane.f32.xlu0 %v3129
    %v3131 = vpop.xlane.xlu0 %3130
    %v3132 = vrcp.pop 160.0
    %v3133 = vmul.f32 %v3131, %v3132
    %v3134 = vsub.f32 %v3122, %v3133
    %v3135 = vsub.f32 %v3124, %v3133
    %v3136 = vmul.f32 %v3134, %v3134
    %v3137 = vmul.f32 %v3135, %v3135
    %v3138 = vsel %vm730, %v3136, 0.0
    %v3139 = vsel %vm3127, %v3137, 0.0
    %v3140 = vadd.f32 %v3138, %v3139
    %3141 = vadd.xlane.f32.xlu0 %v3140
    %v3142 = vpop.xlane.xlu0 %3141
    %v3143 = vmul.f32 %v3142, %v3132
    %v3144 = vadd.f32 %v3143, 1e-05
    %v3145 = vrsqrt.pop %v3144
    %v3146 = vmul.f32 %v3134, %v3145
    %v3147 = vmul.f32 %v3135, %v3145
    %v3148 = vld [vmem:[%s53] sm:$0x3]
    %v3150 = vlaneseq
    %v3151 = vshrl.u32 %v3150, 7
    %v3152 = vsub.s32 0, %v3151
    %v3153 = vrot.slane %v3148, %v3152
    %v3154 = vlaneseq
    %v3155 = vshrl.u32 %v3154, 7
    %v3156 = vsub.s32 1, %v3155
    %v3157 = vrot.slane %v3148, %v3156
    %v3160 = vmul.f32 %v3146, %v3153
    %v3161 = vmul.f32 %v3147, %v3157
    %v3162 = vld [vmem:[%s55] sm:$0x3]
    %v3164 = vlaneseq
    %v3165 = vshrl.u32 %v3164, 7
    %v3166 = vsub.s32 0, %v3165
    %v3167 = vrot.slane %v3162, %v3166
    %v3168 = vlaneseq
    %v3169 = vshrl.u32 %v3168, 7
    %v3170 = vsub.s32 1, %v3169
    %v3171 = vrot.slane %v3162, %v3170
    %v3174 = vadd.f32 %v3160, %v3167
    %v3175 = vadd.f32 %v3161, %v3171
    %v3176 = vmax.f32 %v3174, 0.0
    %v3177 = vmax.f32 %v3175, 0.0
    %v3178 = vld [vmem:[%s57] sm:$0xff]
    %v3179 = vld [vmem:[%s57 + $0x8] sm:$0xff]
    %v3180 = vld [vmem:[%s57 + $0x10] sm:$0xff]
    %v3181 = vld [vmem:[%s57 + $0x18] sm:$0xff]
    %v3182 = vld [vmem:[%s57 + $0x20] sm:$0xff]
    %v3183 = vld [vmem:[%s57 + $0x28] sm:$0xff]
    %v3184 = vld [vmem:[%s57 + $0x30] sm:$0xff]
    %v3185 = vld [vmem:[%s57 + $0x38] sm:$0xff]
    %v3186 = vld [vmem:[%s57 + $0x40] sm:$0xff]
    %v3187 = vld [vmem:[%s57 + $0x48] sm:$0xff]
    %v3188 = vld [vmem:[%s57 + $0x50] sm:$0xff]
    %v3189 = vld [vmem:[%s57 + $0x58] sm:$0xff]
    %v3190 = vld [vmem:[%s57 + $0x60] sm:$0xff]
    %v3191 = vld [vmem:[%s57 + $0x68] sm:$0xff]
    %v3192 = vld [vmem:[%s57 + $0x70] sm:$0xff]
    %v3193 = vld [vmem:[%s57 + $0x78] sm:$0xff]
    %v3194 = vld [vmem:[%s57 + $0x80] sm:$0xff]
    %v3195 = vld [vmem:[%s57 + $0x88] sm:$0xff]
    %v3196 = vld [vmem:[%s57 + $0x90] sm:$0xff]
    %v3197 = vld [vmem:[%s57 + $0x98] sm:$0xff]
    %v3198 = vld [vmem:[%s59] sm:$0x1]
    %v3200 = vlaneseq
    %v3201 = vshrl.u32 %v3200, 7
    %v3202 = vsub.s32 0, %v3201
    %v3203 = vrot.slane %v3198, %v3202
    %v3206 = vsel %vm369, %v3177, 0
    %3208 = vmatprep.subr.mxu0 0.0
    %3209 = vmatpush1.msra.mxu0 %v3178
    %3210 = vmatprep.subr.mxu0 0.0
    %3211 = vmatpush1.msra.mxu0 %v3179
    %3212 = vmatprep.subr.mxu0 0.0
    %3213 = vmatpush1.msra.mxu0 %v3180
    %3214 = vmatprep.subr.mxu0 0.0
    %3215 = vmatpush1.msra.mxu0 %v3181
    %3216 = vmatprep.subr.mxu0 0.0
    %3217 = vmatpush1.msra.mxu0 %v3182
    %3218 = vmatprep.subr.mxu0 0.0
    %3219 = vmatpush1.msra.mxu0 %v3183
    %3220 = vmatprep.subr.mxu0 0.0
    %3221 = vmatpush1.msra.mxu0 %v3184
    %3222 = vmatprep.subr.mxu0 0.0
    %3223 = vmatpush1.msra.mxu0 %v3185
    %3224 = vmatprep.subr.mxu0 0.0
    %3225 = vmatpush1.msra.mxu0 %v3186
    %3226 = vmatprep.subr.mxu0 0.0
    %3227 = vmatpush1.msra.mxu0 %v3187
    %3228 = vmatprep.subr.mxu0 0.0
    %3229 = vmatpush1.msra.mxu0 %v3188
    %3230 = vmatprep.subr.mxu0 0.0
    %3231 = vmatpush1.msra.mxu0 %v3189
    %3232 = vmatprep.subr.mxu0 0.0
    %3233 = vmatpush1.msra.mxu0 %v3190
    %3234 = vmatprep.subr.mxu0 0.0
    %3235 = vmatpush1.msra.mxu0 %v3191
    %3236 = vmatprep.subr.mxu0 0.0
    %3237 = vmatpush1.msra.mxu0 %v3192
    %3238 = vmatprep.subr.mxu0 0.0
    %3239 = vmatpush1.msra.mxu0 %v3193
    %3240 = vmatprep.subr.mxu0 0.0
    %3241 = vmatpush1.msra.mxu0 %v3194
    %3242 = vmatprep.subr.mxu0 0.0
    %3243 = vmatpush1.msra.mxu0 %v3195
    %3244 = vmatprep.subr.mxu0 0.0
    %3245 = vmatpush1.msra.mxu0 %v3196
    %3246 = vmatprep.subr.mxu0 0.0
    %3247 = vmatpush1.msra.mxu0 %v3197
    %3248 = vmatprep.subr.mxu0 0.0
    %3249 = vmatpush1.msra.mxu0 0.0
    %3250 = vmatprep.subr.mxu0 0.0
    %3251 = vmatpush1.msra.mxu0 0.0
    %3252 = vmatprep.subr.mxu0 0.0
    %3253 = vmatpush1.msra.mxu0 0.0
    %3254 = vmatprep.subr.mxu0 0.0
    %3255 = vmatpush1.msra.mxu0 0.0
    %3256 = vmatprep.subr.mxu0 0.0
    %3257 = vmatpush1.msra.mxu0 0.0
    %3258 = vmatprep.subr.mxu0 0.0
    %3259 = vmatpush1.msra.mxu0 0.0
    %3260 = vmatprep.subr.mxu0 0.0
    %3261 = vmatpush1.msra.mxu0 0.0
    %3262 = vmatprep.subr.mxu0 0.0
    %3263 = vmatpush1.msra.mxu0 0.0
    %3264 = vmatprep.subr.mxu0 0.0
    %3265 = vmatpush1.msra.mxu0 0.0
    %3266 = vmatprep.subr.mxu0 0.0
    %3267 = vmatpush1.msra.mxu0 0.0
    %3268 = vmatprep.subr.mxu0 0.0
    %3269 = vmatpush1.msra.mxu0 0.0
    %3270 = vmatprep.subr.mxu0 0.0
    %3271 = vmatpush1.msra.mxu0 0.0
    %3272 = vmatprep.mubr.f32.mxu0 %v3206
    %3273 = vmatmul.mubr.f32.gmra.mrb[0].mxu0 %v3176
    %v3274 = vpop.f32.mrb[0].mxu0
    %v3275 = vadd.f32 %v3203, %v3274
    %v3276 = vpop.f32.mrb[0].mxu0
    %3277 = vdwg.mxu0
    %3278 = vst.msk [vmem:[#allocation7] sm:$0x3] %vm2649, %v3275
    // Predicated region
    $region130: #{convnn_hrtf_sht_forward.1} parent=1 // pred_check
      _
    $region131: #{convnn_hrtf_sht_forward.1} parent=1 // pred_check_branch
      %3280 = sbr.rel (0) target = $region133
    $region132: #{convnn_hrtf_sht_forward.1} parent=1 // pred_region
      %s3282 = ssub.s32 32, 32
      %3283 = vsyncadd [#allocation3], %s3282
      %s3285 = sshll.u32 [#allocation7], 4
      %s3286 = int_to_ptr.vmem [resolvable:$true] %s3285
      %3288 = dma.vmem_to_hbm [thread:$0]  %s3286, 32, %s61, [#allocation3]
    $region133: #{convnn_hrtf_sht_forward.1} parent=1 // pred_fallthru
      _
    // Predicated region
    $region134: #{convnn_hrtf_sht_forward.1} parent=1 // pred_check
      _
    $region135: #{convnn_hrtf_sht_forward.1} parent=1 // pred_check_branch
      %3290 = sbr.rel (0) target = $region137
    $region136: #{convnn_hrtf_sht_forward.1} parent=1 // pred_region
      %3291 = dma.done [#allocation3], 32
    $region137: #{convnn_hrtf_sht_forward.1} parent=1 // pred_fallthru
      _
    %3292 = vsyncpa [#allocation3], 1
    %3293 = vsyncpa [#allocation4], 1
    %3294 = vsyncpa [#allocation6], 1

</llo_original>
